<compile_context>
chip_gen: v7x
topology: tpu7x:2x2x1
jax: 0.10.0
libtpu: 0.0.40
codegen_flags: <defaults>
</compile_context>

<pallas_src>
import jax
import jax.numpy as jnp
from jax.experimental import pallas as pl
from jax.experimental.pallas import tpu as pltpu


def discriminator_kernel(x_ref, w1_ref, bn1_ref, w2_ref, p2_ref, b3_ref, o_ref):
    eps = 1e-5
    neg_slope = 0.1
    n = x_ref.shape[0]
    inv_n = 1.0 / n

    def bn_fused(h, gamma, beta):
        # Single pass: sum and sum-of-squares -> fused scale/shift.
        s = jnp.sum(h, axis=0, keepdims=True)
        ss = jnp.sum(h * h, axis=0, keepdims=True)
        mu = s * inv_n
        var = jnp.maximum(ss * inv_n - mu * mu, 0.0)   # clamp cancellation
        scale = gamma * jax.lax.rsqrt(var + eps)
        shift = beta - mu * scale
        return h * scale + shift

    def leaky_relu(h):
        return jnp.where(h > 0, h, neg_slope * h)

    # Layer 1: Linear(img_dim, 512) [bias cancelled by BN] -> BN -> LeakyReLU
    # x arrives bf16; MXU bf16 x bf16 with f32 accumulation.
    h = jnp.dot(x_ref[...], w1_ref[...], preferred_element_type=jnp.float32)
    h = leaky_relu(bn_fused(h, bn1_ref[0:1, :], bn1_ref[1:2, :]))

    # Layer 2: Linear(512, 128) [bias cancelled by BN] -> BN -> LeakyReLU
    h = jnp.dot(h.astype(jnp.bfloat16), w2_ref[...],
                preferred_element_type=jnp.float32)
    h = leaky_relu(bn_fused(h, p2_ref[0:1, :], p2_ref[1:2, :]))

    # Layer 3: Linear(128, 1) + Sigmoid, stored lane-dense as (1, N).
    # (1,128) @ (N,128).T  -> (1, N); bias read from SMEM.
    w3 = p2_ref[2:3, :]
    logit = jnp.dot(w3, h.T, preferred_element_type=jnp.float32) + b3_ref[0, 0]
    o_ref[...] = 1.0 / (1.0 + jnp.exp(-logit))


def discriminator_forward(x, p):
    N, img_dim = x.shape
    vmem = lambda: pl.BlockSpec(memory_space=pltpu.MemorySpace.VMEM)
    smem = lambda: pl.BlockSpec(memory_space=pltpu.MemorySpace.SMEM)

    flops = 2 * N * (img_dim * 512 + 512 * 128 + 128)
    bytes_accessed = (
        x.size * x.dtype.itemsize
        + p["w1"].size * 2 + p["w2"].size * 2
        + p["bn1"].size * 4 + p["p2"].size * 4
        + 4                      # b3
        + N * 4)                 # output
    cost = pl.CostEstimate(flops=flops,
                           transcendentals=N + 2 * (512 + 128),
                           bytes_accessed=bytes_accessed)

    out_row = pl.pallas_call(
        discriminator_kernel,
        out_shape=jax.ShapeDtypeStruct((1, N), jnp.float32),
        in_specs=[vmem(), vmem(), vmem(), vmem(), vmem(), smem()],
        out_specs=vmem(),
        compiler_params=pltpu.CompilerParams(
            vmem_limit_bytes=32 * 1024 * 1024),
        cost_estimate=cost,
    )(x, p["w1"], p["bn1"], p["w2"], p["p2"], p["b3"])

    # Layout plumbing only: present PyTorch's (N, 1) shape outside the kernel.
    return out_row.reshape(N, 1)


def make_params(key, img_dim):
    """Deterministic synthetic parameters (PyTorch-init-like scales)."""
    def linear(k, fan_in, fan_out):
        kw, kb = jax.random.split(k)
        bound = 1.0 / float(fan_in) ** 0.5
        w = jax.random.uniform(kw, (fan_in, fan_out), jnp.float32, -bound, bound)
        b = jax.random.uniform(kb, (1, fan_out), jnp.float32, -bound, bound)
        return w, b

    def bn_affine(k, f):
        kg, kb = jax.random.split(k)
        g = jax.random.uniform(kg, (1, f), jnp.float32, 0.5, 1.5)
        be = 0.1 * jax.random.normal(kb, (1, f), jnp.float32)
        return g, be

    k1, k2, k3, k4, k5 = jax.random.split(key, 5)
    w1, b1 = linear(k1, img_dim, 512)
    w2, b2 = linear(k2, 512, 128)
    w3, b3 = linear(k3, 128, 1)
    g1, be1 = bn_affine(k4, 512)
    g2, be2 = bn_affine(k5, 128)

    return {
        # MXU weights in bf16 (halves weight HBM->VMEM traffic).
        "w1": w1.astype(jnp.bfloat16),            # (img_dim, 512) bf16
        "w2": w2.astype(jnp.bfloat16),            # (512, 128)     bf16
        # Packed per-feature operands (fewer DMA descriptors).
        "bn1": jnp.concatenate([g1, be1], axis=0),            # (2, 512) f32
        "p2": jnp.concatenate([g2, be2, w3.T], axis=0),       # (3, 128) f32
        "b3": b3,                                              # (1, 1)  f32 (SMEM)
        # b1/b2 kept only for the reference; the kernel drops them (BN cancels).
        "b1": b1, "b2": b2,
    }


def reference_forward(x, p):
    """Pure-JAX reference with the module's literal structure (biases kept,
    two-pass BN statistics), using the same bf16 input / bf16 weights."""
    eps = 1e-5

    def bn(h, g, be):
        mu = jnp.mean(h, axis=0, keepdims=True)
        var = jnp.mean((h - mu) ** 2, axis=0, keepdims=True)
        return (h - mu) / jnp.sqrt(var + eps) * g + be

    lrelu = lambda h: jnp.where(h > 0, h, 0.1 * h)

    g1, be1 = p["bn1"][0:1], p["bn1"][1:2]
    g2, be2, w3 = p["p2"][0:1], p["p2"][1:2], p["p2"][2:3]

    h = jnp.dot(x, p["w1"], preferred_element_type=jnp.float32) + p["b1"]
    h = lrelu(bn(h, g1, be1))
    h = jnp.dot(h.astype(jnp.bfloat16), p["w2"],
                preferred_element_type=jnp.float32) + p["b2"]
    h = lrelu(bn(h, g2, be2))
    logit = jnp.sum(h * w3, axis=-1, keepdims=True) + p["b3"][0, 0]
    return 1.0 / (1.0 + jnp.exp(-logit))


if __name__ == "__main__":
    img_dim = 784   # MNIST-style flattened image, the usual basic_gan input
    batch = 128     # >=128 rows per call: fills MXU rows, amortizes launch/DMA

    key = jax.random.PRNGKey(0)
    kx, kp = jax.random.split(key)
    # x is produced in bf16 upstream of the kernel (no extra wrapper cast op).
    x = jax.random.normal(kx, (batch, img_dim), jnp.float32).astype(jnp.bfloat16)
    params = make_params(kp, img_dim)

    out = discriminator_forward(x, params)
    out = jax.block_until_ready(out)

    ref = reference_forward(x, params)
    assert out.shape == (batch, 1)
    assert jnp.allclose(out, ref, atol=2e-4, rtol=2e-4), "mismatch vs reference"

    print("KERNEL_OK")
</pallas_src>

<mosaic_0001>
module attributes {stable_mosaic.version = 11 : i64} {
  func.func @discriminator_kernel(%arg0: memref<128x784xbf16, #tpu.memory_space<vmem>>, %arg1: memref<784x512xbf16, #tpu.memory_space<vmem>>, %arg2: memref<2x512xf32, #tpu.memory_space<vmem>>, %arg3: memref<512x128xbf16, #tpu.memory_space<vmem>>, %arg4: memref<3x128xf32, #tpu.memory_space<vmem>>, %arg5: memref<1x1xf32, #tpu.memory_space<smem>>, %arg6: memref<1x128xf32, #tpu.memory_space<vmem>>) attributes {dimension_semantics = [], scalar_prefetch = 0 : i64, scratch_operands = 0 : i64, tpu.core_type = #tpu.core_type<tc>} {
    %c0 = arith.constant 0 : index
    %c0_0 = arith.constant 0 : index
    %0 = vector.load %arg0[%c0, %c0_0] : memref<128x784xbf16, #tpu.memory_space<vmem>>, vector<128x784xbf16>
    %c0_1 = arith.constant 0 : index
    %c0_2 = arith.constant 0 : index
    %1 = vector.load %arg1[%c0_1, %c0_2] : memref<784x512xbf16, #tpu.memory_space<vmem>>, vector<784x512xbf16>
    %cst = arith.constant dense<0.000000e+00> : vector<128x512xf32>
    %2 = tpu.matmul %0, %1, %cst {dimension_numbers = #tpu.dot_dimension_numbers<[1], [0], [0], [1], [0, 0, 1, 1], [], []>} : vector<128x784xbf16>, vector<784x512xbf16>, vector<128x512xf32> -> vector<128x512xf32>
    %c0_3 = arith.constant 0 : index
    %c0_4 = arith.constant 0 : index
    %3 = vector.load %arg2[%c0_3, %c0_4] : memref<2x512xf32, #tpu.memory_space<vmem>>, vector<1x512xf32>
    %c1 = arith.constant 1 : index
    %c0_5 = arith.constant 0 : index
    %4 = vector.load %arg2[%c1, %c0_5] : memref<2x512xf32, #tpu.memory_space<vmem>>, vector<1x512xf32>
    %cst_6 = arith.constant dense<0.000000e+00> : vector<512xf32>
    %5 = vector.multi_reduction <add>, %2, %cst_6 [0] : vector<128x512xf32> to vector<512xf32>
    %6 = vector.shape_cast %5 : vector<512xf32> to vector<1x512xf32>
    %7 = arith.mulf %2, %2 : vector<128x512xf32>
    %cst_7 = arith.constant dense<0.000000e+00> : vector<512xf32>
    %8 = vector.multi_reduction <add>, %7, %cst_7 [0] : vector<128x512xf32> to vector<512xf32>
    %9 = vector.shape_cast %8 : vector<512xf32> to vector<1x512xf32>
    %cst_8 = arith.constant 7.812500e-03 : f32
    %10 = vector.broadcast %cst_8 : f32 to vector<1x512xf32>
    %11 = arith.mulf %6, %10 : vector<1x512xf32>
    %cst_9 = arith.constant 7.812500e-03 : f32
    %12 = vector.broadcast %cst_9 : f32 to vector<1x512xf32>
    %13 = arith.mulf %9, %12 : vector<1x512xf32>
    %14 = arith.mulf %11, %11 : vector<1x512xf32>
    %15 = arith.subf %13, %14 : vector<1x512xf32>
    %cst_10 = arith.constant 0.000000e+00 : f32
    %16 = vector.broadcast %cst_10 : f32 to vector<1x512xf32>
    %17 = arith.maximumf %15, %16 : vector<1x512xf32>
    %cst_11 = arith.constant 9.99999974E-6 : f32
    %18 = vector.broadcast %cst_11 : f32 to vector<1x512xf32>
    %19 = arith.addf %17, %18 : vector<1x512xf32>
    %20 = math.rsqrt %19 : vector<1x512xf32>
    %21 = arith.mulf %3, %20 : vector<1x512xf32>
    %22 = arith.mulf %11, %21 : vector<1x512xf32>
    %23 = arith.subf %4, %22 : vector<1x512xf32>
    %24 = vector.broadcast %21 : vector<1x512xf32> to vector<128x512xf32>
    %25 = arith.mulf %2, %24 : vector<128x512xf32>
    %26 = vector.broadcast %23 : vector<1x512xf32> to vector<128x512xf32>
    %27 = arith.addf %25, %26 : vector<128x512xf32>
    %cst_12 = arith.constant 0.000000e+00 : f32
    %28 = vector.broadcast %cst_12 : f32 to vector<128x512xf32>
    %29 = arith.cmpf ogt, %27, %28 : vector<128x512xf32>
    %cst_13 = arith.constant 1.000000e-01 : f32
    %30 = vector.broadcast %cst_13 : f32 to vector<128x512xf32>
    %31 = arith.mulf %30, %27 : vector<128x512xf32>
    %32 = arith.select %29, %27, %31 : vector<128x512xi1>, vector<128x512xf32>
    %33 = arith.truncf %32 : vector<128x512xf32> to vector<128x512xbf16>
    %c0_14 = arith.constant 0 : index
    %c0_15 = arith.constant 0 : index
    %34 = vector.load %arg3[%c0_14, %c0_15] : memref<512x128xbf16, #tpu.memory_space<vmem>>, vector<512x128xbf16>
    %cst_16 = arith.constant dense<0.000000e+00> : vector<128x128xf32>
    %35 = tpu.matmul %33, %34, %cst_16 {dimension_numbers = #tpu.dot_dimension_numbers<[1], [0], [0], [1], [0, 0, 1, 1], [], []>} : vector<128x512xbf16>, vector<512x128xbf16>, vector<128x128xf32> -> vector<128x128xf32>
    %c0_17 = arith.constant 0 : index
    %c0_18 = arith.constant 0 : index
    %36 = vector.load %arg4[%c0_17, %c0_18] : memref<3x128xf32, #tpu.memory_space<vmem>>, vector<1x128xf32>
    %c1_19 = arith.constant 1 : index
    %c0_20 = arith.constant 0 : index
    %37 = vector.load %arg4[%c1_19, %c0_20] : memref<3x128xf32, #tpu.memory_space<vmem>>, vector<1x128xf32>
    %cst_21 = arith.constant dense<0.000000e+00> : vector<128xf32>
    %38 = vector.multi_reduction <add>, %35, %cst_21 [0] : vector<128x128xf32> to vector<128xf32>
    %39 = vector.shape_cast %38 : vector<128xf32> to vector<1x128xf32>
    %40 = arith.mulf %35, %35 : vector<128x128xf32>
    %cst_22 = arith.constant dense<0.000000e+00> : vector<128xf32>
    %41 = vector.multi_reduction <add>, %40, %cst_22 [0] : vector<128x128xf32> to vector<128xf32>
    %42 = vector.shape_cast %41 : vector<128xf32> to vector<1x128xf32>
    %cst_23 = arith.constant 7.812500e-03 : f32
    %43 = vector.broadcast %cst_23 : f32 to vector<1x128xf32>
    %44 = arith.mulf %39, %43 : vector<1x128xf32>
    %cst_24 = arith.constant 7.812500e-03 : f32
    %45 = vector.broadcast %cst_24 : f32 to vector<1x128xf32>
    %46 = arith.mulf %42, %45 : vector<1x128xf32>
    %47 = arith.mulf %44, %44 : vector<1x128xf32>
    %48 = arith.subf %46, %47 : vector<1x128xf32>
    %cst_25 = arith.constant 0.000000e+00 : f32
    %49 = vector.broadcast %cst_25 : f32 to vector<1x128xf32>
    %50 = arith.maximumf %48, %49 : vector<1x128xf32>
    %cst_26 = arith.constant 9.99999974E-6 : f32
    %51 = vector.broadcast %cst_26 : f32 to vector<1x128xf32>
    %52 = arith.addf %50, %51 : vector<1x128xf32>
    %53 = math.rsqrt %52 : vector<1x128xf32>
    %54 = arith.mulf %36, %53 : vector<1x128xf32>
    %55 = arith.mulf %44, %54 : vector<1x128xf32>
    %56 = arith.subf %37, %55 : vector<1x128xf32>
    %57 = vector.broadcast %54 : vector<1x128xf32> to vector<128x128xf32>
    %58 = arith.mulf %35, %57 : vector<128x128xf32>
    %59 = vector.broadcast %56 : vector<1x128xf32> to vector<128x128xf32>
    %60 = arith.addf %58, %59 : vector<128x128xf32>
    %cst_27 = arith.constant 0.000000e+00 : f32
    %61 = vector.broadcast %cst_27 : f32 to vector<128x128xf32>
    %62 = arith.cmpf ogt, %60, %61 : vector<128x128xf32>
    %cst_28 = arith.constant 1.000000e-01 : f32
    %63 = vector.broadcast %cst_28 : f32 to vector<128x128xf32>
    %64 = arith.mulf %63, %60 : vector<128x128xf32>
    %65 = arith.select %62, %60, %64 : vector<128x128xi1>, vector<128x128xf32>
    %c2 = arith.constant 2 : index
    %c0_29 = arith.constant 0 : index
    %66 = vector.load %arg4[%c2, %c0_29] : memref<3x128xf32, #tpu.memory_space<vmem>>, vector<1x128xf32>
    %67 = tpu.transpose %65, [1, 0] : vector<128x128xf32> -> vector<128x128xf32>
    %cst_30 = arith.constant dense<0.000000e+00> : vector<1x128xf32>
    %68 = tpu.matmul %66, %67, %cst_30 {dimension_numbers = #tpu.dot_dimension_numbers<[1], [0], [0], [1], [0, 0, 1, 1], [], []>} : vector<1x128xf32>, vector<128x128xf32>, vector<1x128xf32> -> vector<1x128xf32>
    %c0_31 = arith.constant 0 : index
    %c0_32 = arith.constant 0 : index
    %69 = memref.load %arg5[%c0_31, %c0_32] : memref<1x1xf32, #tpu.memory_space<smem>>
    %70 = vector.broadcast %69 : f32 to vector<1x128xf32>
    %71 = arith.addf %68, %70 : vector<1x128xf32>
    %cst_33 = arith.constant 0.000000e+00 : f32
    %72 = vector.broadcast %cst_33 : f32 to vector<1x128xf32>
    %73 = arith.subf %72, %71 : vector<1x128xf32>
    %74 = math.exp %73 : vector<1x128xf32>
    %cst_34 = arith.constant 1.000000e+00 : f32
    %75 = vector.broadcast %cst_34 : f32 to vector<1x128xf32>
    %76 = arith.addf %75, %74 : vector<1x128xf32>
    %cst_35 = arith.constant 1.000000e+00 : f32
    %77 = vector.broadcast %cst_35 : f32 to vector<1x128xf32>
    %78 = arith.divf %77, %76 : vector<1x128xf32>
    %c0_36 = arith.constant 0 : index
    %c0_37 = arith.constant 0 : index
    %79 = vector.load %arg6[%c0_36, %c0_37] : memref<1x128xf32, #tpu.memory_space<vmem>>, vector<1x128xf32>
    tpu.vector_store %arg6[%c0_36, %c0_37], %78 {strides = array<i32>} : memref<1x128xf32, #tpu.memory_space<vmem>>, vector<1x128xf32>,
    return
  }
}

</mosaic_0001>

<llo_original>
// kernel: tpu_custom_call.1
$region0: #{tpu_custom_call.1}
  #allocation0 [shape = 'u32[]', space=smem, size = 0x4, offset = 0x4, fixed_abs, tag = 'smem constant byte address 0x4 - core index']
  #allocation1 [shape = 'u32[144,128]{1,0:T(1,128)}', space=vmem, size = 0x12000, scoped, tag = 'internal scratch']
  #allocation2 [shape = 'f32[1,1]{1,0:T(1,128)S(6)}', space=smem, size = 0x200, scoped, tag = 'scoped memory for tpu_custom_call.1']
  %s0 = inlined_call_operand.vmem [shape: bf16[128,784], index: 0, kind: input, shape index: {}]
  %s1 = inlined_call_operand.hbm [shape: bf16[784,512], index: 1, kind: input, shape index: {}]
  %s2 = inlined_call_operand.vmem [shape: f32[2,512], index: 2, kind: input, shape index: {}]
  %s3 = inlined_call_operand.vmem [shape: bf16[512,128], index: 3, kind: input, shape index: {}]
  %s4 = inlined_call_operand.vmem [shape: f32[3,128], index: 4, kind: input, shape index: {}]
  %s5 = inlined_call_operand.<no memory space> [shape: f32[1,1], index: 5, kind: input, shape index: {}]
  %s6 = inlined_call_operand.hbm [shape: f32[1,128], index: 6, kind: output, shape index: {}]
  %s7 = sld [smem:[#allocation0]]
  $region38: #{tpu_custom_call.1} parent=0
    _
  %s9 = ssub.s32 1, %s7
  %s10 = scalar_select 0, %s9, %s7
  %11 = sst [smem:[#allocation2]] %s5
  $region1: #{tpu_custom_call.1} parent=0
    #allocation3 [shape = 'u8[802816]{0}', space=vmem, size = 0xc4000, scoped, tag = 'input window, operand 1, single buffered']
    #allocation4 [shape = 's32[1]{0}', space=sflag, size = 0x4, scoped, tag = 'scoped memory for tpu_custom_call.1']
    #allocation5 [shape = 's32[1]{0}', space=sflag, size = 0x4, scoped, tag = 'scoped memory for tpu_custom_call.1']
    #allocation6 [shape = 'u8[512]{0}', space=vmem, size = 0x400, scoped, tag = 'output window, operand 0, single buffered']
    %12 = vsyncpa [#allocation4], 0
    %13 = vsyncpa [#allocation5], 0
    // Predicated region
    $region2: #{tpu_custom_call.1} parent=1 // pred_check
      _
    $region3: #{tpu_custom_call.1} parent=1 // pred_check_branch
      %15 = sbr.rel (0) target = $region5
    $region4: #{tpu_custom_call.1} parent=1 // pred_region
      _
    $region5: #{tpu_custom_call.1} parent=1 // pred_fallthru
      _
    // Predicated region
    $region6: #{tpu_custom_call.1} parent=1 // pred_check
      _
    $region7: #{tpu_custom_call.1} parent=1 // pred_check_branch
      %17 = sbr.rel (0) target = $region9
    $region8: #{tpu_custom_call.1} parent=1 // pred_region
      %s19 = ssub.s32 25088, 25088
      %20 = vsyncadd [#allocation4], %s19
      %s21 = sshll.u32 [#allocation3], 4
      %s22 = int_to_ptr.vmem [resolvable:$true] %s21
      %27 = dma.hbm_to_vmem [thread:$0]  %s1, 25088, %s22, [#allocation4], 256, 256, 16
    $region9: #{tpu_custom_call.1} parent=1 // pred_fallthru
      _
    // Predicated region
    $region10: #{tpu_custom_call.1} parent=1 // pred_check
      _
    $region11: #{tpu_custom_call.1} parent=1 // pred_check_branch
      %29 = sbr.rel (0) target = $region13
    $region12: #{tpu_custom_call.1} parent=1 // pred_region
      _
    $region13: #{tpu_custom_call.1} parent=1 // pred_fallthru
      _
    // Predicated region
    $region14: #{tpu_custom_call.1} parent=1 // pred_check
      _
    $region15: #{tpu_custom_call.1} parent=1 // pred_check_branch
      %31 = sbr.rel (0) target = $region17
    $region16: #{tpu_custom_call.1} parent=1 // pred_region
      _
    $region17: #{tpu_custom_call.1} parent=1 // pred_fallthru
      _
    // Predicated region
    $region18: #{tpu_custom_call.1} parent=1 // pred_check
      _
    $region19: #{tpu_custom_call.1} parent=1 // pred_check_branch
      %33 = sbr.rel (0) target = $region21
    $region20: #{tpu_custom_call.1} parent=1 // pred_region
      _
    $region21: #{tpu_custom_call.1} parent=1 // pred_fallthru
      _
    // Predicated region
    $region22: #{tpu_custom_call.1} parent=1 // pred_check
      _
    $region23: #{tpu_custom_call.1} parent=1 // pred_check_branch
      %35 = sbr.rel (0) target = $region25
    $region24: #{tpu_custom_call.1} parent=1 // pred_region
      _
    $region25: #{tpu_custom_call.1} parent=1 // pred_fallthru
      _
    // Predicated region
    $region26: #{tpu_custom_call.1} parent=1 // pred_check
      _
    $region27: #{tpu_custom_call.1} parent=1 // pred_check_branch
      %37 = sbr.rel (0) target = $region29
    $region28: #{tpu_custom_call.1} parent=1 // pred_region
      %38 = dma.done [#allocation4], 25088
    $region29: #{tpu_custom_call.1} parent=1 // pred_fallthru
      _
    %v40 = vld [vmem:[%s0] sm:$0xff]
    %v41 = vld [vmem:[%s0 + $0x8] sm:$0xff]
    %v42 = vld [vmem:[%s0 + $0x10] sm:$0xff]
    %v43 = vld [vmem:[%s0 + $0x18] sm:$0xf]
    %v44 = vld [vmem:[%s0 + $0x1c] sm:$0xff]
    %v45 = vld [vmem:[%s0 + $0x24] sm:$0xff]
    %v46 = vld [vmem:[%s0 + $0x2c] sm:$0xff]
    %v47 = vld [vmem:[%s0 + $0x34] sm:$0xf]
    %v48 = vld [vmem:[%s0 + $0x38] sm:$0xff]
    %v49 = vld [vmem:[%s0 + $0x40] sm:$0xff]
    %v50 = vld [vmem:[%s0 + $0x48] sm:$0xff]
    %v51 = vld [vmem:[%s0 + $0x50] sm:$0xf]
    %v52 = vld [vmem:[%s0 + $0x54] sm:$0xff]
    %v53 = vld [vmem:[%s0 + $0x5c] sm:$0xff]
    %v54 = vld [vmem:[%s0 + $0x64] sm:$0xff]
    %v55 = vld [vmem:[%s0 + $0x6c] sm:$0xf]
    %v56 = vld [vmem:[%s0 + $0x70] sm:$0xff]
    %v57 = vld [vmem:[%s0 + $0x78] sm:$0xff]
    %v58 = vld [vmem:[%s0 + $0x80] sm:$0xff]
    %v59 = vld [vmem:[%s0 + $0x88] sm:$0xf]
    %v60 = vld [vmem:[%s0 + $0x8c] sm:$0xff]
    %v61 = vld [vmem:[%s0 + $0x94] sm:$0xff]
    %v62 = vld [vmem:[%s0 + $0x9c] sm:$0xff]
    %v63 = vld [vmem:[%s0 + $0xa4] sm:$0xf]
    %v64 = vld [vmem:[%s0 + $0xa8] sm:$0xff]
    %v65 = vld [vmem:[%s0 + $0xb0] sm:$0xff]
    %v66 = vld [vmem:[%s0 + $0xb8] sm:$0xff]
    %v67 = vld [vmem:[%s0 + $0xc0] sm:$0xf]
    %v68 = vld [vmem:[%s0 + $0xc4] sm:$0xff]
    %v69 = vld [vmem:[%s0 + $0xcc] sm:$0xff]
    %v70 = vld [vmem:[%s0 + $0xd4] sm:$0xff]
    %v71 = vld [vmem:[%s0 + $0xdc] sm:$0xf]
    %v72 = vld [vmem:[%s0 + $0xe0] sm:$0xff]
    %v73 = vld [vmem:[%s0 + $0xe8] sm:$0xff]
    %v74 = vld [vmem:[%s0 + $0xf0] sm:$0xff]
    %v75 = vld [vmem:[%s0 + $0xf8] sm:$0xf]
    %v76 = vld [vmem:[%s0 + $0xfc] sm:$0xff]
    %v77 = vld [vmem:[%s0 + $0x104] sm:$0xff]
    %v78 = vld [vmem:[%s0 + $0x10c] sm:$0xff]
    %v79 = vld [vmem:[%s0 + $0x114] sm:$0xf]
    %v80 = vld [vmem:[%s0 + $0x118] sm:$0xff]
    %v81 = vld [vmem:[%s0 + $0x120] sm:$0xff]
    %v82 = vld [vmem:[%s0 + $0x128] sm:$0xff]
    %v83 = vld [vmem:[%s0 + $0x130] sm:$0xf]
    %v84 = vld [vmem:[%s0 + $0x134] sm:$0xff]
    %v85 = vld [vmem:[%s0 + $0x13c] sm:$0xff]
    %v86 = vld [vmem:[%s0 + $0x144] sm:$0xff]
    %v87 = vld [vmem:[%s0 + $0x14c] sm:$0xf]
    %v88 = vld [vmem:[%s0 + $0x150] sm:$0xff]
    %v89 = vld [vmem:[%s0 + $0x158] sm:$0xff]
    %v90 = vld [vmem:[%s0 + $0x160] sm:$0xff]
    %v91 = vld [vmem:[%s0 + $0x168] sm:$0xf]
    %v92 = vld [vmem:[%s0 + $0x16c] sm:$0xff]
    %v93 = vld [vmem:[%s0 + $0x174] sm:$0xff]
    %v94 = vld [vmem:[%s0 + $0x17c] sm:$0xff]
    %v95 = vld [vmem:[%s0 + $0x184] sm:$0xf]
    %v96 = vld [vmem:[%s0 + $0x188] sm:$0xff]
    %v97 = vld [vmem:[%s0 + $0x190] sm:$0xff]
    %v98 = vld [vmem:[%s0 + $0x198] sm:$0xff]
    %v99 = vld [vmem:[%s0 + $0x1a0] sm:$0xf]
    %v100 = vld [vmem:[%s0 + $0x1a4] sm:$0xff]
    %v101 = vld [vmem:[%s0 + $0x1ac] sm:$0xff]
    %v102 = vld [vmem:[%s0 + $0x1b4] sm:$0xff]
    %v103 = vld [vmem:[%s0 + $0x1bc] sm:$0xf]
    %v104 = vld [vmem:[#allocation3] sm:$0xff]
    %v105 = vld [vmem:[#allocation3 + $0x8] sm:$0xff]
    %v106 = vld [vmem:[#allocation3 + $0x10] sm:$0xff]
    %v107 = vld [vmem:[#allocation3 + $0x18] sm:$0xff]
    %v108 = vld [vmem:[#allocation3 + $0x20] sm:$0xff]
    %v109 = vld [vmem:[#allocation3 + $0x28] sm:$0xff]
    %v110 = vld [vmem:[#allocation3 + $0x30] sm:$0xff]
    %v111 = vld [vmem:[#allocation3 + $0x38] sm:$0xff]
    %v112 = vld [vmem:[#allocation3 + $0x40] sm:$0xff]
    %v113 = vld [vmem:[#allocation3 + $0x48] sm:$0xff]
    %v114 = vld [vmem:[#allocation3 + $0x50] sm:$0xff]
    %v115 = vld [vmem:[#allocation3 + $0x58] sm:$0xff]
    %v116 = vld [vmem:[#allocation3 + $0x60] sm:$0xff]
    %v117 = vld [vmem:[#allocation3 + $0x68] sm:$0xff]
    %v118 = vld [vmem:[#allocation3 + $0x70] sm:$0xff]
    %v119 = vld [vmem:[#allocation3 + $0x78] sm:$0xff]
    %v120 = vld [vmem:[#allocation3 + $0x80] sm:$0xff]
    %v121 = vld [vmem:[#allocation3 + $0x88] sm:$0xff]
    %v122 = vld [vmem:[#allocation3 + $0x90] sm:$0xff]
    %v123 = vld [vmem:[#allocation3 + $0x98] sm:$0xff]
    %v124 = vld [vmem:[#allocation3 + $0xa0] sm:$0xff]
    %v125 = vld [vmem:[#allocation3 + $0xa8] sm:$0xff]
    %v126 = vld [vmem:[#allocation3 + $0xb0] sm:$0xff]
    %v127 = vld [vmem:[#allocation3 + $0xb8] sm:$0xff]
    %v128 = vld [vmem:[#allocation3 + $0xc0] sm:$0xff]
    %v129 = vld [vmem:[#allocation3 + $0xc8] sm:$0xff]
    %v130 = vld [vmem:[#allocation3 + $0xd0] sm:$0xff]
    %v131 = vld [vmem:[#allocation3 + $0xd8] sm:$0xff]
    %v132 = vld [vmem:[#allocation3 + $0xe0] sm:$0xff]
    %v133 = vld [vmem:[#allocation3 + $0xe8] sm:$0xff]
    %v134 = vld [vmem:[#allocation3 + $0xf0] sm:$0xff]
    %v135 = vld [vmem:[#allocation3 + $0xf8] sm:$0xff]
    %v136 = vld [vmem:[#allocation3 + $0x100] sm:$0xff]
    %v137 = vld [vmem:[#allocation3 + $0x108] sm:$0xff]
    %v138 = vld [vmem:[#allocation3 + $0x110] sm:$0xff]
    %v139 = vld [vmem:[#allocation3 + $0x118] sm:$0xff]
    %v140 = vld [vmem:[#allocation3 + $0x120] sm:$0xff]
    %v141 = vld [vmem:[#allocation3 + $0x128] sm:$0xff]
    %v142 = vld [vmem:[#allocation3 + $0x130] sm:$0xff]
    %v143 = vld [vmem:[#allocation3 + $0x138] sm:$0xff]
    %v144 = vld [vmem:[#allocation3 + $0x140] sm:$0xff]
    %v145 = vld [vmem:[#allocation3 + $0x148] sm:$0xff]
    %v146 = vld [vmem:[#allocation3 + $0x150] sm:$0xff]
    %v147 = vld [vmem:[#allocation3 + $0x158] sm:$0xff]
    %v148 = vld [vmem:[#allocation3 + $0x160] sm:$0xff]
    %v149 = vld [vmem:[#allocation3 + $0x168] sm:$0xff]
    %v150 = vld [vmem:[#allocation3 + $0x170] sm:$0xff]
    %v151 = vld [vmem:[#allocation3 + $0x178] sm:$0xff]
    %v152 = vld [vmem:[#allocation3 + $0x180] sm:$0xff]
    %v153 = vld [vmem:[#allocation3 + $0x188] sm:$0xff]
    %v154 = vld [vmem:[#allocation3 + $0x190] sm:$0xff]
    %v155 = vld [vmem:[#allocation3 + $0x198] sm:$0xff]
    %v156 = vld [vmem:[#allocation3 + $0x1a0] sm:$0xff]
    %v157 = vld [vmem:[#allocation3 + $0x1a8] sm:$0xff]
    %v158 = vld [vmem:[#allocation3 + $0x1b0] sm:$0xff]
    %v159 = vld [vmem:[#allocation3 + $0x1b8] sm:$0xff]
    %v160 = vld [vmem:[#allocation3 + $0x1c0] sm:$0xff]
    %v161 = vld [vmem:[#allocation3 + $0x1c8] sm:$0xff]
    %v162 = vld [vmem:[#allocation3 + $0x1d0] sm:$0xff]
    %v163 = vld [vmem:[#allocation3 + $0x1d8] sm:$0xff]
    %v164 = vld [vmem:[#allocation3 + $0x1e0] sm:$0xff]
    %v165 = vld [vmem:[#allocation3 + $0x1e8] sm:$0xff]
    %v166 = vld [vmem:[#allocation3 + $0x1f0] sm:$0xff]
    %v167 = vld [vmem:[#allocation3 + $0x1f8] sm:$0xff]
    %v168 = vld [vmem:[#allocation3 + $0x200] sm:$0xff]
    %v169 = vld [vmem:[#allocation3 + $0x208] sm:$0xff]
    %v170 = vld [vmem:[#allocation3 + $0x210] sm:$0xff]
    %v171 = vld [vmem:[#allocation3 + $0x218] sm:$0xff]
    %v172 = vld [vmem:[#allocation3 + $0x220] sm:$0xff]
    %v173 = vld [vmem:[#allocation3 + $0x228] sm:$0xff]
    %v174 = vld [vmem:[#allocation3 + $0x230] sm:$0xff]
    %v175 = vld [vmem:[#allocation3 + $0x238] sm:$0xff]
    %v176 = vld [vmem:[#allocation3 + $0x240] sm:$0xff]
    %v177 = vld [vmem:[#allocation3 + $0x248] sm:$0xff]
    %v178 = vld [vmem:[#allocation3 + $0x250] sm:$0xff]
    %v179 = vld [vmem:[#allocation3 + $0x258] sm:$0xff]
    %v180 = vld [vmem:[#allocation3 + $0x260] sm:$0xff]
    %v181 = vld [vmem:[#allocation3 + $0x268] sm:$0xff]
    %v182 = vld [vmem:[#allocation3 + $0x270] sm:$0xff]
    %v183 = vld [vmem:[#allocation3 + $0x278] sm:$0xff]
    %v184 = vld [vmem:[#allocation3 + $0x280] sm:$0xff]
    %v185 = vld [vmem:[#allocation3 + $0x288] sm:$0xff]
    %v186 = vld [vmem:[#allocation3 + $0x290] sm:$0xff]
    %v187 = vld [vmem:[#allocation3 + $0x298] sm:$0xff]
    %v188 = vld [vmem:[#allocation3 + $0x2a0] sm:$0xff]
    %v189 = vld [vmem:[#allocation3 + $0x2a8] sm:$0xff]
    %v190 = vld [vmem:[#allocation3 + $0x2b0] sm:$0xff]
    %v191 = vld [vmem:[#allocation3 + $0x2b8] sm:$0xff]
    %v192 = vld [vmem:[#allocation3 + $0x2c0] sm:$0xff]
    %v193 = vld [vmem:[#allocation3 + $0x2c8] sm:$0xff]
    %v194 = vld [vmem:[#allocation3 + $0x2d0] sm:$0xff]
    %v195 = vld [vmem:[#allocation3 + $0x2d8] sm:$0xff]
    %v196 = vld [vmem:[#allocation3 + $0x2e0] sm:$0xff]
    %v197 = vld [vmem:[#allocation3 + $0x2e8] sm:$0xff]
    %v198 = vld [vmem:[#allocation3 + $0x2f0] sm:$0xff]
    %v199 = vld [vmem:[#allocation3 + $0x2f8] sm:$0xff]
    %v200 = vld [vmem:[#allocation3 + $0x300] sm:$0xff]
    %v201 = vld [vmem:[#allocation3 + $0x308] sm:$0xff]
    %v202 = vld [vmem:[#allocation3 + $0x310] sm:$0xff]
    %v203 = vld [vmem:[#allocation3 + $0x318] sm:$0xff]
    %v204 = vld [vmem:[#allocation3 + $0x320] sm:$0xff]
    %v205 = vld [vmem:[#allocation3 + $0x328] sm:$0xff]
    %v206 = vld [vmem:[#allocation3 + $0x330] sm:$0xff]
    %v207 = vld [vmem:[#allocation3 + $0x338] sm:$0xff]
    %v208 = vld [vmem:[#allocation3 + $0x340] sm:$0xff]
    %v209 = vld [vmem:[#allocation3 + $0x348] sm:$0xff]
    %v210 = vld [vmem:[#allocation3 + $0x350] sm:$0xff]
    %v211 = vld [vmem:[#allocation3 + $0x358] sm:$0xff]
    %v212 = vld [vmem:[#allocation3 + $0x360] sm:$0xff]
    %v213 = vld [vmem:[#allocation3 + $0x368] sm:$0xff]
    %v214 = vld [vmem:[#allocation3 + $0x370] sm:$0xff]
    %v215 = vld [vmem:[#allocation3 + $0x378] sm:$0xff]
    %v216 = vld [vmem:[#allocation3 + $0x380] sm:$0xff]
    %v217 = vld [vmem:[#allocation3 + $0x388] sm:$0xff]
    %v218 = vld [vmem:[#allocation3 + $0x390] sm:$0xff]
    %v219 = vld [vmem:[#allocation3 + $0x398] sm:$0xff]
    %v220 = vld [vmem:[#allocation3 + $0x3a0] sm:$0xff]
    %v221 = vld [vmem:[#allocation3 + $0x3a8] sm:$0xff]
    %v222 = vld [vmem:[#allocation3 + $0x3b0] sm:$0xff]
    %v223 = vld [vmem:[#allocation3 + $0x3b8] sm:$0xff]
    %v224 = vld [vmem:[#allocation3 + $0x3c0] sm:$0xff]
    %v225 = vld [vmem:[#allocation3 + $0x3c8] sm:$0xff]
    %v226 = vld [vmem:[#allocation3 + $0x3d0] sm:$0xff]
    %v227 = vld [vmem:[#allocation3 + $0x3d8] sm:$0xff]
    %v228 = vld [vmem:[#allocation3 + $0x3e0] sm:$0xff]
    %v229 = vld [vmem:[#allocation3 + $0x3e8] sm:$0xff]
    %v230 = vld [vmem:[#allocation3 + $0x3f0] sm:$0xff]
    %v231 = vld [vmem:[#allocation3 + $0x3f8] sm:$0xff]
    %v232 = vld [vmem:[#allocation3 + $0x400] sm:$0xff]
    %v233 = vld [vmem:[#allocation3 + $0x408] sm:$0xff]
    %v234 = vld [vmem:[#allocation3 + $0x410] sm:$0xff]
    %v235 = vld [vmem:[#allocation3 + $0x418] sm:$0xff]
    %v236 = vld [vmem:[#allocation3 + $0x420] sm:$0xff]
    %v237 = vld [vmem:[#allocation3 + $0x428] sm:$0xff]
    %v238 = vld [vmem:[#allocation3 + $0x430] sm:$0xff]
    %v239 = vld [vmem:[#allocation3 + $0x438] sm:$0xff]
    %v240 = vld [vmem:[#allocation3 + $0x440] sm:$0xff]
    %v241 = vld [vmem:[#allocation3 + $0x448] sm:$0xff]
    %v242 = vld [vmem:[#allocation3 + $0x450] sm:$0xff]
    %v243 = vld [vmem:[#allocation3 + $0x458] sm:$0xff]
    %v244 = vld [vmem:[#allocation3 + $0x460] sm:$0xff]
    %v245 = vld [vmem:[#allocation3 + $0x468] sm:$0xff]
    %v246 = vld [vmem:[#allocation3 + $0x470] sm:$0xff]
    %v247 = vld [vmem:[#allocation3 + $0x478] sm:$0xff]
    %v248 = vld [vmem:[#allocation3 + $0x480] sm:$0xff]
    %v249 = vld [vmem:[#allocation3 + $0x488] sm:$0xff]
    %v250 = vld [vmem:[#allocation3 + $0x490] sm:$0xff]
    %v251 = vld [vmem:[#allocation3 + $0x498] sm:$0xff]
    %v252 = vld [vmem:[#allocation3 + $0x4a0] sm:$0xff]
    %v253 = vld [vmem:[#allocation3 + $0x4a8] sm:$0xff]
    %v254 = vld [vmem:[#allocation3 + $0x4b0] sm:$0xff]
    %v255 = vld [vmem:[#allocation3 + $0x4b8] sm:$0xff]
    %v256 = vld [vmem:[#allocation3 + $0x4c0] sm:$0xff]
    %v257 = vld [vmem:[#allocation3 + $0x4c8] sm:$0xff]
    %v258 = vld [vmem:[#allocation3 + $0x4d0] sm:$0xff]
    %v259 = vld [vmem:[#allocation3 + $0x4d8] sm:$0xff]
    %v260 = vld [vmem:[#allocation3 + $0x4e0] sm:$0xff]
    %v261 = vld [vmem:[#allocation3 + $0x4e8] sm:$0xff]
    %v262 = vld [vmem:[#allocation3 + $0x4f0] sm:$0xff]
    %v263 = vld [vmem:[#allocation3 + $0x4f8] sm:$0xff]
    %v264 = vld [vmem:[#allocation3 + $0x500] sm:$0xff]
    %v265 = vld [vmem:[#allocation3 + $0x508] sm:$0xff]
    %v266 = vld [vmem:[#allocation3 + $0x510] sm:$0xff]
    %v267 = vld [vmem:[#allocation3 + $0x518] sm:$0xff]
    %v268 = vld [vmem:[#allocation3 + $0x520] sm:$0xff]
    %v269 = vld [vmem:[#allocation3 + $0x528] sm:$0xff]
    %v270 = vld [vmem:[#allocation3 + $0x530] sm:$0xff]
    %v271 = vld [vmem:[#allocation3 + $0x538] sm:$0xff]
    %v272 = vld [vmem:[#allocation3 + $0x540] sm:$0xff]
    %v273 = vld [vmem:[#allocation3 + $0x548] sm:$0xff]
    %v274 = vld [vmem:[#allocation3 + $0x550] sm:$0xff]
    %v275 = vld [vmem:[#allocation3 + $0x558] sm:$0xff]
    %v276 = vld [vmem:[#allocation3 + $0x560] sm:$0xff]
    %v277 = vld [vmem:[#allocation3 + $0x568] sm:$0xff]
    %v278 = vld [vmem:[#allocation3 + $0x570] sm:$0xff]
    %v279 = vld [vmem:[#allocation3 + $0x578] sm:$0xff]
    %v280 = vld [vmem:[#allocation3 + $0x580] sm:$0xff]
    %v281 = vld [vmem:[#allocation3 + $0x588] sm:$0xff]
    %v282 = vld [vmem:[#allocation3 + $0x590] sm:$0xff]
    %v283 = vld [vmem:[#allocation3 + $0x598] sm:$0xff]
    %v284 = vld [vmem:[#allocation3 + $0x5a0] sm:$0xff]
    %v285 = vld [vmem:[#allocation3 + $0x5a8] sm:$0xff]
    %v286 = vld [vmem:[#allocation3 + $0x5b0] sm:$0xff]
    %v287 = vld [vmem:[#allocation3 + $0x5b8] sm:$0xff]
    %v288 = vld [vmem:[#allocation3 + $0x5c0] sm:$0xff]
    %v289 = vld [vmem:[#allocation3 + $0x5c8] sm:$0xff]
    %v290 = vld [vmem:[#allocation3 + $0x5d0] sm:$0xff]
    %v291 = vld [vmem:[#allocation3 + $0x5d8] sm:$0xff]
    %v292 = vld [vmem:[#allocation3 + $0x5e0] sm:$0xff]
    %v293 = vld [vmem:[#allocation3 + $0x5e8] sm:$0xff]
    %v294 = vld [vmem:[#allocation3 + $0x5f0] sm:$0xff]
    %v295 = vld [vmem:[#allocation3 + $0x5f8] sm:$0xff]
    %v296 = vld [vmem:[#allocation3 + $0x600] sm:$0xff]
    %v297 = vld [vmem:[#allocation3 + $0x608] sm:$0xff]
    %v298 = vld [vmem:[#allocation3 + $0x610] sm:$0xff]
    %v299 = vld [vmem:[#allocation3 + $0x618] sm:$0xff]
    %v364 = vunpack.c.l.b16 %v40
    %v365 = vunpack.c.h.b16 %v40
    %v366 = vunpack.c.l.b16 %v41
    %v367 = vunpack.c.h.b16 %v41
    %v368 = vunpack.c.l.b16 %v42
    %v369 = vunpack.c.h.b16 %v42
    %v370 = vunpack.c.l.b16 %v43
    %v371 = vunpack.c.l.b16 %v44
    %v372 = vunpack.c.h.b16 %v44
    %v373 = vunpack.c.l.b16 %v45
    %v374 = vunpack.c.h.b16 %v45
    %v375 = vunpack.c.l.b16 %v46
    %v376 = vunpack.c.h.b16 %v46
    %v377 = vunpack.c.l.b16 %v47
    %v378 = vunpack.c.l.b16 %v48
    %v379 = vunpack.c.h.b16 %v48
    %v380 = vunpack.c.l.b16 %v49
    %v381 = vunpack.c.h.b16 %v49
    %v382 = vunpack.c.l.b16 %v50
    %v383 = vunpack.c.h.b16 %v50
    %v384 = vunpack.c.l.b16 %v51
    %v385 = vunpack.c.l.b16 %v52
    %v386 = vunpack.c.h.b16 %v52
    %v387 = vunpack.c.l.b16 %v53
    %v388 = vunpack.c.h.b16 %v53
    %v389 = vunpack.c.l.b16 %v54
    %v390 = vunpack.c.h.b16 %v54
    %v391 = vunpack.c.l.b16 %v55
    %v392 = vunpack.c.l.b16 %v56
    %v393 = vunpack.c.h.b16 %v56
    %v394 = vunpack.c.l.b16 %v57
    %v395 = vunpack.c.h.b16 %v57
    %v396 = vunpack.c.l.b16 %v58
    %v397 = vunpack.c.h.b16 %v58
    %v398 = vunpack.c.l.b16 %v59
    %v399 = vunpack.c.l.b16 %v60
    %v400 = vunpack.c.h.b16 %v60
    %v401 = vunpack.c.l.b16 %v61
    %v402 = vunpack.c.h.b16 %v61
    %v403 = vunpack.c.l.b16 %v62
    %v404 = vunpack.c.h.b16 %v62
    %v405 = vunpack.c.l.b16 %v63
    %v406 = vunpack.c.l.b16 %v64
    %v407 = vunpack.c.h.b16 %v64
    %v408 = vunpack.c.l.b16 %v65
    %v409 = vunpack.c.h.b16 %v65
    %v410 = vunpack.c.l.b16 %v66
    %v411 = vunpack.c.h.b16 %v66
    %v412 = vunpack.c.l.b16 %v67
    %v413 = vunpack.c.l.b16 %v68
    %v414 = vunpack.c.h.b16 %v68
    %v415 = vunpack.c.l.b16 %v69
    %v416 = vunpack.c.h.b16 %v69
    %v417 = vunpack.c.l.b16 %v70
    %v418 = vunpack.c.h.b16 %v70
    %v419 = vunpack.c.l.b16 %v71
    %v420 = vunpack.c.l.b16 %v72
    %v421 = vunpack.c.h.b16 %v72
    %v422 = vunpack.c.l.b16 %v73
    %v423 = vunpack.c.h.b16 %v73
    %v424 = vunpack.c.l.b16 %v74
    %v425 = vunpack.c.h.b16 %v74
    %v426 = vunpack.c.l.b16 %v75
    %v427 = vunpack.c.l.b16 %v76
    %v428 = vunpack.c.h.b16 %v76
    %v429 = vunpack.c.l.b16 %v77
    %v430 = vunpack.c.h.b16 %v77
    %v431 = vunpack.c.l.b16 %v78
    %v432 = vunpack.c.h.b16 %v78
    %v433 = vunpack.c.l.b16 %v79
    %v434 = vunpack.c.l.b16 %v80
    %v435 = vunpack.c.h.b16 %v80
    %v436 = vunpack.c.l.b16 %v81
    %v437 = vunpack.c.h.b16 %v81
    %v438 = vunpack.c.l.b16 %v82
    %v439 = vunpack.c.h.b16 %v82
    %v440 = vunpack.c.l.b16 %v83
    %v441 = vunpack.c.l.b16 %v84
    %v442 = vunpack.c.h.b16 %v84
    %v443 = vunpack.c.l.b16 %v85
    %v444 = vunpack.c.h.b16 %v85
    %v445 = vunpack.c.l.b16 %v86
    %v446 = vunpack.c.h.b16 %v86
    %v447 = vunpack.c.l.b16 %v87
    %v448 = vunpack.c.l.b16 %v88
    %v449 = vunpack.c.h.b16 %v88
    %v450 = vunpack.c.l.b16 %v89
    %v451 = vunpack.c.h.b16 %v89
    %v452 = vunpack.c.l.b16 %v90
    %v453 = vunpack.c.h.b16 %v90
    %v454 = vunpack.c.l.b16 %v91
    %v455 = vunpack.c.l.b16 %v92
    %v456 = vunpack.c.h.b16 %v92
    %v457 = vunpack.c.l.b16 %v93
    %v458 = vunpack.c.h.b16 %v93
    %v459 = vunpack.c.l.b16 %v94
    %v460 = vunpack.c.h.b16 %v94
    %v461 = vunpack.c.l.b16 %v95
    %v462 = vunpack.c.l.b16 %v96
    %v463 = vunpack.c.h.b16 %v96
    %v464 = vunpack.c.l.b16 %v97
    %v465 = vunpack.c.h.b16 %v97
    %v466 = vunpack.c.l.b16 %v98
    %v467 = vunpack.c.h.b16 %v98
    %v468 = vunpack.c.l.b16 %v99
    %v469 = vunpack.c.l.b16 %v100
    %v470 = vunpack.c.h.b16 %v100
    %v471 = vunpack.c.l.b16 %v101
    %v472 = vunpack.c.h.b16 %v101
    %v473 = vunpack.c.l.b16 %v102
    %v474 = vunpack.c.h.b16 %v102
    %v475 = vunpack.c.l.b16 %v103
    %v476 = vpack.c.b16 %v371, %v364
    %v477 = vpack.c.b16 %v372, %v365
    %v478 = vpack.c.b16 %v373, %v366
    %v479 = vpack.c.b16 %v374, %v367
    %v480 = vpack.c.b16 %v375, %v368
    %v481 = vpack.c.b16 %v376, %v369
    %v482 = vpack.c.b16 %v377, %v370
    %v483 = vpack.c.b16 %v385, %v378
    %v484 = vpack.c.b16 %v386, %v379
    %v485 = vpack.c.b16 %v387, %v380
    %v486 = vpack.c.b16 %v388, %v381
    %v487 = vpack.c.b16 %v389, %v382
    %v488 = vpack.c.b16 %v390, %v383
    %v489 = vpack.c.b16 %v391, %v384
    %v490 = vpack.c.b16 %v399, %v392
    %v491 = vpack.c.b16 %v400, %v393
    %v492 = vpack.c.b16 %v401, %v394
    %v493 = vpack.c.b16 %v402, %v395
    %v494 = vpack.c.b16 %v403, %v396
    %v495 = vpack.c.b16 %v404, %v397
    %v496 = vpack.c.b16 %v405, %v398
    %v497 = vpack.c.b16 %v413, %v406
    %v498 = vpack.c.b16 %v414, %v407
    %v499 = vpack.c.b16 %v415, %v408
    %v500 = vpack.c.b16 %v416, %v409
    %v501 = vpack.c.b16 %v417, %v410
    %v502 = vpack.c.b16 %v418, %v411
    %v503 = vpack.c.b16 %v419, %v412
    %v504 = vpack.c.b16 %v427, %v420
    %v505 = vpack.c.b16 %v428, %v421
    %v506 = vpack.c.b16 %v429, %v422
    %v507 = vpack.c.b16 %v430, %v423
    %v508 = vpack.c.b16 %v431, %v424
    %v509 = vpack.c.b16 %v432, %v425
    %v510 = vpack.c.b16 %v433, %v426
    %v511 = vpack.c.b16 %v441, %v434
    %v512 = vpack.c.b16 %v442, %v435
    %v513 = vpack.c.b16 %v443, %v436
    %v514 = vpack.c.b16 %v444, %v437
    %v515 = vpack.c.b16 %v445, %v438
    %v516 = vpack.c.b16 %v446, %v439
    %v517 = vpack.c.b16 %v447, %v440
    %v518 = vpack.c.b16 %v455, %v448
    %v519 = vpack.c.b16 %v456, %v449
    %v520 = vpack.c.b16 %v457, %v450
    %v521 = vpack.c.b16 %v458, %v451
    %v522 = vpack.c.b16 %v459, %v452
    %v523 = vpack.c.b16 %v460, %v453
    %v524 = vpack.c.b16 %v461, %v454
    %v525 = vpack.c.b16 %v469, %v462
    %v526 = vpack.c.b16 %v470, %v463
    %v527 = vpack.c.b16 %v471, %v464
    %v528 = vpack.c.b16 %v472, %v465
    %v529 = vpack.c.b16 %v473, %v466
    %v530 = vpack.c.b16 %v474, %v467
    %v531 = vpack.c.b16 %v475, %v468
    %v776 = vunpack.c.l.b16 %v104
    %v777 = vunpack.c.h.b16 %v104
    %v778 = vunpack.c.l.b16 %v105
    %v779 = vunpack.c.h.b16 %v105
    %v780 = vunpack.c.l.b16 %v106
    %v781 = vunpack.c.h.b16 %v106
    %v782 = vunpack.c.l.b16 %v107
    %v783 = vunpack.c.h.b16 %v107
    %v784 = vunpack.c.l.b16 %v108
    %v785 = vunpack.c.h.b16 %v108
    %v786 = vunpack.c.l.b16 %v109
    %v787 = vunpack.c.h.b16 %v109
    %v788 = vunpack.c.l.b16 %v110
    %v789 = vunpack.c.h.b16 %v110
    %v790 = vunpack.c.l.b16 %v111
    %v791 = vunpack.c.h.b16 %v111
    %v792 = vunpack.c.l.b16 %v112
    %v793 = vunpack.c.h.b16 %v112
    %v794 = vunpack.c.l.b16 %v113
    %v795 = vunpack.c.h.b16 %v113
    %v796 = vunpack.c.l.b16 %v114
    %v797 = vunpack.c.h.b16 %v114
    %v798 = vunpack.c.l.b16 %v115
    %v799 = vunpack.c.h.b16 %v115
    %v800 = vunpack.c.l.b16 %v116
    %v801 = vunpack.c.h.b16 %v116
    %v802 = vunpack.c.l.b16 %v117
    %v803 = vunpack.c.h.b16 %v117
    %v804 = vunpack.c.l.b16 %v118
    %v805 = vunpack.c.h.b16 %v118
    %v806 = vunpack.c.l.b16 %v119
    %v807 = vunpack.c.h.b16 %v119
    %v808 = vunpack.c.l.b16 %v120
    %v809 = vunpack.c.h.b16 %v120
    %v810 = vunpack.c.l.b16 %v121
    %v811 = vunpack.c.h.b16 %v121
    %v812 = vunpack.c.l.b16 %v122
    %v813 = vunpack.c.h.b16 %v122
    %v814 = vunpack.c.l.b16 %v123
    %v815 = vunpack.c.h.b16 %v123
    %v816 = vunpack.c.l.b16 %v124
    %v817 = vunpack.c.h.b16 %v124
    %v818 = vunpack.c.l.b16 %v125
    %v819 = vunpack.c.h.b16 %v125
    %v820 = vunpack.c.l.b16 %v126
    %v821 = vunpack.c.h.b16 %v126
    %v822 = vunpack.c.l.b16 %v127
    %v823 = vunpack.c.h.b16 %v127
    %v824 = vunpack.c.l.b16 %v128
    %v825 = vunpack.c.h.b16 %v128
    %v826 = vunpack.c.l.b16 %v129
    %v827 = vunpack.c.h.b16 %v129
    %v828 = vunpack.c.l.b16 %v130
    %v829 = vunpack.c.h.b16 %v130
    %v830 = vunpack.c.l.b16 %v131
    %v831 = vunpack.c.h.b16 %v131
    %v832 = vunpack.c.l.b16 %v132
    %v833 = vunpack.c.h.b16 %v132
    %v834 = vunpack.c.l.b16 %v133
    %v835 = vunpack.c.h.b16 %v133
    %v836 = vunpack.c.l.b16 %v134
    %v837 = vunpack.c.h.b16 %v134
    %v838 = vunpack.c.l.b16 %v135
    %v839 = vunpack.c.h.b16 %v135
    %v840 = vunpack.c.l.b16 %v136
    %v841 = vunpack.c.h.b16 %v136
    %v842 = vunpack.c.l.b16 %v137
    %v843 = vunpack.c.h.b16 %v137
    %v844 = vunpack.c.l.b16 %v138
    %v845 = vunpack.c.h.b16 %v138
    %v846 = vunpack.c.l.b16 %v139
    %v847 = vunpack.c.h.b16 %v139
    %v848 = vunpack.c.l.b16 %v140
    %v849 = vunpack.c.h.b16 %v140
    %v850 = vunpack.c.l.b16 %v141
    %v851 = vunpack.c.h.b16 %v141
    %v852 = vunpack.c.l.b16 %v142
    %v853 = vunpack.c.h.b16 %v142
    %v854 = vunpack.c.l.b16 %v143
    %v855 = vunpack.c.h.b16 %v143
    %v856 = vunpack.c.l.b16 %v144
    %v857 = vunpack.c.h.b16 %v144
    %v858 = vunpack.c.l.b16 %v145
    %v859 = vunpack.c.h.b16 %v145
    %v860 = vunpack.c.l.b16 %v146
    %v861 = vunpack.c.h.b16 %v146
    %v862 = vunpack.c.l.b16 %v147
    %v863 = vunpack.c.h.b16 %v147
    %v864 = vunpack.c.l.b16 %v148
    %v865 = vunpack.c.h.b16 %v148
    %v866 = vunpack.c.l.b16 %v149
    %v867 = vunpack.c.h.b16 %v149
    %v868 = vunpack.c.l.b16 %v150
    %v869 = vunpack.c.h.b16 %v150
    %v870 = vunpack.c.l.b16 %v151
    %v871 = vunpack.c.h.b16 %v151
    %v872 = vunpack.c.l.b16 %v152
    %v873 = vunpack.c.h.b16 %v152
    %v874 = vunpack.c.l.b16 %v153
    %v875 = vunpack.c.h.b16 %v153
    %v876 = vunpack.c.l.b16 %v154
    %v877 = vunpack.c.h.b16 %v154
    %v878 = vunpack.c.l.b16 %v155
    %v879 = vunpack.c.h.b16 %v155
    %v880 = vunpack.c.l.b16 %v156
    %v881 = vunpack.c.h.b16 %v156
    %v882 = vunpack.c.l.b16 %v157
    %v883 = vunpack.c.h.b16 %v157
    %v884 = vunpack.c.l.b16 %v158
    %v885 = vunpack.c.h.b16 %v158
    %v886 = vunpack.c.l.b16 %v159
    %v887 = vunpack.c.h.b16 %v159
    %v888 = vunpack.c.l.b16 %v160
    %v889 = vunpack.c.h.b16 %v160
    %v890 = vunpack.c.l.b16 %v161
    %v891 = vunpack.c.h.b16 %v161
    %v892 = vunpack.c.l.b16 %v162
    %v893 = vunpack.c.h.b16 %v162
    %v894 = vunpack.c.l.b16 %v163
    %v895 = vunpack.c.h.b16 %v163
    %v896 = vunpack.c.l.b16 %v164
    %v897 = vunpack.c.h.b16 %v164
    %v898 = vunpack.c.l.b16 %v165
    %v899 = vunpack.c.h.b16 %v165
    %v900 = vunpack.c.l.b16 %v166
    %v901 = vunpack.c.h.b16 %v166
    %v902 = vunpack.c.l.b16 %v167
    %v903 = vunpack.c.h.b16 %v167
    %v904 = vunpack.c.l.b16 %v168
    %v905 = vunpack.c.h.b16 %v168
    %v906 = vunpack.c.l.b16 %v169
    %v907 = vunpack.c.h.b16 %v169
    %v908 = vunpack.c.l.b16 %v170
    %v909 = vunpack.c.h.b16 %v170
    %v910 = vunpack.c.l.b16 %v171
    %v911 = vunpack.c.h.b16 %v171
    %v912 = vunpack.c.l.b16 %v172
    %v913 = vunpack.c.h.b16 %v172
    %v914 = vunpack.c.l.b16 %v173
    %v915 = vunpack.c.h.b16 %v173
    %v916 = vunpack.c.l.b16 %v174
    %v917 = vunpack.c.h.b16 %v174
    %v918 = vunpack.c.l.b16 %v175
    %v919 = vunpack.c.h.b16 %v175
    %v920 = vunpack.c.l.b16 %v176
    %v921 = vunpack.c.h.b16 %v176
    %v922 = vunpack.c.l.b16 %v177
    %v923 = vunpack.c.h.b16 %v177
    %v924 = vunpack.c.l.b16 %v178
    %v925 = vunpack.c.h.b16 %v178
    %v926 = vunpack.c.l.b16 %v179
    %v927 = vunpack.c.h.b16 %v179
    %v928 = vunpack.c.l.b16 %v180
    %v929 = vunpack.c.h.b16 %v180
    %v930 = vunpack.c.l.b16 %v181
    %v931 = vunpack.c.h.b16 %v181
    %v932 = vunpack.c.l.b16 %v182
    %v933 = vunpack.c.h.b16 %v182
    %v934 = vunpack.c.l.b16 %v183
    %v935 = vunpack.c.h.b16 %v183
    %v936 = vunpack.c.l.b16 %v184
    %v937 = vunpack.c.h.b16 %v184
    %v938 = vunpack.c.l.b16 %v185
    %v939 = vunpack.c.h.b16 %v185
    %v940 = vunpack.c.l.b16 %v186
    %v941 = vunpack.c.h.b16 %v186
    %v942 = vunpack.c.l.b16 %v187
    %v943 = vunpack.c.h.b16 %v187
    %v944 = vunpack.c.l.b16 %v188
    %v945 = vunpack.c.h.b16 %v188
    %v946 = vunpack.c.l.b16 %v189
    %v947 = vunpack.c.h.b16 %v189
    %v948 = vunpack.c.l.b16 %v190
    %v949 = vunpack.c.h.b16 %v190
    %v950 = vunpack.c.l.b16 %v191
    %v951 = vunpack.c.h.b16 %v191
    %v952 = vunpack.c.l.b16 %v192
    %v953 = vunpack.c.h.b16 %v192
    %v954 = vunpack.c.l.b16 %v193
    %v955 = vunpack.c.h.b16 %v193
    %v956 = vunpack.c.l.b16 %v194
    %v957 = vunpack.c.h.b16 %v194
    %v958 = vunpack.c.l.b16 %v195
    %v959 = vunpack.c.h.b16 %v195
    %v960 = vunpack.c.l.b16 %v196
    %v961 = vunpack.c.h.b16 %v196
    %v962 = vunpack.c.l.b16 %v197
    %v963 = vunpack.c.h.b16 %v197
    %v964 = vunpack.c.l.b16 %v198
    %v965 = vunpack.c.h.b16 %v198
    %v966 = vunpack.c.l.b16 %v199
    %v967 = vunpack.c.h.b16 %v199
    %v968 = vunpack.c.l.b16 %v200
    %v969 = vunpack.c.h.b16 %v200
    %v970 = vunpack.c.l.b16 %v201
    %v971 = vunpack.c.h.b16 %v201
    %v972 = vunpack.c.l.b16 %v202
    %v973 = vunpack.c.h.b16 %v202
    %v974 = vunpack.c.l.b16 %v203
    %v975 = vunpack.c.h.b16 %v203
    %v976 = vunpack.c.l.b16 %v204
    %v977 = vunpack.c.h.b16 %v204
    %v978 = vunpack.c.l.b16 %v205
    %v979 = vunpack.c.h.b16 %v205
    %v980 = vunpack.c.l.b16 %v206
    %v981 = vunpack.c.h.b16 %v206
    %v982 = vunpack.c.l.b16 %v207
    %v983 = vunpack.c.h.b16 %v207
    %v984 = vunpack.c.l.b16 %v208
    %v985 = vunpack.c.h.b16 %v208
    %v986 = vunpack.c.l.b16 %v209
    %v987 = vunpack.c.h.b16 %v209
    %v988 = vunpack.c.l.b16 %v210
    %v989 = vunpack.c.h.b16 %v210
    %v990 = vunpack.c.l.b16 %v211
    %v991 = vunpack.c.h.b16 %v211
    %v992 = vunpack.c.l.b16 %v212
    %v993 = vunpack.c.h.b16 %v212
    %v994 = vunpack.c.l.b16 %v213
    %v995 = vunpack.c.h.b16 %v213
    %v996 = vunpack.c.l.b16 %v214
    %v997 = vunpack.c.h.b16 %v214
    %v998 = vunpack.c.l.b16 %v215
    %v999 = vunpack.c.h.b16 %v215
    %v1000 = vunpack.c.l.b16 %v216
    %v1001 = vunpack.c.h.b16 %v216
    %v1002 = vunpack.c.l.b16 %v217
    %v1003 = vunpack.c.h.b16 %v217
    %v1004 = vunpack.c.l.b16 %v218
    %v1005 = vunpack.c.h.b16 %v218
    %v1006 = vunpack.c.l.b16 %v219
    %v1007 = vunpack.c.h.b16 %v219
    %v1008 = vunpack.c.l.b16 %v220
    %v1009 = vunpack.c.h.b16 %v220
    %v1010 = vunpack.c.l.b16 %v221
    %v1011 = vunpack.c.h.b16 %v221
    %v1012 = vunpack.c.l.b16 %v222
    %v1013 = vunpack.c.h.b16 %v222
    %v1014 = vunpack.c.l.b16 %v223
    %v1015 = vunpack.c.h.b16 %v223
    %v1016 = vunpack.c.l.b16 %v224
    %v1017 = vunpack.c.h.b16 %v224
    %v1018 = vunpack.c.l.b16 %v225
    %v1019 = vunpack.c.h.b16 %v225
    %v1020 = vunpack.c.l.b16 %v226
    %v1021 = vunpack.c.h.b16 %v226
    %v1022 = vunpack.c.l.b16 %v227
    %v1023 = vunpack.c.h.b16 %v227
    %v1024 = vunpack.c.l.b16 %v228
    %v1025 = vunpack.c.h.b16 %v228
    %v1026 = vunpack.c.l.b16 %v229
    %v1027 = vunpack.c.h.b16 %v229
    %v1028 = vunpack.c.l.b16 %v230
    %v1029 = vunpack.c.h.b16 %v230
    %v1030 = vunpack.c.l.b16 %v231
    %v1031 = vunpack.c.h.b16 %v231
    %v1032 = vunpack.c.l.b16 %v232
    %v1033 = vunpack.c.h.b16 %v232
    %v1034 = vunpack.c.l.b16 %v233
    %v1035 = vunpack.c.h.b16 %v233
    %v1036 = vunpack.c.l.b16 %v234
    %v1037 = vunpack.c.h.b16 %v234
    %v1038 = vunpack.c.l.b16 %v235
    %v1039 = vunpack.c.h.b16 %v235
    %v1040 = vunpack.c.l.b16 %v236
    %v1041 = vunpack.c.h.b16 %v236
    %v1042 = vunpack.c.l.b16 %v237
    %v1043 = vunpack.c.h.b16 %v237
    %v1044 = vunpack.c.l.b16 %v238
    %v1045 = vunpack.c.h.b16 %v238
    %v1046 = vunpack.c.l.b16 %v239
    %v1047 = vunpack.c.h.b16 %v239
    %v1048 = vunpack.c.l.b16 %v240
    %v1049 = vunpack.c.h.b16 %v240
    %v1050 = vunpack.c.l.b16 %v241
    %v1051 = vunpack.c.h.b16 %v241
    %v1052 = vunpack.c.l.b16 %v242
    %v1053 = vunpack.c.h.b16 %v242
    %v1054 = vunpack.c.l.b16 %v243
    %v1055 = vunpack.c.h.b16 %v243
    %v1056 = vunpack.c.l.b16 %v244
    %v1057 = vunpack.c.h.b16 %v244
    %v1058 = vunpack.c.l.b16 %v245
    %v1059 = vunpack.c.h.b16 %v245
    %v1060 = vunpack.c.l.b16 %v246
    %v1061 = vunpack.c.h.b16 %v246
    %v1062 = vunpack.c.l.b16 %v247
    %v1063 = vunpack.c.h.b16 %v247
    %v1064 = vunpack.c.l.b16 %v248
    %v1065 = vunpack.c.h.b16 %v248
    %v1066 = vunpack.c.l.b16 %v249
    %v1067 = vunpack.c.h.b16 %v249
    %v1068 = vunpack.c.l.b16 %v250
    %v1069 = vunpack.c.h.b16 %v250
    %v1070 = vunpack.c.l.b16 %v251
    %v1071 = vunpack.c.h.b16 %v251
    %v1072 = vunpack.c.l.b16 %v252
    %v1073 = vunpack.c.h.b16 %v252
    %v1074 = vunpack.c.l.b16 %v253
    %v1075 = vunpack.c.h.b16 %v253
    %v1076 = vunpack.c.l.b16 %v254
    %v1077 = vunpack.c.h.b16 %v254
    %v1078 = vunpack.c.l.b16 %v255
    %v1079 = vunpack.c.h.b16 %v255
    %v1080 = vunpack.c.l.b16 %v256
    %v1081 = vunpack.c.h.b16 %v256
    %v1082 = vunpack.c.l.b16 %v257
    %v1083 = vunpack.c.h.b16 %v257
    %v1084 = vunpack.c.l.b16 %v258
    %v1085 = vunpack.c.h.b16 %v258
    %v1086 = vunpack.c.l.b16 %v259
    %v1087 = vunpack.c.h.b16 %v259
    %v1088 = vunpack.c.l.b16 %v260
    %v1089 = vunpack.c.h.b16 %v260
    %v1090 = vunpack.c.l.b16 %v261
    %v1091 = vunpack.c.h.b16 %v261
    %v1092 = vunpack.c.l.b16 %v262
    %v1093 = vunpack.c.h.b16 %v262
    %v1094 = vunpack.c.l.b16 %v263
    %v1095 = vunpack.c.h.b16 %v263
    %v1096 = vunpack.c.l.b16 %v264
    %v1097 = vunpack.c.h.b16 %v264
    %v1098 = vunpack.c.l.b16 %v265
    %v1099 = vunpack.c.h.b16 %v265
    %v1100 = vunpack.c.l.b16 %v266
    %v1101 = vunpack.c.h.b16 %v266
    %v1102 = vunpack.c.l.b16 %v267
    %v1103 = vunpack.c.h.b16 %v267
    %v1104 = vunpack.c.l.b16 %v268
    %v1105 = vunpack.c.h.b16 %v268
    %v1106 = vunpack.c.l.b16 %v269
    %v1107 = vunpack.c.h.b16 %v269
    %v1108 = vunpack.c.l.b16 %v270
    %v1109 = vunpack.c.h.b16 %v270
    %v1110 = vunpack.c.l.b16 %v271
    %v1111 = vunpack.c.h.b16 %v271
    %v1112 = vunpack.c.l.b16 %v272
    %v1113 = vunpack.c.h.b16 %v272
    %v1114 = vunpack.c.l.b16 %v273
    %v1115 = vunpack.c.h.b16 %v273
    %v1116 = vunpack.c.l.b16 %v274
    %v1117 = vunpack.c.h.b16 %v274
    %v1118 = vunpack.c.l.b16 %v275
    %v1119 = vunpack.c.h.b16 %v275
    %v1120 = vunpack.c.l.b16 %v276
    %v1121 = vunpack.c.h.b16 %v276
    %v1122 = vunpack.c.l.b16 %v277
    %v1123 = vunpack.c.h.b16 %v277
    %v1124 = vunpack.c.l.b16 %v278
    %v1125 = vunpack.c.h.b16 %v278
    %v1126 = vunpack.c.l.b16 %v279
    %v1127 = vunpack.c.h.b16 %v279
    %v1128 = vunpack.c.l.b16 %v280
    %v1129 = vunpack.c.h.b16 %v280
    %v1130 = vunpack.c.l.b16 %v281
    %v1131 = vunpack.c.h.b16 %v281
    %v1132 = vunpack.c.l.b16 %v282
    %v1133 = vunpack.c.h.b16 %v282
    %v1134 = vunpack.c.l.b16 %v283
    %v1135 = vunpack.c.h.b16 %v283
    %v1136 = vunpack.c.l.b16 %v284
    %v1137 = vunpack.c.h.b16 %v284
    %v1138 = vunpack.c.l.b16 %v285
    %v1139 = vunpack.c.h.b16 %v285
    %v1140 = vunpack.c.l.b16 %v286
    %v1141 = vunpack.c.h.b16 %v286
    %v1142 = vunpack.c.l.b16 %v287
    %v1143 = vunpack.c.h.b16 %v287
    %v1144 = vunpack.c.l.b16 %v288
    %v1145 = vunpack.c.h.b16 %v288
    %v1146 = vunpack.c.l.b16 %v289
    %v1147 = vunpack.c.h.b16 %v289
    %v1148 = vunpack.c.l.b16 %v290
    %v1149 = vunpack.c.h.b16 %v290
    %v1150 = vunpack.c.l.b16 %v291
    %v1151 = vunpack.c.h.b16 %v291
    %v1152 = vunpack.c.l.b16 %v292
    %v1153 = vunpack.c.h.b16 %v292
    %v1154 = vunpack.c.l.b16 %v293
    %v1155 = vunpack.c.h.b16 %v293
    %v1156 = vunpack.c.l.b16 %v294
    %v1157 = vunpack.c.h.b16 %v294
    %v1158 = vunpack.c.l.b16 %v295
    %v1159 = vunpack.c.h.b16 %v295
    %v1160 = vunpack.c.l.b16 %v296
    %v1161 = vunpack.c.h.b16 %v296
    %v1162 = vunpack.c.l.b16 %v297
    %v1163 = vunpack.c.h.b16 %v297
    %v1164 = vunpack.c.l.b16 %v298
    %v1165 = vunpack.c.h.b16 %v298
    %v1166 = vunpack.c.l.b16 %v299
    %v1167 = vunpack.c.h.b16 %v299
    %v1168 = vpack.c.b16 %v780, %v776
    %v1169 = vpack.c.b16 %v781, %v777
    %v1170 = vpack.c.b16 %v782, %v778
    %v1171 = vpack.c.b16 %v783, %v779
    %v1172 = vpack.c.b16 %v788, %v784
    %v1173 = vpack.c.b16 %v789, %v785
    %v1174 = vpack.c.b16 %v790, %v786
    %v1175 = vpack.c.b16 %v791, %v787
    %v1176 = vpack.c.b16 %v796, %v792
    %v1177 = vpack.c.b16 %v797, %v793
    %v1178 = vpack.c.b16 %v798, %v794
    %v1179 = vpack.c.b16 %v799, %v795
    %v1180 = vpack.c.b16 %v804, %v800
    %v1181 = vpack.c.b16 %v805, %v801
    %v1182 = vpack.c.b16 %v806, %v802
    %v1183 = vpack.c.b16 %v807, %v803
    %v1184 = vpack.c.b16 %v812, %v808
    %v1185 = vpack.c.b16 %v813, %v809
    %v1186 = vpack.c.b16 %v814, %v810
    %v1187 = vpack.c.b16 %v815, %v811
    %v1188 = vpack.c.b16 %v820, %v816
    %v1189 = vpack.c.b16 %v821, %v817
    %v1190 = vpack.c.b16 %v822, %v818
    %v1191 = vpack.c.b16 %v823, %v819
    %v1192 = vpack.c.b16 %v828, %v824
    %v1193 = vpack.c.b16 %v829, %v825
    %v1194 = vpack.c.b16 %v830, %v826
    %v1195 = vpack.c.b16 %v831, %v827
    %v1196 = vpack.c.b16 %v836, %v832
    %v1197 = vpack.c.b16 %v837, %v833
    %v1198 = vpack.c.b16 %v838, %v834
    %v1199 = vpack.c.b16 %v839, %v835
    %v1200 = vpack.c.b16 %v844, %v840
    %v1201 = vpack.c.b16 %v845, %v841
    %v1202 = vpack.c.b16 %v846, %v842
    %v1203 = vpack.c.b16 %v847, %v843
    %v1204 = vpack.c.b16 %v852, %v848
    %v1205 = vpack.c.b16 %v853, %v849
    %v1206 = vpack.c.b16 %v854, %v850
    %v1207 = vpack.c.b16 %v855, %v851
    %v1208 = vpack.c.b16 %v860, %v856
    %v1209 = vpack.c.b16 %v861, %v857
    %v1210 = vpack.c.b16 %v862, %v858
    %v1211 = vpack.c.b16 %v863, %v859
    %v1212 = vpack.c.b16 %v868, %v864
    %v1213 = vpack.c.b16 %v869, %v865
    %v1214 = vpack.c.b16 %v870, %v866
    %v1215 = vpack.c.b16 %v871, %v867
    %v1216 = vpack.c.b16 %v876, %v872
    %v1217 = vpack.c.b16 %v877, %v873
    %v1218 = vpack.c.b16 %v878, %v874
    %v1219 = vpack.c.b16 %v879, %v875
    %v1220 = vpack.c.b16 %v884, %v880
    %v1221 = vpack.c.b16 %v885, %v881
    %v1222 = vpack.c.b16 %v886, %v882
    %v1223 = vpack.c.b16 %v887, %v883
    %v1224 = vpack.c.b16 %v892, %v888
    %v1225 = vpack.c.b16 %v893, %v889
    %v1226 = vpack.c.b16 %v894, %v890
    %v1227 = vpack.c.b16 %v895, %v891
    %v1228 = vpack.c.b16 %v900, %v896
    %v1229 = vpack.c.b16 %v901, %v897
    %v1230 = vpack.c.b16 %v902, %v898
    %v1231 = vpack.c.b16 %v903, %v899
    %v1232 = vpack.c.b16 %v908, %v904
    %v1233 = vpack.c.b16 %v909, %v905
    %v1234 = vpack.c.b16 %v910, %v906
    %v1235 = vpack.c.b16 %v911, %v907
    %v1236 = vpack.c.b16 %v916, %v912
    %v1237 = vpack.c.b16 %v917, %v913
    %v1238 = vpack.c.b16 %v918, %v914
    %v1239 = vpack.c.b16 %v919, %v915
    %v1240 = vpack.c.b16 %v924, %v920
    %v1241 = vpack.c.b16 %v925, %v921
    %v1242 = vpack.c.b16 %v926, %v922
    %v1243 = vpack.c.b16 %v927, %v923
    %v1244 = vpack.c.b16 %v932, %v928
    %v1245 = vpack.c.b16 %v933, %v929
    %v1246 = vpack.c.b16 %v934, %v930
    %v1247 = vpack.c.b16 %v935, %v931
    %v1248 = vpack.c.b16 %v940, %v936
    %v1249 = vpack.c.b16 %v941, %v937
    %v1250 = vpack.c.b16 %v942, %v938
    %v1251 = vpack.c.b16 %v943, %v939
    %v1252 = vpack.c.b16 %v948, %v944
    %v1253 = vpack.c.b16 %v949, %v945
    %v1254 = vpack.c.b16 %v950, %v946
    %v1255 = vpack.c.b16 %v951, %v947
    %v1256 = vpack.c.b16 %v956, %v952
    %v1257 = vpack.c.b16 %v957, %v953
    %v1258 = vpack.c.b16 %v958, %v954
    %v1259 = vpack.c.b16 %v959, %v955
    %v1260 = vpack.c.b16 %v964, %v960
    %v1261 = vpack.c.b16 %v965, %v961
    %v1262 = vpack.c.b16 %v966, %v962
    %v1263 = vpack.c.b16 %v967, %v963
    %v1264 = vpack.c.b16 %v972, %v968
    %v1265 = vpack.c.b16 %v973, %v969
    %v1266 = vpack.c.b16 %v974, %v970
    %v1267 = vpack.c.b16 %v975, %v971
    %v1268 = vpack.c.b16 %v980, %v976
    %v1269 = vpack.c.b16 %v981, %v977
    %v1270 = vpack.c.b16 %v982, %v978
    %v1271 = vpack.c.b16 %v983, %v979
    %v1272 = vpack.c.b16 %v988, %v984
    %v1273 = vpack.c.b16 %v989, %v985
    %v1274 = vpack.c.b16 %v990, %v986
    %v1275 = vpack.c.b16 %v991, %v987
    %v1276 = vpack.c.b16 %v996, %v992
    %v1277 = vpack.c.b16 %v997, %v993
    %v1278 = vpack.c.b16 %v998, %v994
    %v1279 = vpack.c.b16 %v999, %v995
    %v1280 = vpack.c.b16 %v1004, %v1000
    %v1281 = vpack.c.b16 %v1005, %v1001
    %v1282 = vpack.c.b16 %v1006, %v1002
    %v1283 = vpack.c.b16 %v1007, %v1003
    %v1284 = vpack.c.b16 %v1012, %v1008
    %v1285 = vpack.c.b16 %v1013, %v1009
    %v1286 = vpack.c.b16 %v1014, %v1010
    %v1287 = vpack.c.b16 %v1015, %v1011
    %v1288 = vpack.c.b16 %v1020, %v1016
    %v1289 = vpack.c.b16 %v1021, %v1017
    %v1290 = vpack.c.b16 %v1022, %v1018
    %v1291 = vpack.c.b16 %v1023, %v1019
    %v1292 = vpack.c.b16 %v1028, %v1024
    %v1293 = vpack.c.b16 %v1029, %v1025
    %v1294 = vpack.c.b16 %v1030, %v1026
    %v1295 = vpack.c.b16 %v1031, %v1027
    %v1296 = vpack.c.b16 %v1036, %v1032
    %v1297 = vpack.c.b16 %v1037, %v1033
    %v1298 = vpack.c.b16 %v1038, %v1034
    %v1299 = vpack.c.b16 %v1039, %v1035
    %v1300 = vpack.c.b16 %v1044, %v1040
    %v1301 = vpack.c.b16 %v1045, %v1041
    %v1302 = vpack.c.b16 %v1046, %v1042
    %v1303 = vpack.c.b16 %v1047, %v1043
    %v1304 = vpack.c.b16 %v1052, %v1048
    %v1305 = vpack.c.b16 %v1053, %v1049
    %v1306 = vpack.c.b16 %v1054, %v1050
    %v1307 = vpack.c.b16 %v1055, %v1051
    %v1308 = vpack.c.b16 %v1060, %v1056
    %v1309 = vpack.c.b16 %v1061, %v1057
    %v1310 = vpack.c.b16 %v1062, %v1058
    %v1311 = vpack.c.b16 %v1063, %v1059
    %v1312 = vpack.c.b16 %v1068, %v1064
    %v1313 = vpack.c.b16 %v1069, %v1065
    %v1314 = vpack.c.b16 %v1070, %v1066
    %v1315 = vpack.c.b16 %v1071, %v1067
    %v1316 = vpack.c.b16 %v1076, %v1072
    %v1317 = vpack.c.b16 %v1077, %v1073
    %v1318 = vpack.c.b16 %v1078, %v1074
    %v1319 = vpack.c.b16 %v1079, %v1075
    %v1320 = vpack.c.b16 %v1084, %v1080
    %v1321 = vpack.c.b16 %v1085, %v1081
    %v1322 = vpack.c.b16 %v1086, %v1082
    %v1323 = vpack.c.b16 %v1087, %v1083
    %v1324 = vpack.c.b16 %v1092, %v1088
    %v1325 = vpack.c.b16 %v1093, %v1089
    %v1326 = vpack.c.b16 %v1094, %v1090
    %v1327 = vpack.c.b16 %v1095, %v1091
    %v1328 = vpack.c.b16 %v1100, %v1096
    %v1329 = vpack.c.b16 %v1101, %v1097
    %v1330 = vpack.c.b16 %v1102, %v1098
    %v1331 = vpack.c.b16 %v1103, %v1099
    %v1332 = vpack.c.b16 %v1108, %v1104
    %v1333 = vpack.c.b16 %v1109, %v1105
    %v1334 = vpack.c.b16 %v1110, %v1106
    %v1335 = vpack.c.b16 %v1111, %v1107
    %v1336 = vpack.c.b16 %v1116, %v1112
    %v1337 = vpack.c.b16 %v1117, %v1113
    %v1338 = vpack.c.b16 %v1118, %v1114
    %v1339 = vpack.c.b16 %v1119, %v1115
    %v1340 = vpack.c.b16 %v1124, %v1120
    %v1341 = vpack.c.b16 %v1125, %v1121
    %v1342 = vpack.c.b16 %v1126, %v1122
    %v1343 = vpack.c.b16 %v1127, %v1123
    %v1344 = vpack.c.b16 %v1132, %v1128
    %v1345 = vpack.c.b16 %v1133, %v1129
    %v1346 = vpack.c.b16 %v1134, %v1130
    %v1347 = vpack.c.b16 %v1135, %v1131
    %v1348 = vpack.c.b16 %v1140, %v1136
    %v1349 = vpack.c.b16 %v1141, %v1137
    %v1350 = vpack.c.b16 %v1142, %v1138
    %v1351 = vpack.c.b16 %v1143, %v1139
    %v1352 = vpack.c.b16 %v1148, %v1144
    %v1353 = vpack.c.b16 %v1149, %v1145
    %v1354 = vpack.c.b16 %v1150, %v1146
    %v1355 = vpack.c.b16 %v1151, %v1147
    %v1356 = vpack.c.b16 %v1156, %v1152
    %v1357 = vpack.c.b16 %v1157, %v1153
    %v1358 = vpack.c.b16 %v1158, %v1154
    %v1359 = vpack.c.b16 %v1159, %v1155
    %v1360 = vpack.c.b16 %v1164, %v1160
    %v1361 = vpack.c.b16 %v1165, %v1161
    %v1362 = vpack.c.b16 %v1166, %v1162
    %v1363 = vpack.c.b16 %v1167, %v1163
    %vm1560 = vcmask 130048
    %v1562 = vsel %vm1560, %v482, 0
    %v1565 = vsel %vm1560, %v489, 0
    %v1568 = vsel %vm1560, %v496, 0
    %v1571 = vsel %vm1560, %v503, 0
    %v1574 = vsel %vm1560, %v510, 0
    %v1577 = vsel %vm1560, %v517, 0
    %v1580 = vsel %vm1560, %v524, 0
    %v1583 = vsel %vm1560, %v531, 0
    %1585 = vmatprep.subr.bf16.mxu0 %v1169
    %1586 = vmatpush1.bf16.msra.mxu0 %v1168
    %1587 = vmatprep.subr.bf16.mxu0 %v1173
    %1588 = vmatpush1.bf16.msra.mxu0 %v1172
    %1589 = vmatprep.subr.bf16.mxu0 %v1177
    %1590 = vmatpush1.bf16.msra.mxu0 %v1176
    %1591 = vmatprep.subr.bf16.mxu0 %v1181
    %1592 = vmatpush1.bf16.msra.mxu0 %v1180
    %1593 = vmatprep.subr.bf16.mxu0 %v1185
    %1594 = vmatpush1.bf16.msra.mxu0 %v1184
    %1595 = vmatprep.subr.bf16.mxu0 %v1189
    %1596 = vmatpush1.bf16.msra.mxu0 %v1188
    %1597 = vmatprep.subr.bf16.mxu0 %v1193
    %1598 = vmatpush1.bf16.msra.mxu0 %v1192
    %1599 = vmatprep.subr.bf16.mxu0 %v1197
    %1600 = vmatpush1.bf16.msra.mxu0 %v1196
    %1601 = vmatprep.subr.bf16.mxu0 %v1201
    %1602 = vmatpush1.bf16.msra.mxu0 %v1200
    %1603 = vmatprep.subr.bf16.mxu0 %v1205
    %1604 = vmatpush1.bf16.msra.mxu0 %v1204
    %1605 = vmatprep.subr.bf16.mxu0 %v1209
    %1606 = vmatpush1.bf16.msra.mxu0 %v1208
    %1607 = vmatprep.subr.bf16.mxu0 %v1213
    %1608 = vmatpush1.bf16.msra.mxu0 %v1212
    %1609 = vmatprep.subr.bf16.mxu0 %v1217
    %1610 = vmatpush1.bf16.msra.mxu0 %v1216
    %1611 = vmatprep.subr.bf16.mxu0 %v1221
    %1612 = vmatpush1.bf16.msra.mxu0 %v1220
    %1613 = vmatprep.subr.bf16.mxu0 %v1225
    %1614 = vmatpush1.bf16.msra.mxu0 %v1224
    %1615 = vmatprep.subr.bf16.mxu0 %v1229
    %1616 = vmatpush1.bf16.msra.mxu0 %v1228
    %1617 = vmatprep.mubr.bf16.mxu0 %v477
    %1618 = vmatmul.mubr.bf16.gmra.mrb[0].mxu0 %v476
    %v1619 = vpop.f32.mrb[0].mxu0
    %v1620 = vadd.f32 0.0, %v1619
    %v1621 = vpop.f32.mrb[0].mxu0
    %v1622 = vadd.f32 0.0, %v1621
    %v1623 = vpop.f32.mrb[0].mxu0
    %v1624 = vadd.f32 0.0, %v1623
    %v1625 = vpop.f32.mrb[0].mxu0
    %v1626 = vadd.f32 0.0, %v1625
    %1627 = vmatprep.mubr.bf16.mxu0 %v484
    %1628 = vmatmul.mubr.bf16.gmra.mrb[0].mxu0 %v483
    %v1629 = vpop.f32.mrb[0].mxu0
    %v1630 = vadd.f32 0.0, %v1629
    %v1631 = vpop.f32.mrb[0].mxu0
    %v1632 = vadd.f32 0.0, %v1631
    %v1633 = vpop.f32.mrb[0].mxu0
    %v1634 = vadd.f32 0.0, %v1633
    %v1635 = vpop.f32.mrb[0].mxu0
    %v1636 = vadd.f32 0.0, %v1635
    %1637 = vmatprep.mubr.bf16.mxu0 %v491
    %1638 = vmatmul.mubr.bf16.gmra.mrb[0].mxu0 %v490
    %v1639 = vpop.f32.mrb[0].mxu0
    %v1640 = vadd.f32 0.0, %v1639
    %v1641 = vpop.f32.mrb[0].mxu0
    %v1642 = vadd.f32 0.0, %v1641
    %v1643 = vpop.f32.mrb[0].mxu0
    %v1644 = vadd.f32 0.0, %v1643
    %v1645 = vpop.f32.mrb[0].mxu0
    %v1646 = vadd.f32 0.0, %v1645
    %1647 = vmatprep.mubr.bf16.mxu0 %v498
    %1648 = vmatmul.mubr.bf16.gmra.mrb[0].mxu0 %v497
    %v1649 = vpop.f32.mrb[0].mxu0
    %v1650 = vadd.f32 0.0, %v1649
    %v1651 = vpop.f32.mrb[0].mxu0
    %v1652 = vadd.f32 0.0, %v1651
    %v1653 = vpop.f32.mrb[0].mxu0
    %v1654 = vadd.f32 0.0, %v1653
    %v1655 = vpop.f32.mrb[0].mxu0
    %v1656 = vadd.f32 0.0, %v1655
    %1657 = vmatprep.mubr.bf16.mxu0 %v505
    %1658 = vmatmul.mubr.bf16.gmra.mrb[0].mxu0 %v504
    %v1659 = vpop.f32.mrb[0].mxu0
    %v1660 = vadd.f32 0.0, %v1659
    %v1661 = vpop.f32.mrb[0].mxu0
    %v1662 = vadd.f32 0.0, %v1661
    %v1663 = vpop.f32.mrb[0].mxu0
    %v1664 = vadd.f32 0.0, %v1663
    %v1665 = vpop.f32.mrb[0].mxu0
    %v1666 = vadd.f32 0.0, %v1665
    %1667 = vmatprep.mubr.bf16.mxu0 %v512
    %1668 = vmatmul.mubr.bf16.gmra.mrb[0].mxu0 %v511
    %v1669 = vpop.f32.mrb[0].mxu0
    %v1670 = vadd.f32 0.0, %v1669
    %v1671 = vpop.f32.mrb[0].mxu0
    %v1672 = vadd.f32 0.0, %v1671
    %v1673 = vpop.f32.mrb[0].mxu0
    %v1674 = vadd.f32 0.0, %v1673
    %v1675 = vpop.f32.mrb[0].mxu0
    %v1676 = vadd.f32 0.0, %v1675
    %1677 = vmatprep.mubr.bf16.mxu0 %v519
    %1678 = vmatmul.mubr.bf16.gmra.mrb[0].mxu0 %v518
    %v1679 = vpop.f32.mrb[0].mxu0
    %v1680 = vadd.f32 0.0, %v1679
    %v1681 = vpop.f32.mrb[0].mxu0
    %v1682 = vadd.f32 0.0, %v1681
    %v1683 = vpop.f32.mrb[0].mxu0
    %v1684 = vadd.f32 0.0, %v1683
    %v1685 = vpop.f32.mrb[0].mxu0
    %v1686 = vadd.f32 0.0, %v1685
    %1687 = vmatprep.mubr.bf16.mxu0 %v526
    %1688 = vmatmul.mubr.bf16.gmra.mrb[0].mxu0 %v525
    %v1689 = vpop.f32.mrb[0].mxu0
    %v1690 = vadd.f32 0.0, %v1689
    %v1691 = vpop.f32.mrb[0].mxu0
    %v1692 = vadd.f32 0.0, %v1691
    %v1693 = vpop.f32.mrb[0].mxu0
    %v1694 = vadd.f32 0.0, %v1693
    %v1695 = vpop.f32.mrb[0].mxu0
    %v1696 = vadd.f32 0.0, %v1695
    %1697 = vdwg.mxu0
    %1698 = vmatprep.subr.bf16.mxu0 %v1233
    %1699 = vmatpush1.bf16.msra.mxu0 %v1232
    %1700 = vmatprep.subr.bf16.mxu0 %v1237
    %1701 = vmatpush1.bf16.msra.mxu0 %v1236
    %1702 = vmatprep.subr.bf16.mxu0 %v1241
    %1703 = vmatpush1.bf16.msra.mxu0 %v1240
    %1704 = vmatprep.subr.bf16.mxu0 %v1245
    %1705 = vmatpush1.bf16.msra.mxu0 %v1244
    %1706 = vmatprep.subr.bf16.mxu0 %v1249
    %1707 = vmatpush1.bf16.msra.mxu0 %v1248
    %1708 = vmatprep.subr.bf16.mxu0 %v1253
    %1709 = vmatpush1.bf16.msra.mxu0 %v1252
    %1710 = vmatprep.subr.bf16.mxu0 %v1257
    %1711 = vmatpush1.bf16.msra.mxu0 %v1256
    %1712 = vmatprep.subr.bf16.mxu0 %v1261
    %1713 = vmatpush1.bf16.msra.mxu0 %v1260
    %1714 = vmatprep.subr.bf16.mxu0 %v1265
    %1715 = vmatpush1.bf16.msra.mxu0 %v1264
    %1716 = vmatprep.subr.bf16.mxu0 %v1269
    %1717 = vmatpush1.bf16.msra.mxu0 %v1268
    %1718 = vmatprep.subr.bf16.mxu0 %v1273
    %1719 = vmatpush1.bf16.msra.mxu0 %v1272
    %1720 = vmatprep.subr.bf16.mxu0 %v1277
    %1721 = vmatpush1.bf16.msra.mxu0 %v1276
    %1722 = vmatprep.subr.bf16.mxu0 %v1281
    %1723 = vmatpush1.bf16.msra.mxu0 %v1280
    %1724 = vmatprep.subr.bf16.mxu0 %v1285
    %1725 = vmatpush1.bf16.msra.mxu0 %v1284
    %1726 = vmatprep.subr.bf16.mxu0 %v1289
    %1727 = vmatpush1.bf16.msra.mxu0 %v1288
    %1728 = vmatprep.subr.bf16.mxu0 %v1293
    %1729 = vmatpush1.bf16.msra.mxu0 %v1292
    %1730 = vmatprep.mubr.bf16.mxu0 %v479
    %1731 = vmatmul.mubr.bf16.gmra.mrb[0].mxu0 %v478
    %v1732 = vpop.f32.mrb[0].mxu0
    %v1733 = vadd.f32 %v1620, %v1732
    %v1734 = vpop.f32.mrb[0].mxu0
    %v1735 = vadd.f32 %v1622, %v1734
    %v1736 = vpop.f32.mrb[0].mxu0
    %v1737 = vadd.f32 %v1624, %v1736
    %v1738 = vpop.f32.mrb[0].mxu0
    %v1739 = vadd.f32 %v1626, %v1738
    %1740 = vmatprep.mubr.bf16.mxu0 %v486
    %1741 = vmatmul.mubr.bf16.gmra.mrb[0].mxu0 %v485
    %v1742 = vpop.f32.mrb[0].mxu0
    %v1743 = vadd.f32 %v1630, %v1742
    %v1744 = vpop.f32.mrb[0].mxu0
    %v1745 = vadd.f32 %v1632, %v1744
    %v1746 = vpop.f32.mrb[0].mxu0
    %v1747 = vadd.f32 %v1634, %v1746
    %v1748 = vpop.f32.mrb[0].mxu0
    %v1749 = vadd.f32 %v1636, %v1748
    %1750 = vmatprep.mubr.bf16.mxu0 %v493
    %1751 = vmatmul.mubr.bf16.gmra.mrb[0].mxu0 %v492
    %v1752 = vpop.f32.mrb[0].mxu0
    %v1753 = vadd.f32 %v1640, %v1752
    %v1754 = vpop.f32.mrb[0].mxu0
    %v1755 = vadd.f32 %v1642, %v1754
    %v1756 = vpop.f32.mrb[0].mxu0
    %v1757 = vadd.f32 %v1644, %v1756
    %v1758 = vpop.f32.mrb[0].mxu0
    %v1759 = vadd.f32 %v1646, %v1758
    %1760 = vmatprep.mubr.bf16.mxu0 %v500
    %1761 = vmatmul.mubr.bf16.gmra.mrb[0].mxu0 %v499
    %v1762 = vpop.f32.mrb[0].mxu0
    %v1763 = vadd.f32 %v1650, %v1762
    %v1764 = vpop.f32.mrb[0].mxu0
    %v1765 = vadd.f32 %v1652, %v1764
    %v1766 = vpop.f32.mrb[0].mxu0
    %v1767 = vadd.f32 %v1654, %v1766
    %v1768 = vpop.f32.mrb[0].mxu0
    %v1769 = vadd.f32 %v1656, %v1768
    %1770 = vmatprep.mubr.bf16.mxu0 %v507
    %1771 = vmatmul.mubr.bf16.gmra.mrb[0].mxu0 %v506
    %v1772 = vpop.f32.mrb[0].mxu0
    %v1773 = vadd.f32 %v1660, %v1772
    %v1774 = vpop.f32.mrb[0].mxu0
    %v1775 = vadd.f32 %v1662, %v1774
    %v1776 = vpop.f32.mrb[0].mxu0
    %v1777 = vadd.f32 %v1664, %v1776
    %v1778 = vpop.f32.mrb[0].mxu0
    %v1779 = vadd.f32 %v1666, %v1778
    %1780 = vmatprep.mubr.bf16.mxu0 %v514
    %1781 = vmatmul.mubr.bf16.gmra.mrb[0].mxu0 %v513
    %v1782 = vpop.f32.mrb[0].mxu0
    %v1783 = vadd.f32 %v1670, %v1782
    %v1784 = vpop.f32.mrb[0].mxu0
    %v1785 = vadd.f32 %v1672, %v1784
    %v1786 = vpop.f32.mrb[0].mxu0
    %v1787 = vadd.f32 %v1674, %v1786
    %v1788 = vpop.f32.mrb[0].mxu0
    %v1789 = vadd.f32 %v1676, %v1788
    %1790 = vmatprep.mubr.bf16.mxu0 %v521
    %1791 = vmatmul.mubr.bf16.gmra.mrb[0].mxu0 %v520
    %v1792 = vpop.f32.mrb[0].mxu0
    %v1793 = vadd.f32 %v1680, %v1792
    %v1794 = vpop.f32.mrb[0].mxu0
    %v1795 = vadd.f32 %v1682, %v1794
    %v1796 = vpop.f32.mrb[0].mxu0
    %v1797 = vadd.f32 %v1684, %v1796
    %v1798 = vpop.f32.mrb[0].mxu0
    %v1799 = vadd.f32 %v1686, %v1798
    %1800 = vmatprep.mubr.bf16.mxu0 %v528
    %1801 = vmatmul.mubr.bf16.gmra.mrb[0].mxu0 %v527
    %v1802 = vpop.f32.mrb[0].mxu0
    %v1803 = vadd.f32 %v1690, %v1802
    %v1804 = vpop.f32.mrb[0].mxu0
    %v1805 = vadd.f32 %v1692, %v1804
    %v1806 = vpop.f32.mrb[0].mxu0
    %v1807 = vadd.f32 %v1694, %v1806
    %v1808 = vpop.f32.mrb[0].mxu0
    %v1809 = vadd.f32 %v1696, %v1808
    %1810 = vdwg.mxu0
    %1811 = vmatprep.subr.bf16.mxu0 %v1297
    %1812 = vmatpush1.bf16.msra.mxu0 %v1296
    %1813 = vmatprep.subr.bf16.mxu0 %v1301
    %1814 = vmatpush1.bf16.msra.mxu0 %v1300
    %1815 = vmatprep.subr.bf16.mxu0 %v1305
    %1816 = vmatpush1.bf16.msra.mxu0 %v1304
    %1817 = vmatprep.subr.bf16.mxu0 %v1309
    %1818 = vmatpush1.bf16.msra.mxu0 %v1308
    %1819 = vmatprep.subr.bf16.mxu0 %v1313
    %1820 = vmatpush1.bf16.msra.mxu0 %v1312
    %1821 = vmatprep.subr.bf16.mxu0 %v1317
    %1822 = vmatpush1.bf16.msra.mxu0 %v1316
    %1823 = vmatprep.subr.bf16.mxu0 %v1321
    %1824 = vmatpush1.bf16.msra.mxu0 %v1320
    %1825 = vmatprep.subr.bf16.mxu0 %v1325
    %1826 = vmatpush1.bf16.msra.mxu0 %v1324
    %1827 = vmatprep.subr.bf16.mxu0 %v1329
    %1828 = vmatpush1.bf16.msra.mxu0 %v1328
    %1829 = vmatprep.subr.bf16.mxu0 %v1333
    %1830 = vmatpush1.bf16.msra.mxu0 %v1332
    %1831 = vmatprep.subr.bf16.mxu0 %v1337
    %1832 = vmatpush1.bf16.msra.mxu0 %v1336
    %1833 = vmatprep.subr.bf16.mxu0 %v1341
    %1834 = vmatpush1.bf16.msra.mxu0 %v1340
    %1835 = vmatprep.subr.bf16.mxu0 %v1345
    %1836 = vmatpush1.bf16.msra.mxu0 %v1344
    %1837 = vmatprep.subr.bf16.mxu0 %v1349
    %1838 = vmatpush1.bf16.msra.mxu0 %v1348
    %1839 = vmatprep.subr.bf16.mxu0 %v1353
    %1840 = vmatpush1.bf16.msra.mxu0 %v1352
    %1841 = vmatprep.subr.bf16.mxu0 %v1357
    %1842 = vmatpush1.bf16.msra.mxu0 %v1356
    %1843 = vmatprep.mubr.bf16.mxu0 %v481
    %1844 = vmatmul.mubr.bf16.gmra.mrb[0].mxu0 %v480
    %v1845 = vpop.f32.mrb[0].mxu0
    %v1846 = vadd.f32 %v1733, %v1845
    %v1847 = vpop.f32.mrb[0].mxu0
    %v1848 = vadd.f32 %v1735, %v1847
    %v1849 = vpop.f32.mrb[0].mxu0
    %v1850 = vadd.f32 %v1737, %v1849
    %v1851 = vpop.f32.mrb[0].mxu0
    %v1852 = vadd.f32 %v1739, %v1851
    %1853 = vmatprep.mubr.bf16.mxu0 %v488
    %1854 = vmatmul.mubr.bf16.gmra.mrb[0].mxu0 %v487
    %v1855 = vpop.f32.mrb[0].mxu0
    %v1856 = vadd.f32 %v1743, %v1855
    %v1857 = vpop.f32.mrb[0].mxu0
    %v1858 = vadd.f32 %v1745, %v1857
    %v1859 = vpop.f32.mrb[0].mxu0
    %v1860 = vadd.f32 %v1747, %v1859
    %v1861 = vpop.f32.mrb[0].mxu0
    %v1862 = vadd.f32 %v1749, %v1861
    %1863 = vmatprep.mubr.bf16.mxu0 %v495
    %1864 = vmatmul.mubr.bf16.gmra.mrb[0].mxu0 %v494
    %v1865 = vpop.f32.mrb[0].mxu0
    %v1866 = vadd.f32 %v1753, %v1865
    %v1867 = vpop.f32.mrb[0].mxu0
    %v1868 = vadd.f32 %v1755, %v1867
    %v1869 = vpop.f32.mrb[0].mxu0
    %v1870 = vadd.f32 %v1757, %v1869
    %v1871 = vpop.f32.mrb[0].mxu0
    %v1872 = vadd.f32 %v1759, %v1871
    %1873 = vmatprep.mubr.bf16.mxu0 %v502
    %1874 = vmatmul.mubr.bf16.gmra.mrb[0].mxu0 %v501
    %v1875 = vpop.f32.mrb[0].mxu0
    %v1876 = vadd.f32 %v1763, %v1875
    %v1877 = vpop.f32.mrb[0].mxu0
    %v1878 = vadd.f32 %v1765, %v1877
    %v1879 = vpop.f32.mrb[0].mxu0
    %v1880 = vadd.f32 %v1767, %v1879
    %v1881 = vpop.f32.mrb[0].mxu0
    %v1882 = vadd.f32 %v1769, %v1881
    %1883 = vmatprep.mubr.bf16.mxu0 %v509
    %1884 = vmatmul.mubr.bf16.gmra.mrb[0].mxu0 %v508
    %v1885 = vpop.f32.mrb[0].mxu0
    %v1886 = vadd.f32 %v1773, %v1885
    %v1887 = vpop.f32.mrb[0].mxu0
    %v1888 = vadd.f32 %v1775, %v1887
    %v1889 = vpop.f32.mrb[0].mxu0
    %v1890 = vadd.f32 %v1777, %v1889
    %v1891 = vpop.f32.mrb[0].mxu0
    %v1892 = vadd.f32 %v1779, %v1891
    %1893 = vmatprep.mubr.bf16.mxu0 %v516
    %1894 = vmatmul.mubr.bf16.gmra.mrb[0].mxu0 %v515
    %v1895 = vpop.f32.mrb[0].mxu0
    %v1896 = vadd.f32 %v1783, %v1895
    %v1897 = vpop.f32.mrb[0].mxu0
    %v1898 = vadd.f32 %v1785, %v1897
    %v1899 = vpop.f32.mrb[0].mxu0
    %v1900 = vadd.f32 %v1787, %v1899
    %v1901 = vpop.f32.mrb[0].mxu0
    %v1902 = vadd.f32 %v1789, %v1901
    %1903 = vmatprep.mubr.bf16.mxu0 %v523
    %1904 = vmatmul.mubr.bf16.gmra.mrb[0].mxu0 %v522
    %v1905 = vpop.f32.mrb[0].mxu0
    %v1906 = vadd.f32 %v1793, %v1905
    %v1907 = vpop.f32.mrb[0].mxu0
    %v1908 = vadd.f32 %v1795, %v1907
    %v1909 = vpop.f32.mrb[0].mxu0
    %v1910 = vadd.f32 %v1797, %v1909
    %v1911 = vpop.f32.mrb[0].mxu0
    %v1912 = vadd.f32 %v1799, %v1911
    %1913 = vmatprep.mubr.bf16.mxu0 %v530
    %1914 = vmatmul.mubr.bf16.gmra.mrb[0].mxu0 %v529
    %v1915 = vpop.f32.mrb[0].mxu0
    %v1916 = vadd.f32 %v1803, %v1915
    %v1917 = vpop.f32.mrb[0].mxu0
    %v1918 = vadd.f32 %v1805, %v1917
    %v1919 = vpop.f32.mrb[0].mxu0
    %v1920 = vadd.f32 %v1807, %v1919
    %v1921 = vpop.f32.mrb[0].mxu0
    %v1922 = vadd.f32 %v1809, %v1921
    %1923 = vdwg.mxu0
    %1924 = vmatprep.subr.bf16.mxu0 %v1361
    %1925 = vmatpush1.bf16.msra.mxu0 %v1360
    %1926 = vmatprep.subr.bf16.mxu0 0
    %1927 = vmatpush1.bf16.msra.mxu0 0
    %1928 = vmatprep.subr.bf16.mxu0 0
    %1929 = vmatpush1.bf16.msra.mxu0 0
    %1930 = vmatprep.subr.bf16.mxu0 0
    %1931 = vmatpush1.bf16.msra.mxu0 0
    %1932 = vmatprep.subr.bf16.mxu0 0
    %1933 = vmatpush1.bf16.msra.mxu0 0
    %1934 = vmatprep.subr.bf16.mxu0 0
    %1935 = vmatpush1.bf16.msra.mxu0 0
    %1936 = vmatprep.subr.bf16.mxu0 0
    %1937 = vmatpush1.bf16.msra.mxu0 0
    %1938 = vmatprep.subr.bf16.mxu0 0
    %1939 = vmatpush1.bf16.msra.mxu0 0
    %1940 = vmatprep.subr.bf16.mxu0 0
    %1941 = vmatpush1.bf16.msra.mxu0 0
    %1942 = vmatprep.subr.bf16.mxu0 0
    %1943 = vmatpush1.bf16.msra.mxu0 0
    %1944 = vmatprep.subr.bf16.mxu0 0
    %1945 = vmatpush1.bf16.msra.mxu0 0
    %1946 = vmatprep.subr.bf16.mxu0 0
    %1947 = vmatpush1.bf16.msra.mxu0 0
    %1948 = vmatprep.subr.bf16.mxu0 0
    %1949 = vmatpush1.bf16.msra.mxu0 0
    %1950 = vmatprep.subr.bf16.mxu0 0
    %1951 = vmatpush1.bf16.msra.mxu0 0
    %1952 = vmatprep.subr.bf16.mxu0 0
    %1953 = vmatpush1.bf16.msra.mxu0 0
    %1954 = vmatprep.subr.bf16.mxu0 0
    %1955 = vmatpush1.bf16.msra.mxu0 0
    %1956 = vmatprep.mubr.bf16.mxu0 0
    %1957 = vmatmul.mubr.bf16.gmra.mrb[0].mxu0 %v1562
    %v1958 = vpop.f32.mrb[0].mxu0
    %v1959 = vadd.f32 %v1846, %v1958
    %v1960 = vpop.f32.mrb[0].mxu0
    %v1961 = vadd.f32 %v1848, %v1960
    %v1962 = vpop.f32.mrb[0].mxu0
    %v1963 = vadd.f32 %v1850, %v1962
    %v1964 = vpop.f32.mrb[0].mxu0
    %v1965 = vadd.f32 %v1852, %v1964
    %1966 = vmatprep.mubr.bf16.mxu0 0
    %1967 = vmatmul.mubr.bf16.gmra.mrb[0].mxu0 %v1565
    %v1968 = vpop.f32.mrb[0].mxu0
    %v1969 = vadd.f32 %v1856, %v1968
    %v1970 = vpop.f32.mrb[0].mxu0
    %v1971 = vadd.f32 %v1858, %v1970
    %v1972 = vpop.f32.mrb[0].mxu0
    %v1973 = vadd.f32 %v1860, %v1972
    %v1974 = vpop.f32.mrb[0].mxu0
    %v1975 = vadd.f32 %v1862, %v1974
    %1976 = vmatprep.mubr.bf16.mxu0 0
    %1977 = vmatmul.mubr.bf16.gmra.mrb[0].mxu0 %v1568
    %v1978 = vpop.f32.mrb[0].mxu0
    %v1979 = vadd.f32 %v1866, %v1978
    %v1980 = vpop.f32.mrb[0].mxu0
    %v1981 = vadd.f32 %v1868, %v1980
    %v1982 = vpop.f32.mrb[0].mxu0
    %v1983 = vadd.f32 %v1870, %v1982
    %v1984 = vpop.f32.mrb[0].mxu0
    %v1985 = vadd.f32 %v1872, %v1984
    %1986 = vmatprep.mubr.bf16.mxu0 0
    %1987 = vmatmul.mubr.bf16.gmra.mrb[0].mxu0 %v1571
    %v1988 = vpop.f32.mrb[0].mxu0
    %v1989 = vadd.f32 %v1876, %v1988
    %v1990 = vpop.f32.mrb[0].mxu0
    %v1991 = vadd.f32 %v1878, %v1990
    %v1992 = vpop.f32.mrb[0].mxu0
    %v1993 = vadd.f32 %v1880, %v1992
    %v1994 = vpop.f32.mrb[0].mxu0
    %v1995 = vadd.f32 %v1882, %v1994
    %1996 = vmatprep.mubr.bf16.mxu0 0
    %1997 = vmatmul.mubr.bf16.gmra.mrb[0].mxu0 %v1574
    %v1998 = vpop.f32.mrb[0].mxu0
    %v1999 = vadd.f32 %v1886, %v1998
    %v2000 = vpop.f32.mrb[0].mxu0
    %v2001 = vadd.f32 %v1888, %v2000
    %v2002 = vpop.f32.mrb[0].mxu0
    %v2003 = vadd.f32 %v1890, %v2002
    %v2004 = vpop.f32.mrb[0].mxu0
    %v2005 = vadd.f32 %v1892, %v2004
    %2006 = vmatprep.mubr.bf16.mxu0 0
    %2007 = vmatmul.mubr.bf16.gmra.mrb[0].mxu0 %v1577
    %v2008 = vpop.f32.mrb[0].mxu0
    %v2009 = vadd.f32 %v1896, %v2008
    %v2010 = vpop.f32.mrb[0].mxu0
    %v2011 = vadd.f32 %v1898, %v2010
    %v2012 = vpop.f32.mrb[0].mxu0
    %v2013 = vadd.f32 %v1900, %v2012
    %v2014 = vpop.f32.mrb[0].mxu0
    %v2015 = vadd.f32 %v1902, %v2014
    %2016 = vmatprep.mubr.bf16.mxu0 0
    %2017 = vmatmul.mubr.bf16.gmra.mrb[0].mxu0 %v1580
    %v2018 = vpop.f32.mrb[0].mxu0
    %v2019 = vadd.f32 %v1906, %v2018
    %v2020 = vpop.f32.mrb[0].mxu0
    %v2021 = vadd.f32 %v1908, %v2020
    %v2022 = vpop.f32.mrb[0].mxu0
    %v2023 = vadd.f32 %v1910, %v2022
    %v2024 = vpop.f32.mrb[0].mxu0
    %v2025 = vadd.f32 %v1912, %v2024
    %2026 = vmatprep.mubr.bf16.mxu0 0
    %2027 = vmatmul.mubr.bf16.gmra.mrb[0].mxu0 %v1583
    %v2028 = vpop.f32.mrb[0].mxu0
    %v2029 = vadd.f32 %v1916, %v2028
    %v2030 = vpop.f32.mrb[0].mxu0
    %v2031 = vadd.f32 %v1918, %v2030
    %v2032 = vpop.f32.mrb[0].mxu0
    %v2033 = vadd.f32 %v1920, %v2032
    %v2034 = vpop.f32.mrb[0].mxu0
    %v2035 = vadd.f32 %v1922, %v2034
    %2036 = vdwg.mxu0
    %2037 = vmatprep.subr.bf16.mxu0 %v1171
    %2038 = vmatpush1.bf16.msra.mxu0 %v1170
    %2039 = vmatprep.subr.bf16.mxu0 %v1175
    %2040 = vmatpush1.bf16.msra.mxu0 %v1174
    %2041 = vmatprep.subr.bf16.mxu0 %v1179
    %2042 = vmatpush1.bf16.msra.mxu0 %v1178
    %2043 = vmatprep.subr.bf16.mxu0 %v1183
    %2044 = vmatpush1.bf16.msra.mxu0 %v1182
    %2045 = vmatprep.subr.bf16.mxu0 %v1187
    %2046 = vmatpush1.bf16.msra.mxu0 %v1186
    %2047 = vmatprep.subr.bf16.mxu0 %v1191
    %2048 = vmatpush1.bf16.msra.mxu0 %v1190
    %2049 = vmatprep.subr.bf16.mxu0 %v1195
    %2050 = vmatpush1.bf16.msra.mxu0 %v1194
    %2051 = vmatprep.subr.bf16.mxu0 %v1199
    %2052 = vmatpush1.bf16.msra.mxu0 %v1198
    %2053 = vmatprep.subr.bf16.mxu0 %v1203
    %2054 = vmatpush1.bf16.msra.mxu0 %v1202
    %2055 = vmatprep.subr.bf16.mxu0 %v1207
    %2056 = vmatpush1.bf16.msra.mxu0 %v1206
    %2057 = vmatprep.subr.bf16.mxu0 %v1211
    %2058 = vmatpush1.bf16.msra.mxu0 %v1210
    %2059 = vmatprep.subr.bf16.mxu0 %v1215
    %2060 = vmatpush1.bf16.msra.mxu0 %v1214
    %2061 = vmatprep.subr.bf16.mxu0 %v1219
    %2062 = vmatpush1.bf16.msra.mxu0 %v1218
    %2063 = vmatprep.subr.bf16.mxu0 %v1223
    %2064 = vmatpush1.bf16.msra.mxu0 %v1222
    %2065 = vmatprep.subr.bf16.mxu0 %v1227
    %2066 = vmatpush1.bf16.msra.mxu0 %v1226
    %2067 = vmatprep.subr.bf16.mxu0 %v1231
    %2068 = vmatpush1.bf16.msra.mxu0 %v1230
    %2069 = vmatprep.mubr.bf16.mxu0 %v477
    %2070 = vmatmul.mubr.bf16.gmra.mrb[0].mxu0 %v476
    %v2071 = vpop.f32.mrb[0].mxu0
    %v2072 = vadd.f32 0.0, %v2071
    %v2073 = vpop.f32.mrb[0].mxu0
    %v2074 = vadd.f32 0.0, %v2073
    %v2075 = vpop.f32.mrb[0].mxu0
    %v2076 = vadd.f32 0.0, %v2075
    %v2077 = vpop.f32.mrb[0].mxu0
    %v2078 = vadd.f32 0.0, %v2077
    %2079 = vmatprep.mubr.bf16.mxu0 %v484
    %2080 = vmatmul.mubr.bf16.gmra.mrb[0].mxu0 %v483
    %v2081 = vpop.f32.mrb[0].mxu0
    %v2082 = vadd.f32 0.0, %v2081
    %v2083 = vpop.f32.mrb[0].mxu0
    %v2084 = vadd.f32 0.0, %v2083
    %v2085 = vpop.f32.mrb[0].mxu0
    %v2086 = vadd.f32 0.0, %v2085
    %v2087 = vpop.f32.mrb[0].mxu0
    %v2088 = vadd.f32 0.0, %v2087
    %2089 = vmatprep.mubr.bf16.mxu0 %v491
    %2090 = vmatmul.mubr.bf16.gmra.mrb[0].mxu0 %v490
    %v2091 = vpop.f32.mrb[0].mxu0
    %v2092 = vadd.f32 0.0, %v2091
    %v2093 = vpop.f32.mrb[0].mxu0
    %v2094 = vadd.f32 0.0, %v2093
    %v2095 = vpop.f32.mrb[0].mxu0
    %v2096 = vadd.f32 0.0, %v2095
    %v2097 = vpop.f32.mrb[0].mxu0
    %v2098 = vadd.f32 0.0, %v2097
    %2099 = vmatprep.mubr.bf16.mxu0 %v498
    %2100 = vmatmul.mubr.bf16.gmra.mrb[0].mxu0 %v497
    %v2101 = vpop.f32.mrb[0].mxu0
    %v2102 = vadd.f32 0.0, %v2101
    %v2103 = vpop.f32.mrb[0].mxu0
    %v2104 = vadd.f32 0.0, %v2103
    %v2105 = vpop.f32.mrb[0].mxu0
    %v2106 = vadd.f32 0.0, %v2105
    %v2107 = vpop.f32.mrb[0].mxu0
    %v2108 = vadd.f32 0.0, %v2107
    %2109 = vmatprep.mubr.bf16.mxu0 %v505
    %2110 = vmatmul.mubr.bf16.gmra.mrb[0].mxu0 %v504
    %v2111 = vpop.f32.mrb[0].mxu0
    %v2112 = vadd.f32 0.0, %v2111
    %v2113 = vpop.f32.mrb[0].mxu0
    %v2114 = vadd.f32 0.0, %v2113
    %v2115 = vpop.f32.mrb[0].mxu0
    %v2116 = vadd.f32 0.0, %v2115
    %v2117 = vpop.f32.mrb[0].mxu0
    %v2118 = vadd.f32 0.0, %v2117
    %2119 = vmatprep.mubr.bf16.mxu0 %v512
    %2120 = vmatmul.mubr.bf16.gmra.mrb[0].mxu0 %v511
    %v2121 = vpop.f32.mrb[0].mxu0
    %v2122 = vadd.f32 0.0, %v2121
    %v2123 = vpop.f32.mrb[0].mxu0
    %v2124 = vadd.f32 0.0, %v2123
    %v2125 = vpop.f32.mrb[0].mxu0
    %v2126 = vadd.f32 0.0, %v2125
    %v2127 = vpop.f32.mrb[0].mxu0
    %v2128 = vadd.f32 0.0, %v2127
    %2129 = vmatprep.mubr.bf16.mxu0 %v519
    %2130 = vmatmul.mubr.bf16.gmra.mrb[0].mxu0 %v518
    %v2131 = vpop.f32.mrb[0].mxu0
    %v2132 = vadd.f32 0.0, %v2131
    %v2133 = vpop.f32.mrb[0].mxu0
    %v2134 = vadd.f32 0.0, %v2133
    %v2135 = vpop.f32.mrb[0].mxu0
    %v2136 = vadd.f32 0.0, %v2135
    %v2137 = vpop.f32.mrb[0].mxu0
    %v2138 = vadd.f32 0.0, %v2137
    %2139 = vmatprep.mubr.bf16.mxu0 %v526
    %2140 = vmatmul.mubr.bf16.gmra.mrb[0].mxu0 %v525
    %v2141 = vpop.f32.mrb[0].mxu0
    %v2142 = vadd.f32 0.0, %v2141
    %v2143 = vpop.f32.mrb[0].mxu0
    %v2144 = vadd.f32 0.0, %v2143
    %v2145 = vpop.f32.mrb[0].mxu0
    %v2146 = vadd.f32 0.0, %v2145
    %v2147 = vpop.f32.mrb[0].mxu0
    %v2148 = vadd.f32 0.0, %v2147
    %2149 = vdwg.mxu0
    %2150 = vmatprep.subr.bf16.mxu0 %v1235
    %2151 = vmatpush1.bf16.msra.mxu0 %v1234
    %2152 = vmatprep.subr.bf16.mxu0 %v1239
    %2153 = vmatpush1.bf16.msra.mxu0 %v1238
    %2154 = vmatprep.subr.bf16.mxu0 %v1243
    %2155 = vmatpush1.bf16.msra.mxu0 %v1242
    %2156 = vmatprep.subr.bf16.mxu0 %v1247
    %2157 = vmatpush1.bf16.msra.mxu0 %v1246
    %2158 = vmatprep.subr.bf16.mxu0 %v1251
    %2159 = vmatpush1.bf16.msra.mxu0 %v1250
    %2160 = vmatprep.subr.bf16.mxu0 %v1255
    %2161 = vmatpush1.bf16.msra.mxu0 %v1254
    %2162 = vmatprep.subr.bf16.mxu0 %v1259
    %2163 = vmatpush1.bf16.msra.mxu0 %v1258
    %2164 = vmatprep.subr.bf16.mxu0 %v1263
    %2165 = vmatpush1.bf16.msra.mxu0 %v1262
    %2166 = vmatprep.subr.bf16.mxu0 %v1267
    %2167 = vmatpush1.bf16.msra.mxu0 %v1266
    %2168 = vmatprep.subr.bf16.mxu0 %v1271
    %2169 = vmatpush1.bf16.msra.mxu0 %v1270
    %2170 = vmatprep.subr.bf16.mxu0 %v1275
    %2171 = vmatpush1.bf16.msra.mxu0 %v1274
    %2172 = vmatprep.subr.bf16.mxu0 %v1279
    %2173 = vmatpush1.bf16.msra.mxu0 %v1278
    %2174 = vmatprep.subr.bf16.mxu0 %v1283
    %2175 = vmatpush1.bf16.msra.mxu0 %v1282
    %2176 = vmatprep.subr.bf16.mxu0 %v1287
    %2177 = vmatpush1.bf16.msra.mxu0 %v1286
    %2178 = vmatprep.subr.bf16.mxu0 %v1291
    %2179 = vmatpush1.bf16.msra.mxu0 %v1290
    %2180 = vmatprep.subr.bf16.mxu0 %v1295
    %2181 = vmatpush1.bf16.msra.mxu0 %v1294
    %2182 = vmatprep.mubr.bf16.mxu0 %v479
    %2183 = vmatmul.mubr.bf16.gmra.mrb[0].mxu0 %v478
    %v2184 = vpop.f32.mrb[0].mxu0
    %v2185 = vadd.f32 %v2072, %v2184
    %v2186 = vpop.f32.mrb[0].mxu0
    %v2187 = vadd.f32 %v2074, %v2186
    %v2188 = vpop.f32.mrb[0].mxu0
    %v2189 = vadd.f32 %v2076, %v2188
    %v2190 = vpop.f32.mrb[0].mxu0
    %v2191 = vadd.f32 %v2078, %v2190
    %2192 = vmatprep.mubr.bf16.mxu0 %v486
    %2193 = vmatmul.mubr.bf16.gmra.mrb[0].mxu0 %v485
    %v2194 = vpop.f32.mrb[0].mxu0
    %v2195 = vadd.f32 %v2082, %v2194
    %v2196 = vpop.f32.mrb[0].mxu0
    %v2197 = vadd.f32 %v2084, %v2196
    %v2198 = vpop.f32.mrb[0].mxu0
    %v2199 = vadd.f32 %v2086, %v2198
    %v2200 = vpop.f32.mrb[0].mxu0
    %v2201 = vadd.f32 %v2088, %v2200
    %2202 = vmatprep.mubr.bf16.mxu0 %v493
    %2203 = vmatmul.mubr.bf16.gmra.mrb[0].mxu0 %v492
    %v2204 = vpop.f32.mrb[0].mxu0
    %v2205 = vadd.f32 %v2092, %v2204
    %v2206 = vpop.f32.mrb[0].mxu0
    %v2207 = vadd.f32 %v2094, %v2206
    %v2208 = vpop.f32.mrb[0].mxu0
    %v2209 = vadd.f32 %v2096, %v2208
    %v2210 = vpop.f32.mrb[0].mxu0
    %v2211 = vadd.f32 %v2098, %v2210
    %2212 = vmatprep.mubr.bf16.mxu0 %v500
    %2213 = vmatmul.mubr.bf16.gmra.mrb[0].mxu0 %v499
    %v2214 = vpop.f32.mrb[0].mxu0
    %v2215 = vadd.f32 %v2102, %v2214
    %v2216 = vpop.f32.mrb[0].mxu0
    %v2217 = vadd.f32 %v2104, %v2216
    %v2218 = vpop.f32.mrb[0].mxu0
    %v2219 = vadd.f32 %v2106, %v2218
    %v2220 = vpop.f32.mrb[0].mxu0
    %v2221 = vadd.f32 %v2108, %v2220
    %2222 = vmatprep.mubr.bf16.mxu0 %v507
    %2223 = vmatmul.mubr.bf16.gmra.mrb[0].mxu0 %v506
    %v2224 = vpop.f32.mrb[0].mxu0
    %v2225 = vadd.f32 %v2112, %v2224
    %v2226 = vpop.f32.mrb[0].mxu0
    %v2227 = vadd.f32 %v2114, %v2226
    %v2228 = vpop.f32.mrb[0].mxu0
    %v2229 = vadd.f32 %v2116, %v2228
    %v2230 = vpop.f32.mrb[0].mxu0
    %v2231 = vadd.f32 %v2118, %v2230
    %2232 = vmatprep.mubr.bf16.mxu0 %v514
    %2233 = vmatmul.mubr.bf16.gmra.mrb[0].mxu0 %v513
    %v2234 = vpop.f32.mrb[0].mxu0
    %v2235 = vadd.f32 %v2122, %v2234
    %v2236 = vpop.f32.mrb[0].mxu0
    %v2237 = vadd.f32 %v2124, %v2236
    %v2238 = vpop.f32.mrb[0].mxu0
    %v2239 = vadd.f32 %v2126, %v2238
    %v2240 = vpop.f32.mrb[0].mxu0
    %v2241 = vadd.f32 %v2128, %v2240
    %2242 = vmatprep.mubr.bf16.mxu0 %v521
    %2243 = vmatmul.mubr.bf16.gmra.mrb[0].mxu0 %v520
    %v2244 = vpop.f32.mrb[0].mxu0
    %v2245 = vadd.f32 %v2132, %v2244
    %v2246 = vpop.f32.mrb[0].mxu0
    %v2247 = vadd.f32 %v2134, %v2246
    %v2248 = vpop.f32.mrb[0].mxu0
    %v2249 = vadd.f32 %v2136, %v2248
    %v2250 = vpop.f32.mrb[0].mxu0
    %v2251 = vadd.f32 %v2138, %v2250
    %2252 = vmatprep.mubr.bf16.mxu0 %v528
    %2253 = vmatmul.mubr.bf16.gmra.mrb[0].mxu0 %v527
    %v2254 = vpop.f32.mrb[0].mxu0
    %v2255 = vadd.f32 %v2142, %v2254
    %v2256 = vpop.f32.mrb[0].mxu0
    %v2257 = vadd.f32 %v2144, %v2256
    %v2258 = vpop.f32.mrb[0].mxu0
    %v2259 = vadd.f32 %v2146, %v2258
    %v2260 = vpop.f32.mrb[0].mxu0
    %v2261 = vadd.f32 %v2148, %v2260
    %2262 = vdwg.mxu0
    %2263 = vmatprep.subr.bf16.mxu0 %v1299
    %2264 = vmatpush1.bf16.msra.mxu0 %v1298
    %2265 = vmatprep.subr.bf16.mxu0 %v1303
    %2266 = vmatpush1.bf16.msra.mxu0 %v1302
    %2267 = vmatprep.subr.bf16.mxu0 %v1307
    %2268 = vmatpush1.bf16.msra.mxu0 %v1306
    %2269 = vmatprep.subr.bf16.mxu0 %v1311
    %2270 = vmatpush1.bf16.msra.mxu0 %v1310
    %2271 = vmatprep.subr.bf16.mxu0 %v1315
    %2272 = vmatpush1.bf16.msra.mxu0 %v1314
    %2273 = vmatprep.subr.bf16.mxu0 %v1319
    %2274 = vmatpush1.bf16.msra.mxu0 %v1318
    %2275 = vmatprep.subr.bf16.mxu0 %v1323
    %2276 = vmatpush1.bf16.msra.mxu0 %v1322
    %2277 = vmatprep.subr.bf16.mxu0 %v1327
    %2278 = vmatpush1.bf16.msra.mxu0 %v1326
    %2279 = vmatprep.subr.bf16.mxu0 %v1331
    %2280 = vmatpush1.bf16.msra.mxu0 %v1330
    %2281 = vmatprep.subr.bf16.mxu0 %v1335
    %2282 = vmatpush1.bf16.msra.mxu0 %v1334
    %2283 = vmatprep.subr.bf16.mxu0 %v1339
    %2284 = vmatpush1.bf16.msra.mxu0 %v1338
    %2285 = vmatprep.subr.bf16.mxu0 %v1343
    %2286 = vmatpush1.bf16.msra.mxu0 %v1342
    %2287 = vmatprep.subr.bf16.mxu0 %v1347
    %2288 = vmatpush1.bf16.msra.mxu0 %v1346
    %2289 = vmatprep.subr.bf16.mxu0 %v1351
    %2290 = vmatpush1.bf16.msra.mxu0 %v1350
    %2291 = vmatprep.subr.bf16.mxu0 %v1355
    %2292 = vmatpush1.bf16.msra.mxu0 %v1354
    %2293 = vmatprep.subr.bf16.mxu0 %v1359
    %2294 = vmatpush1.bf16.msra.mxu0 %v1358
    %2295 = vmatprep.mubr.bf16.mxu0 %v481
    %2296 = vmatmul.mubr.bf16.gmra.mrb[0].mxu0 %v480
    %v2297 = vpop.f32.mrb[0].mxu0
    %v2298 = vadd.f32 %v2185, %v2297
    %v2299 = vpop.f32.mrb[0].mxu0
    %v2300 = vadd.f32 %v2187, %v2299
    %v2301 = vpop.f32.mrb[0].mxu0
    %v2302 = vadd.f32 %v2189, %v2301
    %v2303 = vpop.f32.mrb[0].mxu0
    %v2304 = vadd.f32 %v2191, %v2303
    %2305 = vmatprep.mubr.bf16.mxu0 %v488
    %2306 = vmatmul.mubr.bf16.gmra.mrb[0].mxu0 %v487
    %v2307 = vpop.f32.mrb[0].mxu0
    %v2308 = vadd.f32 %v2195, %v2307
    %v2309 = vpop.f32.mrb[0].mxu0
    %v2310 = vadd.f32 %v2197, %v2309
    %v2311 = vpop.f32.mrb[0].mxu0
    %v2312 = vadd.f32 %v2199, %v2311
    %v2313 = vpop.f32.mrb[0].mxu0
    %v2314 = vadd.f32 %v2201, %v2313
    %2315 = vmatprep.mubr.bf16.mxu0 %v495
    %2316 = vmatmul.mubr.bf16.gmra.mrb[0].mxu0 %v494
    %v2317 = vpop.f32.mrb[0].mxu0
    %v2318 = vadd.f32 %v2205, %v2317
    %v2319 = vpop.f32.mrb[0].mxu0
    %v2320 = vadd.f32 %v2207, %v2319
    %v2321 = vpop.f32.mrb[0].mxu0
    %v2322 = vadd.f32 %v2209, %v2321
    %v2323 = vpop.f32.mrb[0].mxu0
    %v2324 = vadd.f32 %v2211, %v2323
    %2325 = vmatprep.mubr.bf16.mxu0 %v502
    %2326 = vmatmul.mubr.bf16.gmra.mrb[0].mxu0 %v501
    %v2327 = vpop.f32.mrb[0].mxu0
    %v2328 = vadd.f32 %v2215, %v2327
    %v2329 = vpop.f32.mrb[0].mxu0
    %v2330 = vadd.f32 %v2217, %v2329
    %v2331 = vpop.f32.mrb[0].mxu0
    %v2332 = vadd.f32 %v2219, %v2331
    %v2333 = vpop.f32.mrb[0].mxu0
    %v2334 = vadd.f32 %v2221, %v2333
    %2335 = vmatprep.mubr.bf16.mxu0 %v509
    %2336 = vmatmul.mubr.bf16.gmra.mrb[0].mxu0 %v508
    %v2337 = vpop.f32.mrb[0].mxu0
    %v2338 = vadd.f32 %v2225, %v2337
    %v2339 = vpop.f32.mrb[0].mxu0
    %v2340 = vadd.f32 %v2227, %v2339
    %v2341 = vpop.f32.mrb[0].mxu0
    %v2342 = vadd.f32 %v2229, %v2341
    %v2343 = vpop.f32.mrb[0].mxu0
    %v2344 = vadd.f32 %v2231, %v2343
    %2345 = vmatprep.mubr.bf16.mxu0 %v516
    %2346 = vmatmul.mubr.bf16.gmra.mrb[0].mxu0 %v515
    %v2347 = vpop.f32.mrb[0].mxu0
    %v2348 = vadd.f32 %v2235, %v2347
    %v2349 = vpop.f32.mrb[0].mxu0
    %v2350 = vadd.f32 %v2237, %v2349
    %v2351 = vpop.f32.mrb[0].mxu0
    %v2352 = vadd.f32 %v2239, %v2351
    %v2353 = vpop.f32.mrb[0].mxu0
    %v2354 = vadd.f32 %v2241, %v2353
    %2355 = vmatprep.mubr.bf16.mxu0 %v523
    %2356 = vmatmul.mubr.bf16.gmra.mrb[0].mxu0 %v522
    %v2357 = vpop.f32.mrb[0].mxu0
    %v2358 = vadd.f32 %v2245, %v2357
    %v2359 = vpop.f32.mrb[0].mxu0
    %v2360 = vadd.f32 %v2247, %v2359
    %v2361 = vpop.f32.mrb[0].mxu0
    %v2362 = vadd.f32 %v2249, %v2361
    %v2363 = vpop.f32.mrb[0].mxu0
    %v2364 = vadd.f32 %v2251, %v2363
    %2365 = vmatprep.mubr.bf16.mxu0 %v530
    %2366 = vmatmul.mubr.bf16.gmra.mrb[0].mxu0 %v529
    %v2367 = vpop.f32.mrb[0].mxu0
    %v2368 = vadd.f32 %v2255, %v2367
    %v2369 = vpop.f32.mrb[0].mxu0
    %v2370 = vadd.f32 %v2257, %v2369
    %v2371 = vpop.f32.mrb[0].mxu0
    %v2372 = vadd.f32 %v2259, %v2371
    %v2373 = vpop.f32.mrb[0].mxu0
    %v2374 = vadd.f32 %v2261, %v2373
    %2375 = vdwg.mxu0
    %2376 = vmatprep.subr.bf16.mxu0 %v1363
    %2377 = vmatpush1.bf16.msra.mxu0 %v1362
    %2378 = vmatprep.subr.bf16.mxu0 0
    %2379 = vmatpush1.bf16.msra.mxu0 0
    %2380 = vmatprep.subr.bf16.mxu0 0
    %2381 = vmatpush1.bf16.msra.mxu0 0
    %2382 = vmatprep.subr.bf16.mxu0 0
    %2383 = vmatpush1.bf16.msra.mxu0 0
    %2384 = vmatprep.subr.bf16.mxu0 0
    %2385 = vmatpush1.bf16.msra.mxu0 0
    %2386 = vmatprep.subr.bf16.mxu0 0
    %2387 = vmatpush1.bf16.msra.mxu0 0
    %2388 = vmatprep.subr.bf16.mxu0 0
    %2389 = vmatpush1.bf16.msra.mxu0 0
    %2390 = vmatprep.subr.bf16.mxu0 0
    %2391 = vmatpush1.bf16.msra.mxu0 0
    %2392 = vmatprep.subr.bf16.mxu0 0
    %2393 = vmatpush1.bf16.msra.mxu0 0
    %2394 = vmatprep.subr.bf16.mxu0 0
    %2395 = vmatpush1.bf16.msra.mxu0 0
    %2396 = vmatprep.subr.bf16.mxu0 0
    %2397 = vmatpush1.bf16.msra.mxu0 0
    %2398 = vmatprep.subr.bf16.mxu0 0
    %2399 = vmatpush1.bf16.msra.mxu0 0
    %2400 = vmatprep.subr.bf16.mxu0 0
    %2401 = vmatpush1.bf16.msra.mxu0 0
    %2402 = vmatprep.subr.bf16.mxu0 0
    %2403 = vmatpush1.bf16.msra.mxu0 0
    %2404 = vmatprep.subr.bf16.mxu0 0
    %2405 = vmatpush1.bf16.msra.mxu0 0
    %2406 = vmatprep.subr.bf16.mxu0 0
    %2407 = vmatpush1.bf16.msra.mxu0 0
    %2408 = vmatprep.mubr.bf16.mxu0 0
    %2409 = vmatmul.mubr.bf16.gmra.mrb[0].mxu0 %v1562
    %v2410 = vpop.f32.mrb[0].mxu0
    %v2411 = vadd.f32 %v2298, %v2410
    %v2412 = vpop.f32.mrb[0].mxu0
    %v2413 = vadd.f32 %v2300, %v2412
    %v2414 = vpop.f32.mrb[0].mxu0
    %v2415 = vadd.f32 %v2302, %v2414
    %v2416 = vpop.f32.mrb[0].mxu0
    %v2417 = vadd.f32 %v2304, %v2416
    %2418 = vmatprep.mubr.bf16.mxu0 0
    %2419 = vmatmul.mubr.bf16.gmra.mrb[0].mxu0 %v1565
    %v2420 = vpop.f32.mrb[0].mxu0
    %v2421 = vadd.f32 %v2308, %v2420
    %v2422 = vpop.f32.mrb[0].mxu0
    %v2423 = vadd.f32 %v2310, %v2422
    %v2424 = vpop.f32.mrb[0].mxu0
    %v2425 = vadd.f32 %v2312, %v2424
    %v2426 = vpop.f32.mrb[0].mxu0
    %v2427 = vadd.f32 %v2314, %v2426
    %2428 = vmatprep.mubr.bf16.mxu0 0
    %2429 = vmatmul.mubr.bf16.gmra.mrb[0].mxu0 %v1568
    %v2430 = vpop.f32.mrb[0].mxu0
    %v2431 = vadd.f32 %v2318, %v2430
    %v2432 = vpop.f32.mrb[0].mxu0
    %v2433 = vadd.f32 %v2320, %v2432
    %v2434 = vpop.f32.mrb[0].mxu0
    %v2435 = vadd.f32 %v2322, %v2434
    %v2436 = vpop.f32.mrb[0].mxu0
    %v2437 = vadd.f32 %v2324, %v2436
    %2438 = vmatprep.mubr.bf16.mxu0 0
    %2439 = vmatmul.mubr.bf16.gmra.mrb[0].mxu0 %v1571
    %v2440 = vpop.f32.mrb[0].mxu0
    %v2441 = vadd.f32 %v2328, %v2440
    %v2442 = vpop.f32.mrb[0].mxu0
    %v2443 = vadd.f32 %v2330, %v2442
    %v2444 = vpop.f32.mrb[0].mxu0
    %v2445 = vadd.f32 %v2332, %v2444
    %v2446 = vpop.f32.mrb[0].mxu0
    %v2447 = vadd.f32 %v2334, %v2446
    %2448 = vmatprep.mubr.bf16.mxu0 0
    %2449 = vmatmul.mubr.bf16.gmra.mrb[0].mxu0 %v1574
    %v2450 = vpop.f32.mrb[0].mxu0
    %v2451 = vadd.f32 %v2338, %v2450
    %v2452 = vpop.f32.mrb[0].mxu0
    %v2453 = vadd.f32 %v2340, %v2452
    %v2454 = vpop.f32.mrb[0].mxu0
    %v2455 = vadd.f32 %v2342, %v2454
    %v2456 = vpop.f32.mrb[0].mxu0
    %v2457 = vadd.f32 %v2344, %v2456
    %2458 = vmatprep.mubr.bf16.mxu0 0
    %2459 = vmatmul.mubr.bf16.gmra.mrb[0].mxu0 %v1577
    %v2460 = vpop.f32.mrb[0].mxu0
    %v2461 = vadd.f32 %v2348, %v2460
    %v2462 = vpop.f32.mrb[0].mxu0
    %v2463 = vadd.f32 %v2350, %v2462
    %v2464 = vpop.f32.mrb[0].mxu0
    %v2465 = vadd.f32 %v2352, %v2464
    %v2466 = vpop.f32.mrb[0].mxu0
    %v2467 = vadd.f32 %v2354, %v2466
    %2468 = vmatprep.mubr.bf16.mxu0 0
    %2469 = vmatmul.mubr.bf16.gmra.mrb[0].mxu0 %v1580
    %v2470 = vpop.f32.mrb[0].mxu0
    %v2471 = vadd.f32 %v2358, %v2470
    %v2472 = vpop.f32.mrb[0].mxu0
    %v2473 = vadd.f32 %v2360, %v2472
    %v2474 = vpop.f32.mrb[0].mxu0
    %v2475 = vadd.f32 %v2362, %v2474
    %v2476 = vpop.f32.mrb[0].mxu0
    %v2477 = vadd.f32 %v2364, %v2476
    %2478 = vmatprep.mubr.bf16.mxu0 0
    %2479 = vmatmul.mubr.bf16.gmra.mrb[0].mxu0 %v1583
    %v2480 = vpop.f32.mrb[0].mxu0
    %v2481 = vadd.f32 %v2368, %v2480
    %v2482 = vpop.f32.mrb[0].mxu0
    %v2483 = vadd.f32 %v2370, %v2482
    %v2484 = vpop.f32.mrb[0].mxu0
    %v2485 = vadd.f32 %v2372, %v2484
    %v2486 = vpop.f32.mrb[0].mxu0
    %v2487 = vadd.f32 %v2374, %v2486
    %2488 = vdwg.mxu0
    %v2489 = vld [vmem:[%s2] ss:$2 sm:$0xf]
    %s2490 = scalar_lea.vmem %s2, 1
    %v2491 = vld [vmem:[%s2490] ss:$2 sm:$0xf]
    %v2492 = vadd.f32 %v1959, %v1963
    %v2493 = vadd.f32 %v2492, %v1969
    %v2494 = vadd.f32 %v2493, %v1973
    %v2495 = vadd.f32 %v2494, %v1979
    %v2496 = vadd.f32 %v2495, %v1983
    %v2497 = vadd.f32 %v2496, %v1989
    %v2498 = vadd.f32 %v2497, %v1993
    %v2499 = vadd.f32 %v2498, %v1999
    %v2500 = vadd.f32 %v2499, %v2003
    %v2501 = vadd.f32 %v2500, %v2009
    %v2502 = vadd.f32 %v2501, %v2013
    %v2503 = vadd.f32 %v2502, %v2019
    %v2504 = vadd.f32 %v2503, %v2023
    %v2505 = vadd.f32 %v2504, %v2029
    %v2506 = vadd.f32 %v2505, %v2033
    %v2507 = vrot.slane %v2506, 4
    %v2508 = vadd.f32 %v2506, %v2507
    %v2509 = vrot.slane %v2508, 2
    %v2510 = vadd.f32 %v2508, %v2509
    %v2511 = vrot.slane %v2510, 1
    %v2512 = vadd.f32 %v2510, %v2511
    %v2513 = vadd.f32 %v1961, %v1965
    %v2514 = vadd.f32 %v2513, %v1971
    %v2515 = vadd.f32 %v2514, %v1975
    %v2516 = vadd.f32 %v2515, %v1981
    %v2517 = vadd.f32 %v2516, %v1985
    %v2518 = vadd.f32 %v2517, %v1991
    %v2519 = vadd.f32 %v2518, %v1995
    %v2520 = vadd.f32 %v2519, %v2001
    %v2521 = vadd.f32 %v2520, %v2005
    %v2522 = vadd.f32 %v2521, %v2011
    %v2523 = vadd.f32 %v2522, %v2015
    %v2524 = vadd.f32 %v2523, %v2021
    %v2525 = vadd.f32 %v2524, %v2025
    %v2526 = vadd.f32 %v2525, %v2031
    %v2527 = vadd.f32 %v2526, %v2035
    %v2528 = vrot.slane %v2527, 4
    %v2529 = vadd.f32 %v2527, %v2528
    %v2530 = vrot.slane %v2529, 2
    %v2531 = vadd.f32 %v2529, %v2530
    %v2532 = vrot.slane %v2531, 1
    %v2533 = vadd.f32 %v2531, %v2532
    %v2534 = vadd.f32 %v2411, %v2415
    %v2535 = vadd.f32 %v2534, %v2421
    %v2536 = vadd.f32 %v2535, %v2425
    %v2537 = vadd.f32 %v2536, %v2431
    %v2538 = vadd.f32 %v2537, %v2435
    %v2539 = vadd.f32 %v2538, %v2441
    %v2540 = vadd.f32 %v2539, %v2445
    %v2541 = vadd.f32 %v2540, %v2451
    %v2542 = vadd.f32 %v2541, %v2455
    %v2543 = vadd.f32 %v2542, %v2461
    %v2544 = vadd.f32 %v2543, %v2465
    %v2545 = vadd.f32 %v2544, %v2471
    %v2546 = vadd.f32 %v2545, %v2475
    %v2547 = vadd.f32 %v2546, %v2481
    %v2548 = vadd.f32 %v2547, %v2485
    %v2549 = vrot.slane %v2548, 4
    %v2550 = vadd.f32 %v2548, %v2549
    %v2551 = vrot.slane %v2550, 2
    %v2552 = vadd.f32 %v2550, %v2551
    %v2553 = vrot.slane %v2552, 1
    %v2554 = vadd.f32 %v2552, %v2553
    %v2555 = vadd.f32 %v2413, %v2417
    %v2556 = vadd.f32 %v2555, %v2423
    %v2557 = vadd.f32 %v2556, %v2427
    %v2558 = vadd.f32 %v2557, %v2433
    %v2559 = vadd.f32 %v2558, %v2437
    %v2560 = vadd.f32 %v2559, %v2443
    %v2561 = vadd.f32 %v2560, %v2447
    %v2562 = vadd.f32 %v2561, %v2453
    %v2563 = vadd.f32 %v2562, %v2457
    %v2564 = vadd.f32 %v2563, %v2463
    %v2565 = vadd.f32 %v2564, %v2467
    %v2566 = vadd.f32 %v2565, %v2473
    %v2567 = vadd.f32 %v2566, %v2477
    %v2568 = vadd.f32 %v2567, %v2483
    %v2569 = vadd.f32 %v2568, %v2487
    %v2570 = vrot.slane %v2569, 4
    %v2571 = vadd.f32 %v2569, %v2570
    %v2572 = vrot.slane %v2571, 2
    %v2573 = vadd.f32 %v2571, %v2572
    %v2574 = vrot.slane %v2573, 1
    %v2575 = vadd.f32 %v2573, %v2574
    %v2576 = vmul.f32 %v1959, %v1959
    %v2577 = vmul.f32 %v1961, %v1961
    %v2578 = vmul.f32 %v2411, %v2411
    %v2579 = vmul.f32 %v2413, %v2413
    %v2580 = vmul.f32 %v1963, %v1963
    %v2581 = vmul.f32 %v1965, %v1965
    %v2582 = vmul.f32 %v2415, %v2415
    %v2583 = vmul.f32 %v2417, %v2417
    %v2584 = vmul.f32 %v1969, %v1969
    %v2585 = vmul.f32 %v1971, %v1971
    %v2586 = vmul.f32 %v2421, %v2421
    %v2587 = vmul.f32 %v2423, %v2423
    %v2588 = vmul.f32 %v1973, %v1973
    %v2589 = vmul.f32 %v1975, %v1975
    %v2590 = vmul.f32 %v2425, %v2425
    %v2591 = vmul.f32 %v2427, %v2427
    %v2592 = vmul.f32 %v1979, %v1979
    %v2593 = vmul.f32 %v1981, %v1981
    %v2594 = vmul.f32 %v2431, %v2431
    %v2595 = vmul.f32 %v2433, %v2433
    %v2596 = vmul.f32 %v1983, %v1983
    %v2597 = vmul.f32 %v1985, %v1985
    %v2598 = vmul.f32 %v2435, %v2435
    %v2599 = vmul.f32 %v2437, %v2437
    %v2600 = vmul.f32 %v1989, %v1989
    %v2601 = vmul.f32 %v1991, %v1991
    %v2602 = vmul.f32 %v2441, %v2441
    %v2603 = vmul.f32 %v2443, %v2443
    %v2604 = vmul.f32 %v1993, %v1993
    %v2605 = vmul.f32 %v1995, %v1995
    %v2606 = vmul.f32 %v2445, %v2445
    %v2607 = vmul.f32 %v2447, %v2447
    %v2608 = vmul.f32 %v1999, %v1999
    %v2609 = vmul.f32 %v2001, %v2001
    %v2610 = vmul.f32 %v2451, %v2451
    %v2611 = vmul.f32 %v2453, %v2453
    %v2612 = vmul.f32 %v2003, %v2003
    %v2613 = vmul.f32 %v2005, %v2005
    %v2614 = vmul.f32 %v2455, %v2455
    %v2615 = vmul.f32 %v2457, %v2457
    %v2616 = vmul.f32 %v2009, %v2009
    %v2617 = vmul.f32 %v2011, %v2011
    %v2618 = vmul.f32 %v2461, %v2461
    %v2619 = vmul.f32 %v2463, %v2463
    %v2620 = vmul.f32 %v2013, %v2013
    %v2621 = vmul.f32 %v2015, %v2015
    %v2622 = vmul.f32 %v2465, %v2465
    %v2623 = vmul.f32 %v2467, %v2467
    %v2624 = vmul.f32 %v2019, %v2019
    %v2625 = vmul.f32 %v2021, %v2021
    %v2626 = vmul.f32 %v2471, %v2471
    %v2627 = vmul.f32 %v2473, %v2473
    %v2628 = vmul.f32 %v2023, %v2023
    %v2629 = vmul.f32 %v2025, %v2025
    %v2630 = vmul.f32 %v2475, %v2475
    %v2631 = vmul.f32 %v2477, %v2477
    %v2632 = vmul.f32 %v2029, %v2029
    %v2633 = vmul.f32 %v2031, %v2031
    %v2634 = vmul.f32 %v2481, %v2481
    %v2635 = vmul.f32 %v2483, %v2483
    %v2636 = vmul.f32 %v2033, %v2033
    %v2637 = vmul.f32 %v2035, %v2035
    %v2638 = vmul.f32 %v2485, %v2485
    %v2639 = vmul.f32 %v2487, %v2487
    %v2640 = vadd.f32 %v2576, %v2580
    %v2641 = vadd.f32 %v2640, %v2584
    %v2642 = vadd.f32 %v2641, %v2588
    %v2643 = vadd.f32 %v2642, %v2592
    %v2644 = vadd.f32 %v2643, %v2596
    %v2645 = vadd.f32 %v2644, %v2600
    %v2646 = vadd.f32 %v2645, %v2604
    %v2647 = vadd.f32 %v2646, %v2608
    %v2648 = vadd.f32 %v2647, %v2612
    %v2649 = vadd.f32 %v2648, %v2616
    %v2650 = vadd.f32 %v2649, %v2620
    %v2651 = vadd.f32 %v2650, %v2624
    %v2652 = vadd.f32 %v2651, %v2628
    %v2653 = vadd.f32 %v2652, %v2632
    %v2654 = vadd.f32 %v2653, %v2636
    %v2655 = vrot.slane %v2654, 4
    %v2656 = vadd.f32 %v2654, %v2655
    %v2657 = vrot.slane %v2656, 2
    %v2658 = vadd.f32 %v2656, %v2657
    %v2659 = vrot.slane %v2658, 1
    %v2660 = vadd.f32 %v2658, %v2659
    %v2661 = vadd.f32 %v2577, %v2581
    %v2662 = vadd.f32 %v2661, %v2585
    %v2663 = vadd.f32 %v2662, %v2589
    %v2664 = vadd.f32 %v2663, %v2593
    %v2665 = vadd.f32 %v2664, %v2597
    %v2666 = vadd.f32 %v2665, %v2601
    %v2667 = vadd.f32 %v2666, %v2605
    %v2668 = vadd.f32 %v2667, %v2609
    %v2669 = vadd.f32 %v2668, %v2613
    %v2670 = vadd.f32 %v2669, %v2617
    %v2671 = vadd.f32 %v2670, %v2621
    %v2672 = vadd.f32 %v2671, %v2625
    %v2673 = vadd.f32 %v2672, %v2629
    %v2674 = vadd.f32 %v2673, %v2633
    %v2675 = vadd.f32 %v2674, %v2637
    %v2676 = vrot.slane %v2675, 4
    %v2677 = vadd.f32 %v2675, %v2676
    %v2678 = vrot.slane %v2677, 2
    %v2679 = vadd.f32 %v2677, %v2678
    %v2680 = vrot.slane %v2679, 1
    %v2681 = vadd.f32 %v2679, %v2680
    %v2682 = vadd.f32 %v2578, %v2582
    %v2683 = vadd.f32 %v2682, %v2586
    %v2684 = vadd.f32 %v2683, %v2590
    %v2685 = vadd.f32 %v2684, %v2594
    %v2686 = vadd.f32 %v2685, %v2598
    %v2687 = vadd.f32 %v2686, %v2602
    %v2688 = vadd.f32 %v2687, %v2606
    %v2689 = vadd.f32 %v2688, %v2610
    %v2690 = vadd.f32 %v2689, %v2614
    %v2691 = vadd.f32 %v2690, %v2618
    %v2692 = vadd.f32 %v2691, %v2622
    %v2693 = vadd.f32 %v2692, %v2626
    %v2694 = vadd.f32 %v2693, %v2630
    %v2695 = vadd.f32 %v2694, %v2634
    %v2696 = vadd.f32 %v2695, %v2638
    %v2697 = vrot.slane %v2696, 4
    %v2698 = vadd.f32 %v2696, %v2697
    %v2699 = vrot.slane %v2698, 2
    %v2700 = vadd.f32 %v2698, %v2699
    %v2701 = vrot.slane %v2700, 1
    %v2702 = vadd.f32 %v2700, %v2701
    %v2703 = vadd.f32 %v2579, %v2583
    %v2704 = vadd.f32 %v2703, %v2587
    %v2705 = vadd.f32 %v2704, %v2591
    %v2706 = vadd.f32 %v2705, %v2595
    %v2707 = vadd.f32 %v2706, %v2599
    %v2708 = vadd.f32 %v2707, %v2603
    %v2709 = vadd.f32 %v2708, %v2607
    %v2710 = vadd.f32 %v2709, %v2611
    %v2711 = vadd.f32 %v2710, %v2615
    %v2712 = vadd.f32 %v2711, %v2619
    %v2713 = vadd.f32 %v2712, %v2623
    %v2714 = vadd.f32 %v2713, %v2627
    %v2715 = vadd.f32 %v2714, %v2631
    %v2716 = vadd.f32 %v2715, %v2635
    %v2717 = vadd.f32 %v2716, %v2639
    %v2718 = vrot.slane %v2717, 4
    %v2719 = vadd.f32 %v2717, %v2718
    %v2720 = vrot.slane %v2719, 2
    %v2721 = vadd.f32 %v2719, %v2720
    %v2722 = vrot.slane %v2721, 1
    %v2723 = vadd.f32 %v2721, %v2722
    %v2724 = vmul.f32 %v2512, 0.0078125
    %v2725 = vmul.f32 %v2533, 0.0078125
    %v2726 = vmul.f32 %v2554, 0.0078125
    %v2727 = vmul.f32 %v2575, 0.0078125
    %v2728 = vmul.f32 %v2660, 0.0078125
    %v2729 = vmul.f32 %v2681, 0.0078125
    %v2730 = vmul.f32 %v2702, 0.0078125
    %v2731 = vmul.f32 %v2723, 0.0078125
    %v2732 = vmul.f32 %v2724, %v2724
    %v2733 = vmul.f32 %v2725, %v2725
    %v2734 = vmul.f32 %v2726, %v2726
    %v2735 = vmul.f32 %v2727, %v2727
    %v2736 = vsub.f32 %v2728, %v2732
    %v2737 = vsub.f32 %v2729, %v2733
    %v2738 = vsub.f32 %v2730, %v2734
    %v2739 = vsub.f32 %v2731, %v2735
    %v2740 = vmax.f32 %v2736, 0.0
    %v2741 = vmax.f32 %v2737, 0.0
    %v2742 = vmax.f32 %v2738, 0.0
    %v2743 = vmax.f32 %v2739, 0.0
    %v2744 = vadd.f32 %v2740, 1e-05
    %v2745 = vadd.f32 %v2741, 1e-05
    %v2746 = vadd.f32 %v2742, 1e-05
    %v2747 = vadd.f32 %v2743, 1e-05
    %v2748 = vrsqrt.pop %v2744
    %v2749 = vrsqrt.pop %v2745
    %v2750 = vrsqrt.pop %v2746
    %v2751 = vrsqrt.pop %v2747
    %v2756 = vcombine.low %v2748, %v2749
    %v2757 = vcombine.low %v2750, %v2751
    %v2759 = vunpack.c.l.s4 1966171168
    %v2760 = vunpack.c.0.s8 %v2759
    %v2761 = vlaneseq
    %v2762 = vshrl.u32 %v2761, 7
    %v2763 = vsub.s32 %v2760, %v2762
    %v2764 = vrot.slane %v2756, %v2763
    %v2766 = vunpack.c.l.s4 1966171168
    %v2767 = vunpack.c.0.s8 %v2766
    %v2768 = vlaneseq
    %v2769 = vshrl.u32 %v2768, 7
    %v2770 = vsub.s32 %v2767, %v2769
    %v2771 = vrot.slane %v2757, %v2770
    %v2772 = vcombine.low %v2764, %v2771
    %v2774 = vunpack.c.l.s4 1966171168
    %v2775 = vunpack.c.0.s8 %v2774
    %v2776 = vlaneseq
    %v2777 = vshrl.u32 %v2776, 7
    %v2778 = vsub.s32 %v2775, %v2777
    %v2779 = vrot.slane %v2772, %v2778
    %v2781 = vmul.f32 %v2489, %v2779
    %v2783 = vlaneseq
    %v2784 = vshrl.u32 %v2783, 7
    %v2785 = vsub.s32 0, %v2784
    %v2786 = vrot.slane %v2781, %v2785
    %v2787 = vlaneseq
    %v2788 = vshrl.u32 %v2787, 7
    %v2789 = vsub.s32 1, %v2788
    %v2790 = vrot.slane %v2781, %v2789
    %v2791 = vlaneseq
    %v2792 = vshrl.u32 %v2791, 7
    %v2793 = vsub.s32 2, %v2792
    %v2794 = vrot.slane %v2781, %v2793
    %v2795 = vlaneseq
    %v2796 = vshrl.u32 %v2795, 7
    %v2797 = vsub.s32 3, %v2796
    %v2798 = vrot.slane %v2781, %v2797
    %v2803 = vmul.f32 %v2724, %v2786
    %v2804 = vmul.f32 %v2725, %v2790
    %v2805 = vmul.f32 %v2726, %v2794
    %v2806 = vmul.f32 %v2727, %v2798
    %v2811 = vcombine.low %v2803, %v2804
    %v2812 = vcombine.low %v2805, %v2806
    %v2814 = vunpack.c.l.s4 1966171168
    %v2815 = vunpack.c.0.s8 %v2814
    %v2816 = vlaneseq
    %v2817 = vshrl.u32 %v2816, 7
    %v2818 = vsub.s32 %v2815, %v2817
    %v2819 = vrot.slane %v2811, %v2818
    %v2821 = vunpack.c.l.s4 1966171168
    %v2822 = vunpack.c.0.s8 %v2821
    %v2823 = vlaneseq
    %v2824 = vshrl.u32 %v2823, 7
    %v2825 = vsub.s32 %v2822, %v2824
    %v2826 = vrot.slane %v2812, %v2825
    %v2827 = vcombine.low %v2819, %v2826
    %v2829 = vunpack.c.l.s4 1966171168
    %v2830 = vunpack.c.0.s8 %v2829
    %v2831 = vlaneseq
    %v2832 = vshrl.u32 %v2831, 7
    %v2833 = vsub.s32 %v2830, %v2832
    %v2834 = vrot.slane %v2827, %v2833
    %v2836 = vsub.f32 %v2491, %v2834
    %v2837 = vmul.f32 %v1959, %v2786
    %v2838 = vmul.f32 %v1961, %v2790
    %v2839 = vmul.f32 %v2411, %v2794
    %v2840 = vmul.f32 %v2413, %v2798
    %v2841 = vmul.f32 %v1963, %v2786
    %v2842 = vmul.f32 %v1965, %v2790
    %v2843 = vmul.f32 %v2415, %v2794
    %v2844 = vmul.f32 %v2417, %v2798
    %v2845 = vmul.f32 %v1969, %v2786
    %v2846 = vmul.f32 %v1971, %v2790
    %v2847 = vmul.f32 %v2421, %v2794
    %v2848 = vmul.f32 %v2423, %v2798
    %v2849 = vmul.f32 %v1973, %v2786
    %v2850 = vmul.f32 %v1975, %v2790
    %v2851 = vmul.f32 %v2425, %v2794
    %v2852 = vmul.f32 %v2427, %v2798
    %v2853 = vmul.f32 %v1979, %v2786
    %v2854 = vmul.f32 %v1981, %v2790
    %v2855 = vmul.f32 %v2431, %v2794
    %v2856 = vmul.f32 %v2433, %v2798
    %v2857 = vmul.f32 %v1983, %v2786
    %v2858 = vmul.f32 %v1985, %v2790
    %v2859 = vmul.f32 %v2435, %v2794
    %v2860 = vmul.f32 %v2437, %v2798
    %v2861 = vmul.f32 %v1989, %v2786
    %v2862 = vmul.f32 %v1991, %v2790
    %v2863 = vmul.f32 %v2441, %v2794
    %v2864 = vmul.f32 %v2443, %v2798
    %v2865 = vmul.f32 %v1993, %v2786
    %v2866 = vmul.f32 %v1995, %v2790
    %v2867 = vmul.f32 %v2445, %v2794
    %v2868 = vmul.f32 %v2447, %v2798
    %v2869 = vmul.f32 %v1999, %v2786
    %v2870 = vmul.f32 %v2001, %v2790
    %v2871 = vmul.f32 %v2451, %v2794
    %v2872 = vmul.f32 %v2453, %v2798
    %v2873 = vmul.f32 %v2003, %v2786
    %v2874 = vmul.f32 %v2005, %v2790
    %v2875 = vmul.f32 %v2455, %v2794
    %v2876 = vmul.f32 %v2457, %v2798
    %v2877 = vmul.f32 %v2009, %v2786
    %v2878 = vmul.f32 %v2011, %v2790
    %v2879 = vmul.f32 %v2461, %v2794
    %v2880 = vmul.f32 %v2463, %v2798
    %v2881 = vmul.f32 %v2013, %v2786
    %v2882 = vmul.f32 %v2015, %v2790
    %v2883 = vmul.f32 %v2465, %v2794
    %v2884 = vmul.f32 %v2467, %v2798
    %v2885 = vmul.f32 %v2019, %v2786
    %v2886 = vmul.f32 %v2021, %v2790
    %v2887 = vmul.f32 %v2471, %v2794
    %v2888 = vmul.f32 %v2473, %v2798
    %v2889 = vmul.f32 %v2023, %v2786
    %v2890 = vmul.f32 %v2025, %v2790
    %v2891 = vmul.f32 %v2475, %v2794
    %v2892 = vmul.f32 %v2477, %v2798
    %v2893 = vmul.f32 %v2029, %v2786
    %v2894 = vmul.f32 %v2031, %v2790
    %v2895 = vmul.f32 %v2481, %v2794
    %v2896 = vmul.f32 %v2483, %v2798
    %v2897 = vmul.f32 %v2033, %v2786
    %v2898 = vmul.f32 %v2035, %v2790
    %v2899 = vmul.f32 %v2485, %v2794
    %v2900 = vmul.f32 %v2487, %v2798
    %v2902 = vlaneseq
    %v2903 = vshrl.u32 %v2902, 7
    %v2904 = vsub.s32 0, %v2903
    %v2905 = vrot.slane %v2836, %v2904
    %v2906 = vlaneseq
    %v2907 = vshrl.u32 %v2906, 7
    %v2908 = vsub.s32 1, %v2907
    %v2909 = vrot.slane %v2836, %v2908
    %v2910 = vlaneseq
    %v2911 = vshrl.u32 %v2910, 7
    %v2912 = vsub.s32 2, %v2911
    %v2913 = vrot.slane %v2836, %v2912
    %v2914 = vlaneseq
    %v2915 = vshrl.u32 %v2914, 7
    %v2916 = vsub.s32 3, %v2915
    %v2917 = vrot.slane %v2836, %v2916
    %v2922 = vadd.f32 %v2837, %v2905
    %v2923 = vadd.f32 %v2838, %v2909
    %v2924 = vadd.f32 %v2839, %v2913
    %v2925 = vadd.f32 %v2840, %v2917
    %v2926 = vadd.f32 %v2841, %v2905
    %v2927 = vadd.f32 %v2842, %v2909
    %v2928 = vadd.f32 %v2843, %v2913
    %v2929 = vadd.f32 %v2844, %v2917
    %v2930 = vadd.f32 %v2845, %v2905
    %v2931 = vadd.f32 %v2846, %v2909
    %v2932 = vadd.f32 %v2847, %v2913
    %v2933 = vadd.f32 %v2848, %v2917
    %v2934 = vadd.f32 %v2849, %v2905
    %v2935 = vadd.f32 %v2850, %v2909
    %v2936 = vadd.f32 %v2851, %v2913
    %v2937 = vadd.f32 %v2852, %v2917
    %v2938 = vadd.f32 %v2853, %v2905
    %v2939 = vadd.f32 %v2854, %v2909
    %v2940 = vadd.f32 %v2855, %v2913
    %v2941 = vadd.f32 %v2856, %v2917
    %v2942 = vadd.f32 %v2857, %v2905
    %v2943 = vadd.f32 %v2858, %v2909
    %v2944 = vadd.f32 %v2859, %v2913
    %v2945 = vadd.f32 %v2860, %v2917
    %v2946 = vadd.f32 %v2861, %v2905
    %v2947 = vadd.f32 %v2862, %v2909
    %v2948 = vadd.f32 %v2863, %v2913
    %v2949 = vadd.f32 %v2864, %v2917
    %v2950 = vadd.f32 %v2865, %v2905
    %v2951 = vadd.f32 %v2866, %v2909
    %v2952 = vadd.f32 %v2867, %v2913
    %v2953 = vadd.f32 %v2868, %v2917
    %v2954 = vadd.f32 %v2869, %v2905
    %v2955 = vadd.f32 %v2870, %v2909
    %v2956 = vadd.f32 %v2871, %v2913
    %v2957 = vadd.f32 %v2872, %v2917
    %v2958 = vadd.f32 %v2873, %v2905
    %v2959 = vadd.f32 %v2874, %v2909
    %v2960 = vadd.f32 %v2875, %v2913
    %v2961 = vadd.f32 %v2876, %v2917
    %v2962 = vadd.f32 %v2877, %v2905
    %v2963 = vadd.f32 %v2878, %v2909
    %v2964 = vadd.f32 %v2879, %v2913
    %v2965 = vadd.f32 %v2880, %v2917
    %v2966 = vadd.f32 %v2881, %v2905
    %v2967 = vadd.f32 %v2882, %v2909
    %v2968 = vadd.f32 %v2883, %v2913
    %v2969 = vadd.f32 %v2884, %v2917
    %v2970 = vadd.f32 %v2885, %v2905
    %v2971 = vadd.f32 %v2886, %v2909
    %v2972 = vadd.f32 %v2887, %v2913
    %v2973 = vadd.f32 %v2888, %v2917
    %v2974 = vadd.f32 %v2889, %v2905
    %v2975 = vadd.f32 %v2890, %v2909
    %v2976 = vadd.f32 %v2891, %v2913
    %v2977 = vadd.f32 %v2892, %v2917
    %v2978 = vadd.f32 %v2893, %v2905
    %v2979 = vadd.f32 %v2894, %v2909
    %v2980 = vadd.f32 %v2895, %v2913
    %v2981 = vadd.f32 %v2896, %v2917
    %v2982 = vadd.f32 %v2897, %v2905
    %v2983 = vadd.f32 %v2898, %v2909
    %v2984 = vadd.f32 %v2899, %v2913
    %v2985 = vadd.f32 %v2900, %v2917
    %vm2986 = vcmp.gt.f32.partialorder %v2922, 0.0
    %vm2987 = vcmp.gt.f32.partialorder %v2923, 0.0
    %vm2988 = vcmp.gt.f32.partialorder %v2924, 0.0
    %vm2989 = vcmp.gt.f32.partialorder %v2925, 0.0
    %vm2990 = vcmp.gt.f32.partialorder %v2926, 0.0
    %vm2991 = vcmp.gt.f32.partialorder %v2927, 0.0
    %vm2992 = vcmp.gt.f32.partialorder %v2928, 0.0
    %vm2993 = vcmp.gt.f32.partialorder %v2929, 0.0
    %vm2994 = vcmp.gt.f32.partialorder %v2930, 0.0
    %vm2995 = vcmp.gt.f32.partialorder %v2931, 0.0
    %vm2996 = vcmp.gt.f32.partialorder %v2932, 0.0
    %vm2997 = vcmp.gt.f32.partialorder %v2933, 0.0
    %vm2998 = vcmp.gt.f32.partialorder %v2934, 0.0
    %vm2999 = vcmp.gt.f32.partialorder %v2935, 0.0
    %vm3000 = vcmp.gt.f32.partialorder %v2936, 0.0
    %vm3001 = vcmp.gt.f32.partialorder %v2937, 0.0
    %vm3002 = vcmp.gt.f32.partialorder %v2938, 0.0
    %vm3003 = vcmp.gt.f32.partialorder %v2939, 0.0
    %vm3004 = vcmp.gt.f32.partialorder %v2940, 0.0
    %vm3005 = vcmp.gt.f32.partialorder %v2941, 0.0
    %vm3006 = vcmp.gt.f32.partialorder %v2942, 0.0
    %vm3007 = vcmp.gt.f32.partialorder %v2943, 0.0
    %vm3008 = vcmp.gt.f32.partialorder %v2944, 0.0
    %vm3009 = vcmp.gt.f32.partialorder %v2945, 0.0
    %vm3010 = vcmp.gt.f32.partialorder %v2946, 0.0
    %vm3011 = vcmp.gt.f32.partialorder %v2947, 0.0
    %vm3012 = vcmp.gt.f32.partialorder %v2948, 0.0
    %vm3013 = vcmp.gt.f32.partialorder %v2949, 0.0
    %vm3014 = vcmp.gt.f32.partialorder %v2950, 0.0
    %vm3015 = vcmp.gt.f32.partialorder %v2951, 0.0
    %vm3016 = vcmp.gt.f32.partialorder %v2952, 0.0
    %vm3017 = vcmp.gt.f32.partialorder %v2953, 0.0
    %vm3018 = vcmp.gt.f32.partialorder %v2954, 0.0
    %vm3019 = vcmp.gt.f32.partialorder %v2955, 0.0
    %vm3020 = vcmp.gt.f32.partialorder %v2956, 0.0
    %vm3021 = vcmp.gt.f32.partialorder %v2957, 0.0
    %vm3022 = vcmp.gt.f32.partialorder %v2958, 0.0
    %vm3023 = vcmp.gt.f32.partialorder %v2959, 0.0
    %vm3024 = vcmp.gt.f32.partialorder %v2960, 0.0
    %vm3025 = vcmp.gt.f32.partialorder %v2961, 0.0
    %vm3026 = vcmp.gt.f32.partialorder %v2962, 0.0
    %vm3027 = vcmp.gt.f32.partialorder %v2963, 0.0
    %vm3028 = vcmp.gt.f32.partialorder %v2964, 0.0
    %vm3029 = vcmp.gt.f32.partialorder %v2965, 0.0
    %vm3030 = vcmp.gt.f32.partialorder %v2966, 0.0
    %vm3031 = vcmp.gt.f32.partialorder %v2967, 0.0
    %vm3032 = vcmp.gt.f32.partialorder %v2968, 0.0
    %vm3033 = vcmp.gt.f32.partialorder %v2969, 0.0
    %vm3034 = vcmp.gt.f32.partialorder %v2970, 0.0
    %vm3035 = vcmp.gt.f32.partialorder %v2971, 0.0
    %vm3036 = vcmp.gt.f32.partialorder %v2972, 0.0
    %vm3037 = vcmp.gt.f32.partialorder %v2973, 0.0
    %vm3038 = vcmp.gt.f32.partialorder %v2974, 0.0
    %vm3039 = vcmp.gt.f32.partialorder %v2975, 0.0
    %vm3040 = vcmp.gt.f32.partialorder %v2976, 0.0
    %vm3041 = vcmp.gt.f32.partialorder %v2977, 0.0
    %vm3042 = vcmp.gt.f32.partialorder %v2978, 0.0
    %vm3043 = vcmp.gt.f32.partialorder %v2979, 0.0
    %vm3044 = vcmp.gt.f32.partialorder %v2980, 0.0
    %vm3045 = vcmp.gt.f32.partialorder %v2981, 0.0
    %vm3046 = vcmp.gt.f32.partialorder %v2982, 0.0
    %vm3047 = vcmp.gt.f32.partialorder %v2983, 0.0
    %vm3048 = vcmp.gt.f32.partialorder %v2984, 0.0
    %vm3049 = vcmp.gt.f32.partialorder %v2985, 0.0
    %v3050 = vmul.f32 %v2922, 0.1
    %v3051 = vmul.f32 %v2923, 0.1
    %v3052 = vmul.f32 %v2924, 0.1
    %v3053 = vmul.f32 %v2925, 0.1
    %v3054 = vmul.f32 %v2926, 0.1
    %v3055 = vmul.f32 %v2927, 0.1
    %v3056 = vmul.f32 %v2928, 0.1
    %v3057 = vmul.f32 %v2929, 0.1
    %v3058 = vmul.f32 %v2930, 0.1
    %v3059 = vmul.f32 %v2931, 0.1
    %v3060 = vmul.f32 %v2932, 0.1
    %v3061 = vmul.f32 %v2933, 0.1
    %v3062 = vmul.f32 %v2934, 0.1
    %v3063 = vmul.f32 %v2935, 0.1
    %v3064 = vmul.f32 %v2936, 0.1
    %v3065 = vmul.f32 %v2937, 0.1
    %v3066 = vmul.f32 %v2938, 0.1
    %v3067 = vmul.f32 %v2939, 0.1
    %v3068 = vmul.f32 %v2940, 0.1
    %v3069 = vmul.f32 %v2941, 0.1
    %v3070 = vmul.f32 %v2942, 0.1
    %v3071 = vmul.f32 %v2943, 0.1
    %v3072 = vmul.f32 %v2944, 0.1
    %v3073 = vmul.f32 %v2945, 0.1
    %v3074 = vmul.f32 %v2946, 0.1
    %v3075 = vmul.f32 %v2947, 0.1
    %v3076 = vmul.f32 %v2948, 0.1
    %v3077 = vmul.f32 %v2949, 0.1
    %v3078 = vmul.f32 %v2950, 0.1
    %v3079 = vmul.f32 %v2951, 0.1
    %v3080 = vmul.f32 %v2952, 0.1
    %v3081 = vmul.f32 %v2953, 0.1
    %v3082 = vmul.f32 %v2954, 0.1
    %v3083 = vmul.f32 %v2955, 0.1
    %v3084 = vmul.f32 %v2956, 0.1
    %v3085 = vmul.f32 %v2957, 0.1
    %v3086 = vmul.f32 %v2958, 0.1
    %v3087 = vmul.f32 %v2959, 0.1
    %v3088 = vmul.f32 %v2960, 0.1
    %v3089 = vmul.f32 %v2961, 0.1
    %v3090 = vmul.f32 %v2962, 0.1
    %v3091 = vmul.f32 %v2963, 0.1
    %v3092 = vmul.f32 %v2964, 0.1
    %v3093 = vmul.f32 %v2965, 0.1
    %v3094 = vmul.f32 %v2966, 0.1
    %v3095 = vmul.f32 %v2967, 0.1
    %v3096 = vmul.f32 %v2968, 0.1
    %v3097 = vmul.f32 %v2969, 0.1
    %v3098 = vmul.f32 %v2970, 0.1
    %v3099 = vmul.f32 %v2971, 0.1
    %v3100 = vmul.f32 %v2972, 0.1
    %v3101 = vmul.f32 %v2973, 0.1
    %v3102 = vmul.f32 %v2974, 0.1
    %v3103 = vmul.f32 %v2975, 0.1
    %v3104 = vmul.f32 %v2976, 0.1
    %v3105 = vmul.f32 %v2977, 0.1
    %v3106 = vmul.f32 %v2978, 0.1
    %v3107 = vmul.f32 %v2979, 0.1
    %v3108 = vmul.f32 %v2980, 0.1
    %v3109 = vmul.f32 %v2981, 0.1
    %v3110 = vmul.f32 %v2982, 0.1
    %v3111 = vmul.f32 %v2983, 0.1
    %v3112 = vmul.f32 %v2984, 0.1
    %v3113 = vmul.f32 %v2985, 0.1
    %v3114 = vsel %vm2986, %v2922, %v3050
    %v3115 = vsel %vm2987, %v2923, %v3051
    %v3116 = vsel %vm2988, %v2924, %v3052
    %v3117 = vsel %vm2989, %v2925, %v3053
    %v3118 = vsel %vm2990, %v2926, %v3054
    %v3119 = vsel %vm2991, %v2927, %v3055
    %v3120 = vsel %vm2992, %v2928, %v3056
    %v3121 = vsel %vm2993, %v2929, %v3057
    %v3122 = vsel %vm2994, %v2930, %v3058
    %v3123 = vsel %vm2995, %v2931, %v3059
    %v3124 = vsel %vm2996, %v2932, %v3060
    %v3125 = vsel %vm2997, %v2933, %v3061
    %v3126 = vsel %vm2998, %v2934, %v3062
    %v3127 = vsel %vm2999, %v2935, %v3063
    %v3128 = vsel %vm3000, %v2936, %v3064
    %v3129 = vsel %vm3001, %v2937, %v3065
    %v3130 = vsel %vm3002, %v2938, %v3066
    %v3131 = vsel %vm3003, %v2939, %v3067
    %v3132 = vsel %vm3004, %v2940, %v3068
    %v3133 = vsel %vm3005, %v2941, %v3069
    %v3134 = vsel %vm3006, %v2942, %v3070
    %v3135 = vsel %vm3007, %v2943, %v3071
    %v3136 = vsel %vm3008, %v2944, %v3072
    %v3137 = vsel %vm3009, %v2945, %v3073
    %v3138 = vsel %vm3010, %v2946, %v3074
    %v3139 = vsel %vm3011, %v2947, %v3075
    %v3140 = vsel %vm3012, %v2948, %v3076
    %v3141 = vsel %vm3013, %v2949, %v3077
    %v3142 = vsel %vm3014, %v2950, %v3078
    %v3143 = vsel %vm3015, %v2951, %v3079
    %v3144 = vsel %vm3016, %v2952, %v3080
    %v3145 = vsel %vm3017, %v2953, %v3081
    %v3146 = vsel %vm3018, %v2954, %v3082
    %v3147 = vsel %vm3019, %v2955, %v3083
    %v3148 = vsel %vm3020, %v2956, %v3084
    %v3149 = vsel %vm3021, %v2957, %v3085
    %v3150 = vsel %vm3022, %v2958, %v3086
    %v3151 = vsel %vm3023, %v2959, %v3087
    %v3152 = vsel %vm3024, %v2960, %v3088
    %v3153 = vsel %vm3025, %v2961, %v3089
    %v3154 = vsel %vm3026, %v2962, %v3090
    %v3155 = vsel %vm3027, %v2963, %v3091
    %v3156 = vsel %vm3028, %v2964, %v3092
    %v3157 = vsel %vm3029, %v2965, %v3093
    %v3158 = vsel %vm3030, %v2966, %v3094
    %v3159 = vsel %vm3031, %v2967, %v3095
    %v3160 = vsel %vm3032, %v2968, %v3096
    %v3161 = vsel %vm3033, %v2969, %v3097
    %v3162 = vsel %vm3034, %v2970, %v3098
    %v3163 = vsel %vm3035, %v2971, %v3099
    %v3164 = vsel %vm3036, %v2972, %v3100
    %v3165 = vsel %vm3037, %v2973, %v3101
    %v3166 = vsel %vm3038, %v2974, %v3102
    %v3167 = vsel %vm3039, %v2975, %v3103
    %v3168 = vsel %vm3040, %v2976, %v3104
    %v3169 = vsel %vm3041, %v2977, %v3105
    %v3170 = vsel %vm3042, %v2978, %v3106
    %v3171 = vsel %vm3043, %v2979, %v3107
    %v3172 = vsel %vm3044, %v2980, %v3108
    %v3173 = vsel %vm3045, %v2981, %v3109
    %v3174 = vsel %vm3046, %v2982, %v3110
    %v3175 = vsel %vm3047, %v2983, %v3111
    %v3176 = vsel %vm3048, %v2984, %v3112
    %v3177 = vsel %vm3049, %v2985, %v3113
    %v3178 = vpack.c.bf16 %v3118, %v3114
    %v3179 = vpack.c.bf16 %v3119, %v3115
    %v3180 = vpack.c.bf16 %v3120, %v3116
    %v3181 = vpack.c.bf16 %v3121, %v3117
    %v3182 = vpack.c.bf16 %v3126, %v3122
    %v3183 = vpack.c.bf16 %v3127, %v3123
    %v3184 = vpack.c.bf16 %v3128, %v3124
    %v3185 = vpack.c.bf16 %v3129, %v3125
    %v3186 = vpack.c.bf16 %v3134, %v3130
    %v3187 = vpack.c.bf16 %v3135, %v3131
    %v3188 = vpack.c.bf16 %v3136, %v3132
    %v3189 = vpack.c.bf16 %v3137, %v3133
    %v3190 = vpack.c.bf16 %v3142, %v3138
    %v3191 = vpack.c.bf16 %v3143, %v3139
    %v3192 = vpack.c.bf16 %v3144, %v3140
    %v3193 = vpack.c.bf16 %v3145, %v3141
    %v3194 = vpack.c.bf16 %v3150, %v3146
    %v3195 = vpack.c.bf16 %v3151, %v3147
    %v3196 = vpack.c.bf16 %v3152, %v3148
    %v3197 = vpack.c.bf16 %v3153, %v3149
    %v3198 = vpack.c.bf16 %v3158, %v3154
    %v3199 = vpack.c.bf16 %v3159, %v3155
    %v3200 = vpack.c.bf16 %v3160, %v3156
    %v3201 = vpack.c.bf16 %v3161, %v3157
    %v3202 = vpack.c.bf16 %v3166, %v3162
    %v3203 = vpack.c.bf16 %v3167, %v3163
    %v3204 = vpack.c.bf16 %v3168, %v3164
    %v3205 = vpack.c.bf16 %v3169, %v3165
    %v3206 = vpack.c.bf16 %v3174, %v3170
    %v3207 = vpack.c.bf16 %v3175, %v3171
    %v3208 = vpack.c.bf16 %v3176, %v3172
    %v3209 = vpack.c.bf16 %v3177, %v3173
    %v3210 = vld [vmem:[%s3] sm:$0xf]
    %v3211 = vld [vmem:[%s3 + $0x4] sm:$0xf]
    %v3212 = vld [vmem:[%s3 + $0x8] sm:$0xf]
    %v3213 = vld [vmem:[%s3 + $0xc] sm:$0xf]
    %v3214 = vld [vmem:[%s3 + $0x10] sm:$0xf]
    %v3215 = vld [vmem:[%s3 + $0x14] sm:$0xf]
    %v3216 = vld [vmem:[%s3 + $0x18] sm:$0xf]
    %v3217 = vld [vmem:[%s3 + $0x1c] sm:$0xf]
    %v3218 = vld [vmem:[%s3 + $0x20] sm:$0xf]
    %v3219 = vld [vmem:[%s3 + $0x24] sm:$0xf]
    %v3220 = vld [vmem:[%s3 + $0x28] sm:$0xf]
    %v3221 = vld [vmem:[%s3 + $0x2c] sm:$0xf]
    %v3222 = vld [vmem:[%s3 + $0x30] sm:$0xf]
    %v3223 = vld [vmem:[%s3 + $0x34] sm:$0xf]
    %v3224 = vld [vmem:[%s3 + $0x38] sm:$0xf]
    %v3225 = vld [vmem:[%s3 + $0x3c] sm:$0xf]
    %v3226 = vld [vmem:[%s3 + $0x40] sm:$0xf]
    %v3227 = vld [vmem:[%s3 + $0x44] sm:$0xf]
    %v3228 = vld [vmem:[%s3 + $0x48] sm:$0xf]
    %v3229 = vld [vmem:[%s3 + $0x4c] sm:$0xf]
    %v3230 = vld [vmem:[%s3 + $0x50] sm:$0xf]
    %v3231 = vld [vmem:[%s3 + $0x54] sm:$0xf]
    %v3232 = vld [vmem:[%s3 + $0x58] sm:$0xf]
    %v3233 = vld [vmem:[%s3 + $0x5c] sm:$0xf]
    %v3234 = vld [vmem:[%s3 + $0x60] sm:$0xf]
    %v3235 = vld [vmem:[%s3 + $0x64] sm:$0xf]
    %v3236 = vld [vmem:[%s3 + $0x68] sm:$0xf]
    %v3237 = vld [vmem:[%s3 + $0x6c] sm:$0xf]
    %v3238 = vld [vmem:[%s3 + $0x70] sm:$0xf]
    %v3239 = vld [vmem:[%s3 + $0x74] sm:$0xf]
    %v3240 = vld [vmem:[%s3 + $0x78] sm:$0xf]
    %v3241 = vld [vmem:[%s3 + $0x7c] sm:$0xf]
    %v3242 = vld [vmem:[%s3 + $0x80] sm:$0xf]
    %v3243 = vld [vmem:[%s3 + $0x84] sm:$0xf]
    %v3244 = vld [vmem:[%s3 + $0x88] sm:$0xf]
    %v3245 = vld [vmem:[%s3 + $0x8c] sm:$0xf]
    %v3246 = vld [vmem:[%s3 + $0x90] sm:$0xf]
    %v3247 = vld [vmem:[%s3 + $0x94] sm:$0xf]
    %v3248 = vld [vmem:[%s3 + $0x98] sm:$0xf]
    %v3249 = vld [vmem:[%s3 + $0x9c] sm:$0xf]
    %v3250 = vld [vmem:[%s3 + $0xa0] sm:$0xf]
    %v3251 = vld [vmem:[%s3 + $0xa4] sm:$0xf]
    %v3252 = vld [vmem:[%s3 + $0xa8] sm:$0xf]
    %v3253 = vld [vmem:[%s3 + $0xac] sm:$0xf]
    %v3254 = vld [vmem:[%s3 + $0xb0] sm:$0xf]
    %v3255 = vld [vmem:[%s3 + $0xb4] sm:$0xf]
    %v3256 = vld [vmem:[%s3 + $0xb8] sm:$0xf]
    %v3257 = vld [vmem:[%s3 + $0xbc] sm:$0xf]
    %v3258 = vld [vmem:[%s3 + $0xc0] sm:$0xf]
    %v3259 = vld [vmem:[%s3 + $0xc4] sm:$0xf]
    %v3260 = vld [vmem:[%s3 + $0xc8] sm:$0xf]
    %v3261 = vld [vmem:[%s3 + $0xcc] sm:$0xf]
    %v3262 = vld [vmem:[%s3 + $0xd0] sm:$0xf]
    %v3263 = vld [vmem:[%s3 + $0xd4] sm:$0xf]
    %v3264 = vld [vmem:[%s3 + $0xd8] sm:$0xf]
    %v3265 = vld [vmem:[%s3 + $0xdc] sm:$0xf]
    %v3266 = vld [vmem:[%s3 + $0xe0] sm:$0xf]
    %v3267 = vld [vmem:[%s3 + $0xe4] sm:$0xf]
    %v3268 = vld [vmem:[%s3 + $0xe8] sm:$0xf]
    %v3269 = vld [vmem:[%s3 + $0xec] sm:$0xf]
    %v3270 = vld [vmem:[%s3 + $0xf0] sm:$0xf]
    %v3271 = vld [vmem:[%s3 + $0xf4] sm:$0xf]
    %v3272 = vld [vmem:[%s3 + $0xf8] sm:$0xf]
    %v3273 = vld [vmem:[%s3 + $0xfc] sm:$0xf]
    %v3338 = vunpack.c.l.b16 %v3210
    %v3339 = vunpack.c.l.b16 %v3211
    %v3340 = vunpack.c.l.b16 %v3212
    %v3341 = vunpack.c.l.b16 %v3213
    %v3342 = vunpack.c.l.b16 %v3214
    %v3343 = vunpack.c.l.b16 %v3215
    %v3344 = vunpack.c.l.b16 %v3216
    %v3345 = vunpack.c.l.b16 %v3217
    %v3346 = vunpack.c.l.b16 %v3218
    %v3347 = vunpack.c.l.b16 %v3219
    %v3348 = vunpack.c.l.b16 %v3220
    %v3349 = vunpack.c.l.b16 %v3221
    %v3350 = vunpack.c.l.b16 %v3222
    %v3351 = vunpack.c.l.b16 %v3223
    %v3352 = vunpack.c.l.b16 %v3224
    %v3353 = vunpack.c.l.b16 %v3225
    %v3354 = vunpack.c.l.b16 %v3226
    %v3355 = vunpack.c.l.b16 %v3227
    %v3356 = vunpack.c.l.b16 %v3228
    %v3357 = vunpack.c.l.b16 %v3229
    %v3358 = vunpack.c.l.b16 %v3230
    %v3359 = vunpack.c.l.b16 %v3231
    %v3360 = vunpack.c.l.b16 %v3232
    %v3361 = vunpack.c.l.b16 %v3233
    %v3362 = vunpack.c.l.b16 %v3234
    %v3363 = vunpack.c.l.b16 %v3235
    %v3364 = vunpack.c.l.b16 %v3236
    %v3365 = vunpack.c.l.b16 %v3237
    %v3366 = vunpack.c.l.b16 %v3238
    %v3367 = vunpack.c.l.b16 %v3239
    %v3368 = vunpack.c.l.b16 %v3240
    %v3369 = vunpack.c.l.b16 %v3241
    %v3370 = vunpack.c.l.b16 %v3242
    %v3371 = vunpack.c.l.b16 %v3243
    %v3372 = vunpack.c.l.b16 %v3244
    %v3373 = vunpack.c.l.b16 %v3245
    %v3374 = vunpack.c.l.b16 %v3246
    %v3375 = vunpack.c.l.b16 %v3247
    %v3376 = vunpack.c.l.b16 %v3248
    %v3377 = vunpack.c.l.b16 %v3249
    %v3378 = vunpack.c.l.b16 %v3250
    %v3379 = vunpack.c.l.b16 %v3251
    %v3380 = vunpack.c.l.b16 %v3252
    %v3381 = vunpack.c.l.b16 %v3253
    %v3382 = vunpack.c.l.b16 %v3254
    %v3383 = vunpack.c.l.b16 %v3255
    %v3384 = vunpack.c.l.b16 %v3256
    %v3385 = vunpack.c.l.b16 %v3257
    %v3386 = vunpack.c.l.b16 %v3258
    %v3387 = vunpack.c.l.b16 %v3259
    %v3388 = vunpack.c.l.b16 %v3260
    %v3389 = vunpack.c.l.b16 %v3261
    %v3390 = vunpack.c.l.b16 %v3262
    %v3391 = vunpack.c.l.b16 %v3263
    %v3392 = vunpack.c.l.b16 %v3264
    %v3393 = vunpack.c.l.b16 %v3265
    %v3394 = vunpack.c.l.b16 %v3266
    %v3395 = vunpack.c.l.b16 %v3267
    %v3396 = vunpack.c.l.b16 %v3268
    %v3397 = vunpack.c.l.b16 %v3269
    %v3398 = vunpack.c.l.b16 %v3270
    %v3399 = vunpack.c.l.b16 %v3271
    %v3400 = vunpack.c.l.b16 %v3272
    %v3401 = vunpack.c.l.b16 %v3273
    %v3402 = vpack.c.b16 %v3339, %v3338
    %v3403 = vpack.c.b16 %v3341, %v3340
    %v3404 = vpack.c.b16 %v3343, %v3342
    %v3405 = vpack.c.b16 %v3345, %v3344
    %v3406 = vpack.c.b16 %v3347, %v3346
    %v3407 = vpack.c.b16 %v3349, %v3348
    %v3408 = vpack.c.b16 %v3351, %v3350
    %v3409 = vpack.c.b16 %v3353, %v3352
    %v3410 = vpack.c.b16 %v3355, %v3354
    %v3411 = vpack.c.b16 %v3357, %v3356
    %v3412 = vpack.c.b16 %v3359, %v3358
    %v3413 = vpack.c.b16 %v3361, %v3360
    %v3414 = vpack.c.b16 %v3363, %v3362
    %v3415 = vpack.c.b16 %v3365, %v3364
    %v3416 = vpack.c.b16 %v3367, %v3366
    %v3417 = vpack.c.b16 %v3369, %v3368
    %v3418 = vpack.c.b16 %v3371, %v3370
    %v3419 = vpack.c.b16 %v3373, %v3372
    %v3420 = vpack.c.b16 %v3375, %v3374
    %v3421 = vpack.c.b16 %v3377, %v3376
    %v3422 = vpack.c.b16 %v3379, %v3378
    %v3423 = vpack.c.b16 %v3381, %v3380
    %v3424 = vpack.c.b16 %v3383, %v3382
    %v3425 = vpack.c.b16 %v3385, %v3384
    %v3426 = vpack.c.b16 %v3387, %v3386
    %v3427 = vpack.c.b16 %v3389, %v3388
    %v3428 = vpack.c.b16 %v3391, %v3390
    %v3429 = vpack.c.b16 %v3393, %v3392
    %v3430 = vpack.c.b16 %v3395, %v3394
    %v3431 = vpack.c.b16 %v3397, %v3396
    %v3432 = vpack.c.b16 %v3399, %v3398
    %v3433 = vpack.c.b16 %v3401, %v3400
    %3466 = vmatprep.subr.bf16.mxu0 0
    %3467 = vmatpush1.bf16.msra.mxu0 %v3402
    %3468 = vmatprep.subr.bf16.mxu0 0
    %3469 = vmatpush1.bf16.msra.mxu0 %v3403
    %3470 = vmatprep.subr.bf16.mxu0 0
    %3471 = vmatpush1.bf16.msra.mxu0 %v3404
    %3472 = vmatprep.subr.bf16.mxu0 0
    %3473 = vmatpush1.bf16.msra.mxu0 %v3405
    %3474 = vmatprep.subr.bf16.mxu0 0
    %3475 = vmatpush1.bf16.msra.mxu0 %v3406
    %3476 = vmatprep.subr.bf16.mxu0 0
    %3477 = vmatpush1.bf16.msra.mxu0 %v3407
    %3478 = vmatprep.subr.bf16.mxu0 0
    %3479 = vmatpush1.bf16.msra.mxu0 %v3408
    %3480 = vmatprep.subr.bf16.mxu0 0
    %3481 = vmatpush1.bf16.msra.mxu0 %v3409
    %3482 = vmatprep.subr.bf16.mxu0 0
    %3483 = vmatpush1.bf16.msra.mxu0 %v3410
    %3484 = vmatprep.subr.bf16.mxu0 0
    %3485 = vmatpush1.bf16.msra.mxu0 %v3411
    %3486 = vmatprep.subr.bf16.mxu0 0
    %3487 = vmatpush1.bf16.msra.mxu0 %v3412
    %3488 = vmatprep.subr.bf16.mxu0 0
    %3489 = vmatpush1.bf16.msra.mxu0 %v3413
    %3490 = vmatprep.subr.bf16.mxu0 0
    %3491 = vmatpush1.bf16.msra.mxu0 %v3414
    %3492 = vmatprep.subr.bf16.mxu0 0
    %3493 = vmatpush1.bf16.msra.mxu0 %v3415
    %3494 = vmatprep.subr.bf16.mxu0 0
    %3495 = vmatpush1.bf16.msra.mxu0 %v3416
    %3496 = vmatprep.subr.bf16.mxu0 0
    %3497 = vmatpush1.bf16.msra.mxu0 %v3417
    %3498 = vmatprep.mubr.bf16.mxu0 %v3179
    %3499 = vmatmul.mubr.bf16.gmra.mrb[0].mxu0 %v3178
    %v3500 = vpop.f32.mrb[0].mxu0
    %v3501 = vadd.f32 0.0, %v3500
    %v3502 = vpop.f32.mrb[0].mxu0
    %v3503 = vpop.f32.mrb[0].mxu0
    %v3504 = vadd.f32 0.0, %v3503
    %v3505 = vpop.f32.mrb[0].mxu0
    %3506 = vmatprep.mubr.bf16.mxu0 %v3183
    %3507 = vmatmul.mubr.bf16.gmra.mrb[0].mxu0 %v3182
    %v3508 = vpop.f32.mrb[0].mxu0
    %v3509 = vadd.f32 0.0, %v3508
    %v3510 = vpop.f32.mrb[0].mxu0
    %v3511 = vpop.f32.mrb[0].mxu0
    %v3512 = vadd.f32 0.0, %v3511
    %v3513 = vpop.f32.mrb[0].mxu0
    %3514 = vmatprep.mubr.bf16.mxu0 %v3187
    %3515 = vmatmul.mubr.bf16.gmra.mrb[0].mxu0 %v3186
    %v3516 = vpop.f32.mrb[0].mxu0
    %v3517 = vadd.f32 0.0, %v3516
    %v3518 = vpop.f32.mrb[0].mxu0
    %v3519 = vpop.f32.mrb[0].mxu0
    %v3520 = vadd.f32 0.0, %v3519
    %v3521 = vpop.f32.mrb[0].mxu0
    %3522 = vmatprep.mubr.bf16.mxu0 %v3191
    %3523 = vmatmul.mubr.bf16.gmra.mrb[0].mxu0 %v3190
    %v3524 = vpop.f32.mrb[0].mxu0
    %v3525 = vadd.f32 0.0, %v3524
    %v3526 = vpop.f32.mrb[0].mxu0
    %v3527 = vpop.f32.mrb[0].mxu0
    %v3528 = vadd.f32 0.0, %v3527
    %v3529 = vpop.f32.mrb[0].mxu0
    %3530 = vmatprep.mubr.bf16.mxu0 %v3195
    %3531 = vmatmul.mubr.bf16.gmra.mrb[0].mxu0 %v3194
    %v3532 = vpop.f32.mrb[0].mxu0
    %v3533 = vadd.f32 0.0, %v3532
    %v3534 = vpop.f32.mrb[0].mxu0
    %v3535 = vpop.f32.mrb[0].mxu0
    %v3536 = vadd.f32 0.0, %v3535
    %v3537 = vpop.f32.mrb[0].mxu0
    %3538 = vmatprep.mubr.bf16.mxu0 %v3199
    %3539 = vmatmul.mubr.bf16.gmra.mrb[0].mxu0 %v3198
    %v3540 = vpop.f32.mrb[0].mxu0
    %v3541 = vadd.f32 0.0, %v3540
    %v3542 = vpop.f32.mrb[0].mxu0
    %v3543 = vpop.f32.mrb[0].mxu0
    %v3544 = vadd.f32 0.0, %v3543
    %v3545 = vpop.f32.mrb[0].mxu0
    %3546 = vmatprep.mubr.bf16.mxu0 %v3203
    %3547 = vmatmul.mubr.bf16.gmra.mrb[0].mxu0 %v3202
    %v3548 = vpop.f32.mrb[0].mxu0
    %v3549 = vadd.f32 0.0, %v3548
    %v3550 = vpop.f32.mrb[0].mxu0
    %v3551 = vpop.f32.mrb[0].mxu0
    %v3552 = vadd.f32 0.0, %v3551
    %v3553 = vpop.f32.mrb[0].mxu0
    %3554 = vmatprep.mubr.bf16.mxu0 %v3207
    %3555 = vmatmul.mubr.bf16.gmra.mrb[0].mxu0 %v3206
    %v3556 = vpop.f32.mrb[0].mxu0
    %v3557 = vadd.f32 0.0, %v3556
    %v3558 = vpop.f32.mrb[0].mxu0
    %v3559 = vpop.f32.mrb[0].mxu0
    %v3560 = vadd.f32 0.0, %v3559
    %v3561 = vpop.f32.mrb[0].mxu0
    %3562 = vdwg.mxu0
    %3563 = vmatprep.subr.bf16.mxu0 0
    %3564 = vmatpush1.bf16.msra.mxu0 %v3418
    %3565 = vmatprep.subr.bf16.mxu0 0
    %3566 = vmatpush1.bf16.msra.mxu0 %v3419
    %3567 = vmatprep.subr.bf16.mxu0 0
    %3568 = vmatpush1.bf16.msra.mxu0 %v3420
    %3569 = vmatprep.subr.bf16.mxu0 0
    %3570 = vmatpush1.bf16.msra.mxu0 %v3421
    %3571 = vmatprep.subr.bf16.mxu0 0
    %3572 = vmatpush1.bf16.msra.mxu0 %v3422
    %3573 = vmatprep.subr.bf16.mxu0 0
    %3574 = vmatpush1.bf16.msra.mxu0 %v3423
    %3575 = vmatprep.subr.bf16.mxu0 0
    %3576 = vmatpush1.bf16.msra.mxu0 %v3424
    %3577 = vmatprep.subr.bf16.mxu0 0
    %3578 = vmatpush1.bf16.msra.mxu0 %v3425
    %3579 = vmatprep.subr.bf16.mxu0 0
    %3580 = vmatpush1.bf16.msra.mxu0 %v3426
    %3581 = vmatprep.subr.bf16.mxu0 0
    %3582 = vmatpush1.bf16.msra.mxu0 %v3427
    %3583 = vmatprep.subr.bf16.mxu0 0
    %3584 = vmatpush1.bf16.msra.mxu0 %v3428
    %3585 = vmatprep.subr.bf16.mxu0 0
    %3586 = vmatpush1.bf16.msra.mxu0 %v3429
    %3587 = vmatprep.subr.bf16.mxu0 0
    %3588 = vmatpush1.bf16.msra.mxu0 %v3430
    %3589 = vmatprep.subr.bf16.mxu0 0
    %3590 = vmatpush1.bf16.msra.mxu0 %v3431
    %3591 = vmatprep.subr.bf16.mxu0 0
    %3592 = vmatpush1.bf16.msra.mxu0 %v3432
    %3593 = vmatprep.subr.bf16.mxu0 0
    %3594 = vmatpush1.bf16.msra.mxu0 %v3433
    %3595 = vmatprep.mubr.bf16.mxu0 %v3181
    %3596 = vmatmul.mubr.bf16.gmra.mrb[0].mxu0 %v3180
    %v3597 = vpop.f32.mrb[0].mxu0
    %v3598 = vadd.f32 %v3501, %v3597
    %v3599 = vpop.f32.mrb[0].mxu0
    %v3600 = vpop.f32.mrb[0].mxu0
    %v3601 = vadd.f32 %v3504, %v3600
    %v3602 = vpop.f32.mrb[0].mxu0
    %3603 = vmatprep.mubr.bf16.mxu0 %v3185
    %3604 = vmatmul.mubr.bf16.gmra.mrb[0].mxu0 %v3184
    %v3605 = vpop.f32.mrb[0].mxu0
    %v3606 = vadd.f32 %v3509, %v3605
    %v3607 = vpop.f32.mrb[0].mxu0
    %v3608 = vpop.f32.mrb[0].mxu0
    %v3609 = vadd.f32 %v3512, %v3608
    %v3610 = vpop.f32.mrb[0].mxu0
    %3611 = vmatprep.mubr.bf16.mxu0 %v3189
    %3612 = vmatmul.mubr.bf16.gmra.mrb[0].mxu0 %v3188
    %v3613 = vpop.f32.mrb[0].mxu0
    %v3614 = vadd.f32 %v3517, %v3613
    %v3615 = vpop.f32.mrb[0].mxu0
    %v3616 = vpop.f32.mrb[0].mxu0
    %v3617 = vadd.f32 %v3520, %v3616
    %v3618 = vpop.f32.mrb[0].mxu0
    %3619 = vmatprep.mubr.bf16.mxu0 %v3193
    %3620 = vmatmul.mubr.bf16.gmra.mrb[0].mxu0 %v3192
    %v3621 = vpop.f32.mrb[0].mxu0
    %v3622 = vadd.f32 %v3525, %v3621
    %v3623 = vpop.f32.mrb[0].mxu0
    %v3624 = vpop.f32.mrb[0].mxu0
    %v3625 = vadd.f32 %v3528, %v3624
    %v3626 = vpop.f32.mrb[0].mxu0
    %3627 = vmatprep.mubr.bf16.mxu0 %v3197
    %3628 = vmatmul.mubr.bf16.gmra.mrb[0].mxu0 %v3196
    %v3629 = vpop.f32.mrb[0].mxu0
    %v3630 = vadd.f32 %v3533, %v3629
    %v3631 = vpop.f32.mrb[0].mxu0
    %v3632 = vpop.f32.mrb[0].mxu0
    %v3633 = vadd.f32 %v3536, %v3632
    %v3634 = vpop.f32.mrb[0].mxu0
    %3635 = vmatprep.mubr.bf16.mxu0 %v3201
    %3636 = vmatmul.mubr.bf16.gmra.mrb[0].mxu0 %v3200
    %v3637 = vpop.f32.mrb[0].mxu0
    %v3638 = vadd.f32 %v3541, %v3637
    %v3639 = vpop.f32.mrb[0].mxu0
    %v3640 = vpop.f32.mrb[0].mxu0
    %v3641 = vadd.f32 %v3544, %v3640
    %v3642 = vpop.f32.mrb[0].mxu0
    %3643 = vmatprep.mubr.bf16.mxu0 %v3205
    %3644 = vmatmul.mubr.bf16.gmra.mrb[0].mxu0 %v3204
    %v3645 = vpop.f32.mrb[0].mxu0
    %v3646 = vadd.f32 %v3549, %v3645
    %v3647 = vpop.f32.mrb[0].mxu0
    %v3648 = vpop.f32.mrb[0].mxu0
    %v3649 = vadd.f32 %v3552, %v3648
    %v3650 = vpop.f32.mrb[0].mxu0
    %3651 = vmatprep.mubr.bf16.mxu0 %v3209
    %3652 = vmatmul.mubr.bf16.gmra.mrb[0].mxu0 %v3208
    %v3653 = vpop.f32.mrb[0].mxu0
    %v3654 = vadd.f32 %v3557, %v3653
    %v3655 = vpop.f32.mrb[0].mxu0
    %v3656 = vpop.f32.mrb[0].mxu0
    %v3657 = vadd.f32 %v3560, %v3656
    %v3658 = vpop.f32.mrb[0].mxu0
    %3659 = vdwg.mxu0
    %v3660 = vld [vmem:[%s4] sm:$0x1]
    %v3661 = vld [vmem:[%s4 + $0x1] sm:$0x1]
    %v3662 = vadd.f32 %v3598, %v3601
    %v3663 = vadd.f32 %v3662, %v3606
    %v3664 = vadd.f32 %v3663, %v3609
    %v3665 = vadd.f32 %v3664, %v3614
    %v3666 = vadd.f32 %v3665, %v3617
    %v3667 = vadd.f32 %v3666, %v3622
    %v3668 = vadd.f32 %v3667, %v3625
    %v3669 = vadd.f32 %v3668, %v3630
    %v3670 = vadd.f32 %v3669, %v3633
    %v3671 = vadd.f32 %v3670, %v3638
    %v3672 = vadd.f32 %v3671, %v3641
    %v3673 = vadd.f32 %v3672, %v3646
    %v3674 = vadd.f32 %v3673, %v3649
    %v3675 = vadd.f32 %v3674, %v3654
    %v3676 = vadd.f32 %v3675, %v3657
    %v3677 = vrot.slane %v3676, 4
    %v3678 = vadd.f32 %v3676, %v3677
    %v3679 = vrot.slane %v3678, 2
    %v3680 = vadd.f32 %v3678, %v3679
    %v3681 = vrot.slane %v3680, 1
    %v3682 = vadd.f32 %v3680, %v3681
    %v3683 = vmul.f32 %v3598, %v3598
    %v3684 = vmul.f32 %v3601, %v3601
    %v3685 = vmul.f32 %v3606, %v3606
    %v3686 = vmul.f32 %v3609, %v3609
    %v3687 = vmul.f32 %v3614, %v3614
    %v3688 = vmul.f32 %v3617, %v3617
    %v3689 = vmul.f32 %v3622, %v3622
    %v3690 = vmul.f32 %v3625, %v3625
    %v3691 = vmul.f32 %v3630, %v3630
    %v3692 = vmul.f32 %v3633, %v3633
    %v3693 = vmul.f32 %v3638, %v3638
    %v3694 = vmul.f32 %v3641, %v3641
    %v3695 = vmul.f32 %v3646, %v3646
    %v3696 = vmul.f32 %v3649, %v3649
    %v3697 = vmul.f32 %v3654, %v3654
    %v3698 = vmul.f32 %v3657, %v3657
    %v3699 = vadd.f32 %v3683, %v3684
    %v3700 = vadd.f32 %v3699, %v3685
    %v3701 = vadd.f32 %v3700, %v3686
    %v3702 = vadd.f32 %v3701, %v3687
    %v3703 = vadd.f32 %v3702, %v3688
    %v3704 = vadd.f32 %v3703, %v3689
    %v3705 = vadd.f32 %v3704, %v3690
    %v3706 = vadd.f32 %v3705, %v3691
    %v3707 = vadd.f32 %v3706, %v3692
    %v3708 = vadd.f32 %v3707, %v3693
    %v3709 = vadd.f32 %v3708, %v3694
    %v3710 = vadd.f32 %v3709, %v3695
    %v3711 = vadd.f32 %v3710, %v3696
    %v3712 = vadd.f32 %v3711, %v3697
    %v3713 = vadd.f32 %v3712, %v3698
    %v3714 = vrot.slane %v3713, 4
    %v3715 = vadd.f32 %v3713, %v3714
    %v3716 = vrot.slane %v3715, 2
    %v3717 = vadd.f32 %v3715, %v3716
    %v3718 = vrot.slane %v3717, 1
    %v3719 = vadd.f32 %v3717, %v3718
    %v3720 = vmul.f32 %v3682, 0.0078125
    %v3721 = vmul.f32 %v3719, 0.0078125
    %v3722 = vmul.f32 %v3720, %v3720
    %v3723 = vsub.f32 %v3721, %v3722
    %v3724 = vmax.f32 %v3723, 0.0
    %v3725 = vadd.f32 %v3724, 1e-05
    %v3726 = vrsqrt.pop %v3725
    %v3727 = vmul.f32 %v3660, %v3726
    %v3728 = vmul.f32 %v3720, %v3727
    %v3729 = vsub.f32 %v3661, %v3728
    %v3730 = vlaneseq
    %v3731 = vshrl.u32 %v3730, 7
    %v3732 = vsub.s32 0, %v3731
    %v3733 = vrot.slane %v3727, %v3732
    %v3734 = vmul.f32 %v3598, %v3733
    %v3735 = vmul.f32 %v3601, %v3733
    %v3736 = vmul.f32 %v3606, %v3733
    %v3737 = vmul.f32 %v3609, %v3733
    %v3738 = vmul.f32 %v3614, %v3733
    %v3739 = vmul.f32 %v3617, %v3733
    %v3740 = vmul.f32 %v3622, %v3733
    %v3741 = vmul.f32 %v3625, %v3733
    %v3742 = vmul.f32 %v3630, %v3733
    %v3743 = vmul.f32 %v3633, %v3733
    %v3744 = vmul.f32 %v3638, %v3733
    %v3745 = vmul.f32 %v3641, %v3733
    %v3746 = vmul.f32 %v3646, %v3733
    %v3747 = vmul.f32 %v3649, %v3733
    %v3748 = vmul.f32 %v3654, %v3733
    %v3749 = vmul.f32 %v3657, %v3733
    %v3750 = vlaneseq
    %v3751 = vshrl.u32 %v3750, 7
    %v3752 = vsub.s32 0, %v3751
    %v3753 = vrot.slane %v3729, %v3752
    %v3754 = vadd.f32 %v3734, %v3753
    %v3755 = vadd.f32 %v3735, %v3753
    %v3756 = vadd.f32 %v3736, %v3753
    %v3757 = vadd.f32 %v3737, %v3753
    %v3758 = vadd.f32 %v3738, %v3753
    %v3759 = vadd.f32 %v3739, %v3753
    %v3760 = vadd.f32 %v3740, %v3753
    %v3761 = vadd.f32 %v3741, %v3753
    %v3762 = vadd.f32 %v3742, %v3753
    %v3763 = vadd.f32 %v3743, %v3753
    %v3764 = vadd.f32 %v3744, %v3753
    %v3765 = vadd.f32 %v3745, %v3753
    %v3766 = vadd.f32 %v3746, %v3753
    %v3767 = vadd.f32 %v3747, %v3753
    %v3768 = vadd.f32 %v3748, %v3753
    %v3769 = vadd.f32 %v3749, %v3753
    %vm3770 = vcmp.gt.f32.partialorder %v3754, 0.0
    %vm3771 = vcmp.gt.f32.partialorder %v3755, 0.0
    %vm3772 = vcmp.gt.f32.partialorder %v3756, 0.0
    %vm3773 = vcmp.gt.f32.partialorder %v3757, 0.0
    %vm3774 = vcmp.gt.f32.partialorder %v3758, 0.0
    %vm3775 = vcmp.gt.f32.partialorder %v3759, 0.0
    %vm3776 = vcmp.gt.f32.partialorder %v3760, 0.0
    %vm3777 = vcmp.gt.f32.partialorder %v3761, 0.0
    %vm3778 = vcmp.gt.f32.partialorder %v3762, 0.0
    %vm3779 = vcmp.gt.f32.partialorder %v3763, 0.0
    %vm3780 = vcmp.gt.f32.partialorder %v3764, 0.0
    %vm3781 = vcmp.gt.f32.partialorder %v3765, 0.0
    %vm3782 = vcmp.gt.f32.partialorder %v3766, 0.0
    %vm3783 = vcmp.gt.f32.partialorder %v3767, 0.0
    %vm3784 = vcmp.gt.f32.partialorder %v3768, 0.0
    %vm3785 = vcmp.gt.f32.partialorder %v3769, 0.0
    %v3786 = vmul.f32 %v3754, 0.1
    %v3787 = vmul.f32 %v3755, 0.1
    %v3788 = vmul.f32 %v3756, 0.1
    %v3789 = vmul.f32 %v3757, 0.1
    %v3790 = vmul.f32 %v3758, 0.1
    %v3791 = vmul.f32 %v3759, 0.1
    %v3792 = vmul.f32 %v3760, 0.1
    %v3793 = vmul.f32 %v3761, 0.1
    %v3794 = vmul.f32 %v3762, 0.1
    %v3795 = vmul.f32 %v3763, 0.1
    %v3796 = vmul.f32 %v3764, 0.1
    %v3797 = vmul.f32 %v3765, 0.1
    %v3798 = vmul.f32 %v3766, 0.1
    %v3799 = vmul.f32 %v3767, 0.1
    %v3800 = vmul.f32 %v3768, 0.1
    %v3801 = vmul.f32 %v3769, 0.1
    %v3802 = vsel %vm3770, %v3754, %v3786
    %v3803 = vsel %vm3771, %v3755, %v3787
    %v3804 = vsel %vm3772, %v3756, %v3788
    %v3805 = vsel %vm3773, %v3757, %v3789
    %v3806 = vsel %vm3774, %v3758, %v3790
    %v3807 = vsel %vm3775, %v3759, %v3791
    %v3808 = vsel %vm3776, %v3760, %v3792
    %v3809 = vsel %vm3777, %v3761, %v3793
    %v3810 = vsel %vm3778, %v3762, %v3794
    %v3811 = vsel %vm3779, %v3763, %v3795
    %v3812 = vsel %vm3780, %v3764, %v3796
    %v3813 = vsel %vm3781, %v3765, %v3797
    %v3814 = vsel %vm3782, %v3766, %v3798
    %v3815 = vsel %vm3783, %v3767, %v3799
    %v3816 = vsel %vm3784, %v3768, %v3800
    %v3817 = vsel %vm3785, %v3769, %v3801
    %v3818 = vld [vmem:[%s4 + $0x2] sm:$0x1]
    %s3819 = sld [smem:[#allocation2]]
    %v3820 = vstv %s3819
    %3821 = vmatprep.subr.mxu0 0.0
    %3822 = vmatpush1.xpose.msra.mxu0 %v3802
    %3823 = vmatprep.subr.mxu0 0.0
    %3824 = vmatpush1.xpose.msra.mxu0 %v3803
    %3825 = vmatprep.subr.mxu0 0.0
    %3826 = vmatpush1.xpose.msra.mxu0 %v3804
    %3827 = vmatprep.subr.mxu0 0.0
    %3828 = vmatpush1.xpose.msra.mxu0 %v3805
    %3829 = vmatprep.subr.mxu0 0.0
    %3830 = vmatpush1.xpose.msra.mxu0 %v3806
    %3831 = vmatprep.subr.mxu0 0.0
    %3832 = vmatpush1.xpose.msra.mxu0 %v3807
    %3833 = vmatprep.subr.mxu0 0.0
    %3834 = vmatpush1.xpose.msra.mxu0 %v3808
    %3835 = vmatprep.subr.mxu0 0.0
    %3836 = vmatpush1.xpose.msra.mxu0 %v3809
    %3837 = vmatprep.subr.mxu0 0.0
    %3838 = vmatpush1.xpose.msra.mxu0 %v3810
    %3839 = vmatprep.subr.mxu0 0.0
    %3840 = vmatpush1.xpose.msra.mxu0 %v3811
    %3841 = vmatprep.subr.mxu0 0.0
    %3842 = vmatpush1.xpose.msra.mxu0 %v3812
    %3843 = vmatprep.subr.mxu0 0.0
    %3844 = vmatpush1.xpose.msra.mxu0 %v3813
    %3845 = vmatprep.subr.mxu0 0.0
    %3846 = vmatpush1.xpose.msra.mxu0 %v3814
    %3847 = vmatprep.subr.mxu0 0.0
    %3848 = vmatpush1.xpose.msra.mxu0 %v3815
    %3849 = vmatprep.subr.mxu0 0.0
    %3850 = vmatpush1.xpose.msra.mxu0 %v3816
    %3851 = vmatprep.subr.mxu0 0.0
    %3852 = vmatpush1.xpose.msra.mxu0 %v3817
    %3853 = vmatprep.subr.mxu0 0.0
    %3854 = vmatpush1.xpose.msra.mxu0 0.0
    %3855 = vmatprep.subr.mxu0 0.0
    %3856 = vmatpush1.xpose.msra.mxu0 0.0
    %3857 = vmatprep.subr.mxu0 0.0
    %3858 = vmatpush1.xpose.msra.mxu0 0.0
    %3859 = vmatprep.subr.mxu0 0.0
    %3860 = vmatpush1.xpose.msra.mxu0 0.0
    %3861 = vmatprep.subr.mxu0 0.0
    %3862 = vmatpush1.xpose.msra.mxu0 0.0
    %3863 = vmatprep.subr.mxu0 0.0
    %3864 = vmatpush1.xpose.msra.mxu0 0.0
    %3865 = vmatprep.subr.mxu0 0.0
    %3866 = vmatpush1.xpose.msra.mxu0 0.0
    %3867 = vmatprep.subr.mxu0 0.0
    %3868 = vmatpush1.xpose.msra.mxu0 0.0
    %3869 = vmatprep.subr.mxu0 0.0
    %3870 = vmatpush1.xpose.msra.mxu0 0.0
    %3871 = vmatprep.subr.mxu0 0.0
    %3872 = vmatpush1.xpose.msra.mxu0 0.0
    %3873 = vmatprep.subr.mxu0 0.0
    %3874 = vmatpush1.xpose.msra.mxu0 0.0
    %3875 = vmatprep.subr.mxu0 0.0
    %3876 = vmatpush1.xpose.msra.mxu0 0.0
    %3877 = vmatprep.subr.mxu0 0.0
    %3878 = vmatpush1.xpose.msra.mxu0 0.0
    %3879 = vmatprep.subr.mxu0 0.0
    %3880 = vmatpush1.xpose.msra.mxu0 0.0
    %3881 = vmatprep.subr.mxu0 0.0
    %3882 = vmatpush1.xpose.msra.mxu0 0.0
    %3883 = vmatprep.subr.mxu0 0.0
    %3884 = vmatpush1.xpose.msra.mxu0 0.0
    %3885 = vmatprep.mubr.f32.mxu0 0.0
    %3886 = vmatmul.mubr.f32.gmra.mrb[0].mxu0 %v3818
    %v3887 = vpop.f32.mrb[0].mxu0
    %v3888 = vadd.f32 %v3820, %v3887
    %v3889 = vpop.f32.mrb[0].mxu0
    %3890 = vdwg.mxu0
    %v3891 = vsub.f32 0.0, %v3888
    %v3892 = vmul.f32 %v3891, 1.442695
    %v3893 = vpow.pop %v3892
    %v3894 = vadd.f32 %v3893, 1.0
    %v3895 = vrcp.pop %v3894
    %v3896 = vmul.f32 1.0, %v3895
    %3897 = vst [vmem:[#allocation6] sm:$0x1] %v3896
    // Predicated region
    $region30: #{tpu_custom_call.1} parent=1 // pred_check
      _
    $region31: #{tpu_custom_call.1} parent=1 // pred_check_branch
      %3899 = sbr.rel (0) target = $region33
    $region32: #{tpu_custom_call.1} parent=1 // pred_region
      %s3901 = ssub.s32 16, 16
      %3902 = vsyncadd [#allocation5], %s3901
      %s3904 = sshll.u32 [#allocation6], 4
      %s3905 = int_to_ptr.vmem [resolvable:$true] %s3904
      %3907 = dma.vmem_to_hbm [thread:$0]  %s3905, 16, %s6, [#allocation5]
    $region33: #{tpu_custom_call.1} parent=1 // pred_fallthru
      _
    // Predicated region
    $region34: #{tpu_custom_call.1} parent=1 // pred_check
      _
    $region35: #{tpu_custom_call.1} parent=1 // pred_check_branch
      %3909 = sbr.rel (0) target = $region37
    $region36: #{tpu_custom_call.1} parent=1 // pred_region
      %3910 = dma.done [#allocation5], 16
    $region37: #{tpu_custom_call.1} parent=1 // pred_fallthru
      _
    %3911 = vsyncpa [#allocation4], 1
    %3912 = vsyncpa [#allocation5], 1

</llo_original>
